<compile_context>
chip_gen: v7x
topology: tpu7x:2x2x1
jax: 0.10.0
libtpu: 0.0.40
codegen_flags: <defaults>
</compile_context>

<pallas_src>
import functools
import math

import jax
import jax.numpy as jnp
from jax.experimental import pallas as pl
from jax.experimental.pallas import tpu as pltpu

NEG_INF = -1e9
LN_EPS = 1e-5


# ------------------------------- helpers -------------------------------

def _round_up(x, m):
    return (x + m - 1) // m * m


def _as_bf16(x):
    return x if x.dtype == jnp.bfloat16 else x.astype(jnp.bfloat16)


def _row_tiling(m, target=256):
    """Row tile of up to `target` rows; rows are padded to a multiple of the tile."""
    tm = min(target, _round_up(m, 8))
    return _round_up(m, tm), tm


def _pick_col_tile(n, target=1024):
    if n <= target:
        return n
    for cand in (target, 512, 256, 128):
        if n % cand == 0:
            return cand
    return n


def _pick_seq_tile(t, target=256):
    if t <= target:
        return t
    for cand in (target, 128):
        if t % cand == 0:
            return cand
    return t


def _pad_rows(x, m_padded):
    m = x.shape[0]
    if m_padded == m:
        return x
    return jnp.pad(x, ((0, m_padded - m), (0, 0)))


@functools.lru_cache(maxsize=None)
def _vmem_limit_bytes():
    # ~3/4 of physical VMEM, capped at 100 MiB (=> ~48 MiB on v7x, ~96 MiB on v5e/v6e).
    try:
        cap = int(pltpu.get_tpu_info().vmem_capacity_bytes)
        return min(cap * 3 // 4, 100 * 1024 * 1024)
    except Exception:
        return None


def _cparams(*sem):
    vl = _vmem_limit_bytes()
    if vl is None:
        return pltpu.CompilerParams(dimension_semantics=sem)
    return pltpu.CompilerParams(dimension_semantics=sem, vmem_limit_bytes=vl)


def _ln(y, g, b, eps):
    mu = jnp.mean(y, axis=-1, keepdims=True)
    var = jnp.mean(jnp.square(y - mu), axis=-1, keepdims=True)
    return (y - mu) * jax.lax.rsqrt(var + eps) * g + b


# --------------------------- Pallas kernels ---------------------------

def _split_linear_kernel(x_ref, w_ref, b_ref, *o_refs):
    """y = x @ w + b (bf16 MXU operands, f32 accumulate), split along columns."""
    y = jnp.dot(x_ref[...].astype(jnp.bfloat16), w_ref[...],
                preferred_element_type=jnp.float32) + b_ref[...]
    d = o_refs[0].shape[-1]
    for s, o_ref in enumerate(o_refs):
        o_ref[...] = y[:, s * d:(s + 1) * d].astype(o_ref.dtype)


def split_linear(x, w, b, num_splits, out_dtype=jnp.bfloat16, tm_target=256):
    """x:[M,K] @ w:[K,num_splits*d] + b -> num_splits arrays [M,d] (bf16 by default)."""
    M, K = x.shape
    N = w.shape[1]
    d = N // num_splits
    Mp, tm = _row_tiling(M, tm_target)
    xp = _pad_rows(x, Mp)
    outs = pl.pallas_call(
        _split_linear_kernel,
        out_shape=tuple(jax.ShapeDtypeStruct((Mp, d), out_dtype) for _ in range(num_splits)),
        grid=(Mp // tm,),
        in_specs=[pl.BlockSpec((tm, K), lambda i: (i, 0)),
                  pl.BlockSpec((K, N), lambda i: (0, 0)),
                  pl.BlockSpec((1, N), lambda i: (0, 0))],
        out_specs=tuple(pl.BlockSpec((tm, d), lambda i: (i, 0)) for _ in range(num_splits)),
        compiler_params=_cparams("parallel"),
    )(xp, _as_bf16(w), b)
    if not isinstance(outs, (list, tuple)):
        outs = (outs,)
    return tuple(o[:M] for o in outs)


def _flash_attn_kernel(q_ref, k_ref, v_ref, pad_ref, o_ref, m_sc, l_sc, acc_sc,
                       *, num_heads, scale, causal):
    qi = pl.program_id(1)
    ki = pl.program_id(2)
    nk = pl.num_programs(2)
    tq = q_ref.shape[1]
    tk = k_ref.shape[1]
    d_model = q_ref.shape[2]
    dh = d_model // num_heads

    @pl.when(ki == 0)
    def _():
        m_sc[...] = jnp.full(m_sc.shape, -jnp.inf, jnp.float32)
        l_sc[...] = jnp.zeros(l_sc.shape, jnp.float32)
        acc_sc[...] = jnp.zeros(acc_sc.shape, jnp.float32)

    def compute():
        # Additive mask built in-kernel: pad vector (1.0 = blocked) + causal via iota.
        mask = pad_ref[0] * NEG_INF                                   # [1, tk]
        if causal:
            row = jax.lax.broadcasted_iota(jnp.int32, (tq, tk), 0) + qi * tq
            col = jax.lax.broadcasted_iota(jnp.int32, (tq, tk), 1) + ki * tk
            mask = mask + jnp.where(col > row, NEG_INF, 0.0)          # [tq, tk]

        for h in range(num_heads):                                    # static unroll over heads
            cols = slice(h * dh, (h + 1) * dh)
            q = q_ref[0, :, cols]                                     # [tq, dh] bf16
            k = k_ref[0, :, cols]                                     # [tk, dh] bf16
            v = v_ref[0, :, cols]                                     # [tk, dh] bf16
            s = jax.lax.dot_general(q, k, (((1,), (1,)), ((), ())),
                                    preferred_element_type=jnp.float32) * scale + mask
            m_prev = m_sc[h]                                          # [tq, 1]
            m_new = jnp.maximum(m_prev, jnp.max(s, axis=-1, keepdims=True))
            alpha = jnp.exp(m_prev - m_new)
            p = jnp.exp(s - m_new)                                    # f32 on EUP
            l_sc[h] = alpha * l_sc[h] + jnp.sum(p, axis=-1, keepdims=True)
            acc_sc[h] = alpha * acc_sc[h] + jnp.dot(p.astype(jnp.bfloat16), v,
                                                    preferred_element_type=jnp.float32)
            m_sc[h] = m_new

    if causal:
        # Skip K tiles that lie entirely above the diagonal (fully masked).
        # (The tile DMA still happens via BlockSpec; only the compute is skipped.)
        pl.when(ki * tk < (qi + 1) * tq)(compute)
    else:
        compute()

    @pl.when(ki == nk - 1)
    def _():
        outs = [acc_sc[h] * pl.reciprocal(l_sc[h], approx=True) for h in range(num_heads)]
        o_ref[0] = jnp.concatenate(outs, axis=-1).astype(o_ref.dtype)  # lane-dense [tq, D]


def flash_attention(q, k, v, pad_mask, *, num_heads, causal):
    """q:[B,Tq,D], k/v:[B,Tk,D] bf16 (heads packed in last dim), pad_mask:[B,1,Tk] f32 (1=blocked)."""
    B, Tq, D = q.shape
    Tk = k.shape[1]
    dh = D // num_heads
    tq = _pick_seq_tile(Tq)
    tk = _pick_seq_tile(Tk)
    kern = functools.partial(_flash_attn_kernel, num_heads=num_heads,
                             scale=1.0 / math.sqrt(dh), causal=causal)
    return pl.pallas_call(
        kern,
        out_shape=jax.ShapeDtypeStruct((B, Tq, D), jnp.bfloat16),
        grid=(B, Tq // tq, Tk // tk),
        in_specs=[pl.BlockSpec((1, tq, D), lambda b, qi, ki: (b, qi, 0)),
                  pl.BlockSpec((1, tk, D), lambda b, qi, ki: (b, ki, 0)),
                  pl.BlockSpec((1, tk, D), lambda b, qi, ki: (b, ki, 0)),
                  pl.BlockSpec((1, 1, tk), lambda b, qi, ki: (b, 0, ki))],
        out_specs=pl.BlockSpec((1, tq, D), lambda b, qi, ki: (b, qi, 0)),
        scratch_shapes=[pltpu.VMEM((num_heads, tq, 1), jnp.float32),
                        pltpu.VMEM((num_heads, tq, 1), jnp.float32),
                        pltpu.VMEM((num_heads, tq, dh), jnp.float32)],
        compiler_params=_cparams("parallel", "parallel", "arbitrary"),
    )(q, k, v, pad_mask)


def _proj_res_ln_kernel(x_ref, w_ref, b_ref, r_ref, g_ref, be_ref, o_ref, *, eps):
    y = jnp.dot(x_ref[...].astype(jnp.bfloat16), w_ref[...],
                preferred_element_type=jnp.float32)
    y = y + b_ref[...] + r_ref[...]
    o_ref[...] = _ln(y, g_ref[...], be_ref[...], eps).astype(o_ref.dtype)


def _proj_res_ln_q_kernel(x_ref, w_ref, b_ref, r_ref, g_ref, be_ref, wq_ref, bq_ref,
                          o_ref, q_ref, *, eps):
    y = jnp.dot(x_ref[...].astype(jnp.bfloat16), w_ref[...],
                preferred_element_type=jnp.float32)
    y = y + b_ref[...] + r_ref[...]
    ln = _ln(y, g_ref[...], be_ref[...], eps)
    o_ref[...] = ln.astype(o_ref.dtype)
    # fused cross-attention Q projection on the LN output (saves one kernel + HBM round trip)
    q_ref[...] = (jnp.dot(ln.astype(jnp.bfloat16), wq_ref[...],
                          preferred_element_type=jnp.float32)
                  + bq_ref[...]).astype(q_ref.dtype)


def proj_residual_layernorm(x, w, b, res, gamma, beta, wq=None, bq=None,
                            eps=LN_EPS, tm_target=256):
    """LayerNorm(x @ w + b + res)  [+ optionally (LN @ wq + bq) in bf16]."""
    M, D = x.shape
    Mp, tm = _row_tiling(M, tm_target)
    xp, rp = _pad_rows(x, Mp), _pad_rows(res, Mp)
    base_specs = [pl.BlockSpec((tm, D), lambda i: (i, 0)),
                  pl.BlockSpec((D, D), lambda i: (0, 0)),
                  pl.BlockSpec((1, D), lambda i: (0, 0)),
                  pl.BlockSpec((tm, D), lambda i: (i, 0)),
                  pl.BlockSpec((1, D), lambda i: (0, 0)),
                  pl.BlockSpec((1, D), lambda i: (0, 0))]
    if wq is None:
        out = pl.pallas_call(
            functools.partial(_proj_res_ln_kernel, eps=eps),
            out_shape=jax.ShapeDtypeStruct((Mp, D), jnp.float32),
            grid=(Mp // tm,),
            in_specs=base_specs,
            out_specs=pl.BlockSpec((tm, D), lambda i: (i, 0)),
            compiler_params=_cparams("parallel"),
        )(xp, _as_bf16(w), b, rp, gamma, beta)
        return out[:M]
    dq = wq.shape[1]
    out, q = pl.pallas_call(
        functools.partial(_proj_res_ln_q_kernel, eps=eps),
        out_shape=(jax.ShapeDtypeStruct((Mp, D), jnp.float32),
                   jax.ShapeDtypeStruct((Mp, dq), jnp.bfloat16)),
        grid=(Mp // tm,),
        in_specs=base_specs + [pl.BlockSpec((D, dq), lambda i: (0, 0)),
                               pl.BlockSpec((1, dq), lambda i: (0, 0))],
        out_specs=(pl.BlockSpec((tm, D), lambda i: (i, 0)),
                   pl.BlockSpec((tm, dq), lambda i: (i, 0))),
        compiler_params=_cparams("parallel"),
    )(xp, _as_bf16(w), b, rp, gamma, beta, _as_bf16(wq), bq)
    return out[:M], q[:M]


def _ffn_kernel(x_ref, w1_ref, b1_ref, w2_ref, b2_ref, g_ref, be_ref, o_ref, acc_ref, *, eps):
    j = pl.program_id(1)

    @pl.when(j == 0)
    def _():
        acc_ref[...] = jnp.zeros_like(acc_ref)

    h = jnp.dot(x_ref[...].astype(jnp.bfloat16), w1_ref[...],
                preferred_element_type=jnp.float32) + b1_ref[...]
    h = jnp.maximum(h, 0.0).astype(jnp.bfloat16)
    acc_ref[...] += jnp.dot(h, w2_ref[...], preferred_element_type=jnp.float32)

    @pl.when(j == pl.num_programs(1) - 1)
    def _():
        y = acc_ref[...] + b2_ref[...] + x_ref[...]          # residual = FFN input (f32)
        o_ref[...] = _ln(y, g_ref[...], be_ref[...], eps).astype(o_ref.dtype)


def ffn_residual_layernorm(x, w1, b1, w2, b2, gamma, beta, eps=LN_EPS,
                           tm_target=256, tf_target=1024):
    """LayerNorm(relu(x@w1+b1)@w2 + b2 + x), hidden kept in VMEM (d_ff tiled)."""
    M, D = x.shape
    DFF = w1.shape[1]
    Mp, tm = _row_tiling(M, tm_target)
    tf = _pick_col_tile(DFF, tf_target)
    xp = _pad_rows(x, Mp)
    out = pl.pallas_call(
        functools.partial(_ffn_kernel, eps=eps),
        out_shape=jax.ShapeDtypeStruct((Mp, D), jnp.float32),
        grid=(Mp // tm, DFF // tf),
        in_specs=[pl.BlockSpec((tm, D), lambda i, j: (i, 0)),
                  pl.BlockSpec((D, tf), lambda i, j: (0, j)),
                  pl.BlockSpec((1, tf), lambda i, j: (0, j)),
                  pl.BlockSpec((tf, D), lambda i, j: (j, 0)),
                  pl.BlockSpec((1, D), lambda i, j: (0, 0)),
                  pl.BlockSpec((1, D), lambda i, j: (0, 0)),
                  pl.BlockSpec((1, D), lambda i, j: (0, 0))],
        out_specs=pl.BlockSpec((tm, D), lambda i, j: (i, 0)),
        scratch_shapes=[pltpu.VMEM((tm, D), jnp.float32)],
        compiler_params=_cparams("parallel", "arbitrary"),
    )(xp, _as_bf16(w1), b1, _as_bf16(w2), b2, gamma, beta)
    return out[:M]


def _tied_logits_kernel(x_ref, e_ref, z_ref, lse_ref, m_sc, l_sc, *, v_actual, need_mask):
    vi = pl.program_id(1)
    nv = pl.num_programs(1)
    tv = e_ref.shape[0]

    @pl.when(vi == 0)
    def _():
        m_sc[...] = jnp.full(m_sc.shape, -jnp.inf, jnp.float32)
        l_sc[...] = jnp.zeros(l_sc.shape, jnp.float32)

    # contract on D against embedding [tv, D] (no emb.T materialization, bf16 MXU operands)
    z = jax.lax.dot_general(x_ref[...], e_ref[...], (((1,), (1,)), ((), ())),
                            preferred_element_type=jnp.float32)          # [tm, tv]
    if need_mask:
        col = jax.lax.broadcasted_iota(jnp.int32, z.shape, 1) + vi * tv
        z = jnp.where(col < v_actual, z, NEG_INF)
    z_ref[...] = z

    # running max / sum-exp in f32 scratch (no readback of stored logits)
    m_prev = m_sc[...]
    m_new = jnp.maximum(m_prev, jnp.max(z, axis=-1, keepdims=True))
    l_sc[...] = jnp.exp(m_prev - m_new) * l_sc[...] + jnp.sum(jnp.exp(z - m_new),
                                                              axis=-1, keepdims=True)
    m_sc[...] = m_new

    @pl.when(vi == nv - 1)
    def _():
        lse_ref[...] = m_sc[...] + jnp.log(l_sc[...])


def _sub_lse_kernel(z_ref, lse_ref, o_ref):
    o_ref[...] = z_ref[...] - lse_ref[...]


def tied_projection_log_softmax(x, emb_w, tm_target=256, tv_target=1024):
    """log_softmax(x @ emb_w.T) as a streaming two-pass (vocab tiled; no resident [tm,V] slab)."""
    M, D = x.shape
    V = emb_w.shape[0]
    Mp, tm = _row_tiling(M, tm_target)
    xp = _as_bf16(_pad_rows(x, Mp))
    if V <= tv_target:
        Vp, tv = V, V
        emb_p = emb_w
    else:
        tv = tv_target
        Vp = _round_up(V, tv)
        emb_p = jnp.pad(emb_w, ((0, Vp - V), (0, 0)))
    emb_p = _as_bf16(emb_p)
    grid = (Mp // tm, Vp // tv)

    # pass 1: streamed logits tiles + per-row lse
    logits, lse = pl.pallas_call(
        functools.partial(_tied_logits_kernel, v_actual=V, need_mask=Vp != V),
        out_shape=(jax.ShapeDtypeStruct((Mp, Vp), jnp.float32),
                   jax.ShapeDtypeStruct((Mp, 1), jnp.float32)),
        grid=grid,
        in_specs=[pl.BlockSpec((tm, D), lambda i, v: (i, 0)),
                  pl.BlockSpec((tv, D), lambda i, v: (v, 0))],
        out_specs=(pl.BlockSpec((tm, tv), lambda i, v: (i, v)),
                   pl.BlockSpec((tm, 1), lambda i, v: (i, 0))),
        scratch_shapes=[pltpu.VMEM((tm, 1), jnp.float32),
                        pltpu.VMEM((tm, 1), jnp.float32)],
        compiler_params=_cparams("parallel", "arbitrary"),
    )(xp, emb_p)

    # pass 2: logp = logits - lse, streamed tile-by-tile, written in place (aliased)
    logp = pl.pallas_call(
        _sub_lse_kernel,
        out_shape=jax.ShapeDtypeStruct((Mp, Vp), jnp.float32),
        grid=grid,
        in_specs=[pl.BlockSpec((tm, tv), lambda i, v: (i, v)),
                  pl.BlockSpec((tm, 1), lambda i, v: (i, 0))],
        out_specs=pl.BlockSpec((tm, tv), lambda i, v: (i, v)),
        input_output_aliases={0: 0},
        compiler_params=_cparams("parallel", "parallel"),
    )(logits, lse)
    return logp[:M, :V]


# --------------------------- model glue (plain JAX) ---------------------------

def positional_encoding(tokens, d_model, pad_id):
    """Sinusoidal PE, zeroed at pad positions."""
    B, T = tokens.shape
    pos = jnp.arange(T, dtype=jnp.float32)[:, None]
    i = jnp.arange(d_model, dtype=jnp.float32)[None, :]
    angle = pos / jnp.power(10000.0, (2.0 * jnp.floor(i / 2.0)) / d_model)
    pe = jnp.where((jnp.arange(d_model) % 2) == 0, jnp.sin(angle), jnp.cos(angle))
    pe = jnp.broadcast_to(pe[None], (B, T, d_model))
    keep = (tokens != pad_id)[..., None].astype(pe.dtype)
    return pe * keep


def decoder_layer(x, k_enc, v_enc, tgt_pad, src_pad, causal, p, num_heads):
    B, T, D = x.shape
    M = B * T
    x2d = x.reshape(M, D)
    sa, ca = p["self_attn"], p["cross_attn"]

    # sublayer 1: masked self attention + residual + LN (dropout = identity)
    q, k, v = split_linear(x2d, sa["wqkv"], sa["bqkv"], 3)
    attn = flash_attention(q.reshape(B, T, D), k.reshape(B, T, D), v.reshape(B, T, D),
                           tgt_pad, num_heads=num_heads, causal=causal)
    # out-proj + residual + LN, with the cross-attention Q projection fused in
    x1, qc = proj_residual_layernorm(attn.reshape(M, D), sa["wo"], sa["bo"], x2d,
                                     p["ln1_g"], p["ln1_b"], wq=ca["wq"], bq=ca["bq"])

    # sublayer 2: encoder-decoder attention (encoder K/V precomputed once, shared weights)
    attn2 = flash_attention(qc.reshape(B, T, D), k_enc, v_enc, src_pad,
                            num_heads=num_heads, causal=False)
    x2 = proj_residual_layernorm(attn2.reshape(M, D), ca["wo"], ca["bo"], x1,
                                 p["ln2_g"], p["ln2_b"])

    # sublayer 3: fused feed-forward + residual + LN
    out = ffn_residual_layernorm(x2, p["ff_w1"], p["ff_b1"], p["ff_w2"], p["ff_b2"],
                                 p["ln3_g"], p["ln3_b"])
    return out.reshape(B, T, D)


def decoder_stack_forward(tokens, encoder_output, params, *, num_heads, num_layers,
                          future_mask=None, src_pad_mask=None, tgt_pad_mask=None,
                          pad_id=0):
    """tokens:[B,T] int, encoder_output:[B,T,D] -> log-probs [B,T,V]."""
    emb_w = params["embedding"]                     # [V, D], tied with output head
    B, T = tokens.shape
    V, D = emb_w.shape
    M = B * T

    # TODO(synk): embedding gather + PE kept in XLA (no useful Pallas formulation for a tiny gather)
    x = jnp.take(emb_w, tokens, axis=0) + positional_encoding(tokens, D, pad_id)
    # TODO(synk): training-mode Dropout (stateful RNG) not implemented; eval-mode identity.

    # TODO(synk): only the standard upper-triangular future_mask is supported; it is regenerated
    # in-kernel from iota (avoids streaming an O(B*T^2) f32 mask from HBM).
    causal = future_mask is not None

    def pad_to_f32(m):
        if m is None:
            return jnp.zeros((B, 1, T), jnp.float32)
        return m.reshape(B, 1, T).astype(jnp.float32)    # 1.0 = blocked

    tgt_pad = pad_to_f32(tgt_pad_mask)
    src_pad = pad_to_f32(src_pad_mask)

    lp = params["layer"]   # ModuleList([layer] * N) shares ONE set of layer weights.
    # Cross-attention K/V of the encoder are identical for every layer -> compute once.
    k_enc, v_enc = split_linear(encoder_output.reshape(M, D),
                                lp["cross_attn"]["wkv"], lp["cross_attn"]["bkv"], 2)
    k_enc = k_enc.reshape(B, T, D)
    v_enc = v_enc.reshape(B, T, D)

    for _ in range(num_layers):
        x = decoder_layer(x, k_enc, v_enc, tgt_pad, src_pad, causal, lp, num_heads)

    # tied output projection fused with streaming log_softmax
    logp = tied_projection_log_softmax(x.reshape(M, D), emb_w)
    return logp.reshape(B, T, V)


# ------------------------------ parameter init ------------------------------

def init_params(key, vocab, d_model, d_ff):
    def dense(k, shape):
        return jax.random.normal(k, shape, jnp.float32) * 0.02

    keys = jax.random.split(key, 8)
    z = lambda n: jnp.zeros((1, n), jnp.float32)
    one = lambda n: jnp.ones((1, n), jnp.float32)

    layer = dict(
        self_attn=dict(
            wqkv=dense(keys[0], (d_model, 3 * d_model)), bqkv=z(3 * d_model),
            wo=dense(keys[1], (d_model, d_model)), bo=z(d_model)),
        cross_attn=dict(
            wq=dense(keys[2], (d_model, d_model)), bq=z(d_model),
            wkv=dense(keys[3], (d_model, 2 * d_model)), bkv=z(2 * d_model),
            wo=dense(keys[4], (d_model, d_model)), bo=z(d_model)),
        ln1_g=one(d_model), ln1_b=z(d_model),
        ln2_g=one(d_model), ln2_b=z(d_model),
        ln3_g=one(d_model), ln3_b=z(d_model),
        ff_w1=dense(keys[5], (d_model, d_ff)), ff_b1=z(d_ff),
        ff_w2=dense(keys[6], (d_ff, d_model)), ff_b2=z(d_model),
    )
    embedding = dense(keys[7], (vocab, d_model))
    return dict(layer=layer, embedding=embedding)


# ---------------------------------- main ----------------------------------

if __name__ == "__main__":
    B, T, D, H, DFF, L, V = 2, 8, 32, 4, 64, 2, 64
    PAD_ID = 0

    key = jax.random.PRNGKey(0)
    kp, kt, ke = jax.random.split(key, 3)
    params = init_params(kp, V, D, DFF)

    tokens = jax.random.randint(kt, (B, T), 1, V)
    tokens = tokens.at[0, -2:].set(PAD_ID)                        # some target padding
    encoder_output = jax.random.normal(ke, (B, T, D), jnp.float32)

    future_mask = jnp.broadcast_to(
        jnp.triu(jnp.ones((T, T), jnp.bool_), k=1), (B, T, T))    # True = blocked (causal)
    tgt_pad_mask = (tokens == PAD_ID)[:, None, :]                 # [B,1,T]
    src_pad_mask = jnp.zeros((B, 1, T), jnp.bool_).at[0, 0, -1].set(True)

    fwd = jax.jit(functools.partial(decoder_stack_forward,
                                    num_heads=H, num_layers=L, pad_id=PAD_ID))
    out = fwd(tokens, encoder_output, params,
              future_mask=future_mask, src_pad_mask=src_pad_mask,
              tgt_pad_mask=tgt_pad_mask)
    out = jax.block_until_ready(out)
    assert out.shape == (B, T, V) and out.dtype == jnp.float32
    print("KERNEL_OK")
</pallas_src>

<mosaic_0001>
module attributes {stable_mosaic.version = 11 : i64} {
  func.func @_split_linear_kernel(%arg0: i32, %arg1: memref<16x32xf32, #tpu.memory_space<vmem>>, %arg2: memref<32x64xbf16, #tpu.memory_space<vmem>>, %arg3: memref<1x64xf32, #tpu.memory_space<vmem>>, %arg4: memref<16x32xbf16, #tpu.memory_space<vmem>>, %arg5: memref<16x32xbf16, #tpu.memory_space<vmem>>) attributes {dimension_semantics = [#tpu.dimension_semantics<parallel>], iteration_bounds = array<i64: 1>, scalar_prefetch = 0 : i64, scratch_operands = 0 : i64, tpu.core_type = #tpu.core_type<tc>, window_params = [{transform_indices = @transform_0, window_bounds = array<i64: 16, 32>}, {pipeline_mode = #tpu.pipeline_mode<synchronous>, transform_indices = @transform_1, window_bounds = array<i64: 32, 64>}, {pipeline_mode = #tpu.pipeline_mode<synchronous>, transform_indices = @transform_2, window_bounds = array<i64: 1, 64>}, {transform_indices = @transform_3, window_bounds = array<i64: 16, 32>}, {transform_indices = @transform_4, window_bounds = array<i64: 16, 32>}]} {
    %c0 = arith.constant 0 : index
    %c0_0 = arith.constant 0 : index
    %0 = vector.load %arg1[%c0, %c0_0] : memref<16x32xf32, #tpu.memory_space<vmem>>, vector<16x32xf32>
    %1 = arith.truncf %0 : vector<16x32xf32> to vector<16x32xbf16>
    %c0_1 = arith.constant 0 : index
    %c0_2 = arith.constant 0 : index
    %2 = vector.load %arg2[%c0_1, %c0_2] : memref<32x64xbf16, #tpu.memory_space<vmem>>, vector<32x64xbf16>
    %cst = arith.constant dense<0.000000e+00> : vector<16x64xf32>
    %3 = tpu.matmul %1, %2, %cst {dimension_numbers = #tpu.dot_dimension_numbers<[1], [0], [0], [1], [0, 0, 1, 1], [], []>} : vector<16x32xbf16>, vector<32x64xbf16>, vector<16x64xf32> -> vector<16x64xf32>
    %c0_3 = arith.constant 0 : index
    %c0_4 = arith.constant 0 : index
    %4 = vector.load %arg3[%c0_3, %c0_4] : memref<1x64xf32, #tpu.memory_space<vmem>>, vector<1x64xf32>
    %5 = vector.broadcast %4 : vector<1x64xf32> to vector<16x64xf32>
    %6 = arith.addf %3, %5 : vector<16x64xf32>
    %7 = vector.extract_strided_slice %6 {offsets = [0, 0], sizes = [16, 32], strides = [1, 1]} : vector<16x64xf32> to vector<16x32xf32>
    %8 = arith.truncf %7 : vector<16x32xf32> to vector<16x32xbf16>
    %c0_5 = arith.constant 0 : index
    %c0_6 = arith.constant 0 : index
    %9 = vector.load %arg4[%c0_5, %c0_6] : memref<16x32xbf16, #tpu.memory_space<vmem>>, vector<16x32xbf16>
    tpu.vector_store %arg4[%c0_5, %c0_6], %8 {strides = array<i32>} : memref<16x32xbf16, #tpu.memory_space<vmem>>, vector<16x32xbf16>,
    %10 = vector.extract_strided_slice %6 {offsets = [0, 32], sizes = [16, 32], strides = [1, 1]} : vector<16x64xf32> to vector<16x32xf32>
    %11 = arith.truncf %10 : vector<16x32xf32> to vector<16x32xbf16>
    %c0_7 = arith.constant 0 : index
    %c0_8 = arith.constant 0 : index
    %12 = vector.load %arg5[%c0_7, %c0_8] : memref<16x32xbf16, #tpu.memory_space<vmem>>, vector<16x32xbf16>
    tpu.vector_store %arg5[%c0_7, %c0_8], %11 {strides = array<i32>} : memref<16x32xbf16, #tpu.memory_space<vmem>>, vector<16x32xbf16>,
    return
  }
  func.func @transform_0(%arg0: i32) -> (i32, i32) {
    %c0_i32 = arith.constant 0 : i32
    %c0_i32_0 = arith.constant 0 : i32
    return %arg0, %c0_i32 : i32, i32
  }
  func.func @transform_1(%arg0: i32) -> (i32, i32) {
    %c0_i32 = arith.constant 0 : i32
    %c0_i32_0 = arith.constant 0 : i32
    %c0_i32_1 = arith.constant 0 : i32
    return %c0_i32, %c0_i32_0 : i32, i32
  }
  func.func @transform_2(%arg0: i32) -> (i32, i32) {
    %c0_i32 = arith.constant 0 : i32
    %c0_i32_0 = arith.constant 0 : i32
    %c0_i32_1 = arith.constant 0 : i32
    return %c0_i32, %c0_i32_0 : i32, i32
  }
  func.func @transform_3(%arg0: i32) -> (i32, i32) {
    %c0_i32 = arith.constant 0 : i32
    %c0_i32_0 = arith.constant 0 : i32
    return %arg0, %c0_i32 : i32, i32
  }
  func.func @transform_4(%arg0: i32) -> (i32, i32) {
    %c0_i32 = arith.constant 0 : i32
    %c0_i32_0 = arith.constant 0 : i32
    return %arg0, %c0_i32 : i32, i32
  }
}

module attributes {stable_mosaic.version = 11 : i64} {
  func.func @_split_linear_kernel(%arg0: i32, %arg1: memref<16x32xf32, #tpu.memory_space<vmem>>, %arg2: memref<32x96xbf16, #tpu.memory_space<vmem>>, %arg3: memref<1x96xf32, #tpu.memory_space<vmem>>, %arg4: memref<16x32xbf16, #tpu.memory_space<vmem>>, %arg5: memref<16x32xbf16, #tpu.memory_space<vmem>>, %arg6: memref<16x32xbf16, #tpu.memory_space<vmem>>) attributes {dimension_semantics = [#tpu.dimension_semantics<parallel>], iteration_bounds = array<i64: 1>, scalar_prefetch = 0 : i64, scratch_operands = 0 : i64, tpu.core_type = #tpu.core_type<tc>, window_params = [{transform_indices = @transform_0, window_bounds = array<i64: 16, 32>}, {pipeline_mode = #tpu.pipeline_mode<synchronous>, transform_indices = @transform_1, window_bounds = array<i64: 32, 96>}, {pipeline_mode = #tpu.pipeline_mode<synchronous>, transform_indices = @transform_2, window_bounds = array<i64: 1, 96>}, {transform_indices = @transform_3, window_bounds = array<i64: 16, 32>}, {transform_indices = @transform_4, window_bounds = array<i64: 16, 32>}, {transform_indices = @transform_5, window_bounds = array<i64: 16, 32>}]} {
    %c0 = arith.constant 0 : index
    %c0_0 = arith.constant 0 : index
    %0 = vector.load %arg1[%c0, %c0_0] : memref<16x32xf32, #tpu.memory_space<vmem>>, vector<16x32xf32>
    %1 = arith.truncf %0 : vector<16x32xf32> to vector<16x32xbf16>
    %c0_1 = arith.constant 0 : index
    %c0_2 = arith.constant 0 : index
    %2 = vector.load %arg2[%c0_1, %c0_2] : memref<32x96xbf16, #tpu.memory_space<vmem>>, vector<32x96xbf16>
    %cst = arith.constant dense<0.000000e+00> : vector<16x96xf32>
    %3 = tpu.matmul %1, %2, %cst {dimension_numbers = #tpu.dot_dimension_numbers<[1], [0], [0], [1], [0, 0, 1, 1], [], []>} : vector<16x32xbf16>, vector<32x96xbf16>, vector<16x96xf32> -> vector<16x96xf32>
    %c0_3 = arith.constant 0 : index
    %c0_4 = arith.constant 0 : index
    %4 = vector.load %arg3[%c0_3, %c0_4] : memref<1x96xf32, #tpu.memory_space<vmem>>, vector<1x96xf32>
    %5 = vector.broadcast %4 : vector<1x96xf32> to vector<16x96xf32>
    %6 = arith.addf %3, %5 : vector<16x96xf32>
    %7 = vector.extract_strided_slice %6 {offsets = [0, 0], sizes = [16, 32], strides = [1, 1]} : vector<16x96xf32> to vector<16x32xf32>
    %8 = arith.truncf %7 : vector<16x32xf32> to vector<16x32xbf16>
    %c0_5 = arith.constant 0 : index
    %c0_6 = arith.constant 0 : index
    %9 = vector.load %arg4[%c0_5, %c0_6] : memref<16x32xbf16, #tpu.memory_space<vmem>>, vector<16x32xbf16>
    tpu.vector_store %arg4[%c0_5, %c0_6], %8 {strides = array<i32>} : memref<16x32xbf16, #tpu.memory_space<vmem>>, vector<16x32xbf16>,
    %10 = vector.extract_strided_slice %6 {offsets = [0, 32], sizes = [16, 32], strides = [1, 1]} : vector<16x96xf32> to vector<16x32xf32>
    %11 = arith.truncf %10 : vector<16x32xf32> to vector<16x32xbf16>
    %c0_7 = arith.constant 0 : index
    %c0_8 = arith.constant 0 : index
    %12 = vector.load %arg5[%c0_7, %c0_8] : memref<16x32xbf16, #tpu.memory_space<vmem>>, vector<16x32xbf16>
    tpu.vector_store %arg5[%c0_7, %c0_8], %11 {strides = array<i32>} : memref<16x32xbf16, #tpu.memory_space<vmem>>, vector<16x32xbf16>,
    %13 = vector.extract_strided_slice %6 {offsets = [0, 64], sizes = [16, 32], strides = [1, 1]} : vector<16x96xf32> to vector<16x32xf32>
    %14 = arith.truncf %13 : vector<16x32xf32> to vector<16x32xbf16>
    %c0_9 = arith.constant 0 : index
    %c0_10 = arith.constant 0 : index
    %15 = vector.load %arg6[%c0_9, %c0_10] : memref<16x32xbf16, #tpu.memory_space<vmem>>, vector<16x32xbf16>
    tpu.vector_store %arg6[%c0_9, %c0_10], %14 {strides = array<i32>} : memref<16x32xbf16, #tpu.memory_space<vmem>>, vector<16x32xbf16>,
    return
  }
  func.func @transform_0(%arg0: i32) -> (i32, i32) {
    %c0_i32 = arith.constant 0 : i32
    %c0_i32_0 = arith.constant 0 : i32
    return %arg0, %c0_i32 : i32, i32
  }
  func.func @transform_1(%arg0: i32) -> (i32, i32) {
    %c0_i32 = arith.constant 0 : i32
    %c0_i32_0 = arith.constant 0 : i32
    %c0_i32_1 = arith.constant 0 : i32
    return %c0_i32, %c0_i32_0 : i32, i32
  }
  func.func @transform_2(%arg0: i32) -> (i32, i32) {
    %c0_i32 = arith.constant 0 : i32
    %c0_i32_0 = arith.constant 0 : i32
    %c0_i32_1 = arith.constant 0 : i32
    return %c0_i32, %c0_i32_0 : i32, i32
  }
  func.func @transform_3(%arg0: i32) -> (i32, i32) {
    %c0_i32 = arith.constant 0 : i32
    %c0_i32_0 = arith.constant 0 : i32
    return %arg0, %c0_i32 : i32, i32
  }
  func.func @transform_4(%arg0: i32) -> (i32, i32) {
    %c0_i32 = arith.constant 0 : i32
    %c0_i32_0 = arith.constant 0 : i32
    return %arg0, %c0_i32 : i32, i32
  }
  func.func @transform_5(%arg0: i32) -> (i32, i32) {
    %c0_i32 = arith.constant 0 : i32
    %c0_i32_0 = arith.constant 0 : i32
    return %arg0, %c0_i32 : i32, i32
  }
}

module attributes {stable_mosaic.version = 11 : i64} {
  func.func @_proj_res_ln_q_kernel(%arg0: i32, %arg1: memref<16x32xbf16, #tpu.memory_space<vmem>>, %arg2: memref<32x32xbf16, #tpu.memory_space<vmem>>, %arg3: memref<1x32xf32, #tpu.memory_space<vmem>>, %arg4: memref<16x32xf32, #tpu.memory_space<vmem>>, %arg5: memref<1x32xf32, #tpu.memory_space<vmem>>, %arg6: memref<1x32xf32, #tpu.memory_space<vmem>>, %arg7: memref<32x32xbf16, #tpu.memory_space<vmem>>, %arg8: memref<1x32xf32, #tpu.memory_space<vmem>>, %arg9: memref<16x32xf32, #tpu.memory_space<vmem>>, %arg10: memref<16x32xbf16, #tpu.memory_space<vmem>>) attributes {dimension_semantics = [#tpu.dimension_semantics<parallel>], iteration_bounds = array<i64: 1>, scalar_prefetch = 0 : i64, scratch_operands = 0 : i64, tpu.core_type = #tpu.core_type<tc>, window_params = [{transform_indices = @transform_0, window_bounds = array<i64: 16, 32>}, {pipeline_mode = #tpu.pipeline_mode<synchronous>, transform_indices = @transform_1, window_bounds = array<i64: 32, 32>}, {pipeline_mode = #tpu.pipeline_mode<synchronous>, transform_indices = @transform_2, window_bounds = array<i64: 1, 32>}, {transform_indices = @transform_3, window_bounds = array<i64: 16, 32>}, {pipeline_mode = #tpu.pipeline_mode<synchronous>, transform_indices = @transform_4, window_bounds = array<i64: 1, 32>}, {pipeline_mode = #tpu.pipeline_mode<synchronous>, transform_indices = @transform_5, window_bounds = array<i64: 1, 32>}, {pipeline_mode = #tpu.pipeline_mode<synchronous>, transform_indices = @transform_6, window_bounds = array<i64: 32, 32>}, {pipeline_mode = #tpu.pipeline_mode<synchronous>, transform_indices = @transform_7, window_bounds = array<i64: 1, 32>}, {transform_indices = @transform_8, window_bounds = array<i64: 16, 32>}, {transform_indices = @transform_9, window_bounds = array<i64: 16, 32>}]} {
    %c0 = arith.constant 0 : index
    %c0_0 = arith.constant 0 : index
    %0 = vector.load %arg1[%c0, %c0_0] : memref<16x32xbf16, #tpu.memory_space<vmem>>, vector<16x32xbf16>
    %c0_1 = arith.constant 0 : index
    %c0_2 = arith.constant 0 : index
    %1 = vector.load %arg2[%c0_1, %c0_2] : memref<32x32xbf16, #tpu.memory_space<vmem>>, vector<32x32xbf16>
    %cst = arith.constant dense<0.000000e+00> : vector<16x32xf32>
    %2 = tpu.matmul %0, %1, %cst {dimension_numbers = #tpu.dot_dimension_numbers<[1], [0], [0], [1], [0, 0, 1, 1], [], []>} : vector<16x32xbf16>, vector<32x32xbf16>, vector<16x32xf32> -> vector<16x32xf32>
    %c0_3 = arith.constant 0 : index
    %c0_4 = arith.constant 0 : index
    %3 = vector.load %arg3[%c0_3, %c0_4] : memref<1x32xf32, #tpu.memory_space<vmem>>, vector<1x32xf32>
    %4 = vector.broadcast %3 : vector<1x32xf32> to vector<16x32xf32>
    %5 = arith.addf %2, %4 : vector<16x32xf32>
    %c0_5 = arith.constant 0 : index
    %c0_6 = arith.constant 0 : index
    %6 = vector.load %arg4[%c0_5, %c0_6] : memref<16x32xf32, #tpu.memory_space<vmem>>, vector<16x32xf32>
    %7 = arith.addf %5, %6 : vector<16x32xf32>
    %c0_7 = arith.constant 0 : index
    %c0_8 = arith.constant 0 : index
    %8 = vector.load %arg5[%c0_7, %c0_8] : memref<1x32xf32, #tpu.memory_space<vmem>>, vector<1x32xf32>
    %c0_9 = arith.constant 0 : index
    %c0_10 = arith.constant 0 : index
    %9 = vector.load %arg6[%c0_9, %c0_10] : memref<1x32xf32, #tpu.memory_space<vmem>>, vector<1x32xf32>
    %cst_11 = arith.constant dense<0.000000e+00> : vector<16xf32>
    %10 = vector.multi_reduction <add>, %7, %cst_11 [1] : vector<16x32xf32> to vector<16xf32>
    %11 = vector.shape_cast %10 : vector<16xf32> to vector<16x1xf32>
    %cst_12 = arith.constant 3.200000e+01 : f32
    %12 = vector.broadcast %cst_12 : f32 to vector<16x1xf32>
    %13 = arith.divf %11, %12 : vector<16x1xf32>
    %14 = vector.broadcast %13 : vector<16x1xf32> to vector<16x32xf32>
    %15 = arith.subf %7, %14 : vector<16x32xf32>
    %16 = arith.mulf %15, %15 : vector<16x32xf32>
    %cst_13 = arith.constant dense<0.000000e+00> : vector<16xf32>
    %17 = vector.multi_reduction <add>, %16, %cst_13 [1] : vector<16x32xf32> to vector<16xf32>
    %18 = vector.shape_cast %17 : vector<16xf32> to vector<16x1xf32>
    %cst_14 = arith.constant 3.200000e+01 : f32
    %19 = vector.broadcast %cst_14 : f32 to vector<16x1xf32>
    %20 = arith.divf %18, %19 : vector<16x1xf32>
    %21 = vector.broadcast %13 : vector<16x1xf32> to vector<16x32xf32>
    %22 = arith.subf %7, %21 : vector<16x32xf32>
    %cst_15 = arith.constant 9.99999974E-6 : f32
    %23 = vector.broadcast %cst_15 : f32 to vector<16x1xf32>
    %24 = arith.addf %20, %23 : vector<16x1xf32>
    %25 = math.rsqrt %24 : vector<16x1xf32>
    %26 = vector.broadcast %25 : vector<16x1xf32> to vector<16x32xf32>
    %27 = arith.mulf %22, %26 : vector<16x32xf32>
    %28 = vector.broadcast %8 : vector<1x32xf32> to vector<16x32xf32>
    %29 = arith.mulf %27, %28 : vector<16x32xf32>
    %30 = vector.broadcast %9 : vector<1x32xf32> to vector<16x32xf32>
    %31 = arith.addf %29, %30 : vector<16x32xf32>
    %c0_16 = arith.constant 0 : index
    %c0_17 = arith.constant 0 : index
    %32 = vector.load %arg9[%c0_16, %c0_17] : memref<16x32xf32, #tpu.memory_space<vmem>>, vector<16x32xf32>
    tpu.vector_store %arg9[%c0_16, %c0_17], %31 {strides = array<i32>} : memref<16x32xf32, #tpu.memory_space<vmem>>, vector<16x32xf32>,
    %33 = arith.truncf %31 : vector<16x32xf32> to vector<16x32xbf16>
    %c0_18 = arith.constant 0 : index
    %c0_19 = arith.constant 0 : index
    %34 = vector.load %arg7[%c0_18, %c0_19] : memref<32x32xbf16, #tpu.memory_space<vmem>>, vector<32x32xbf16>
    %cst_20 = arith.constant dense<0.000000e+00> : vector<16x32xf32>
    %35 = tpu.matmul %33, %34, %cst_20 {dimension_numbers = #tpu.dot_dimension_numbers<[1], [0], [0], [1], [0, 0, 1, 1], [], []>} : vector<16x32xbf16>, vector<32x32xbf16>, vector<16x32xf32> -> vector<16x32xf32>
    %c0_21 = arith.constant 0 : index
    %c0_22 = arith.constant 0 : index
    %36 = vector.load %arg8[%c0_21, %c0_22] : memref<1x32xf32, #tpu.memory_space<vmem>>, vector<1x32xf32>
    %37 = vector.broadcast %36 : vector<1x32xf32> to vector<16x32xf32>
    %38 = arith.addf %35, %37 : vector<16x32xf32>
    %39 = arith.truncf %38 : vector<16x32xf32> to vector<16x32xbf16>
    %c0_23 = arith.constant 0 : index
    %c0_24 = arith.constant 0 : index
    %40 = vector.load %arg10[%c0_23, %c0_24] : memref<16x32xbf16, #tpu.memory_space<vmem>>, vector<16x32xbf16>
    tpu.vector_store %arg10[%c0_23, %c0_24], %39 {strides = array<i32>} : memref<16x32xbf16, #tpu.memory_space<vmem>>, vector<16x32xbf16>,
    return
  }
  func.func @transform_0(%arg0: i32) -> (i32, i32) {
    %c0_i32 = arith.constant 0 : i32
    %c0_i32_0 = arith.constant 0 : i32
    return %arg0, %c0_i32 : i32, i32
  }
  func.func @transform_1(%arg0: i32) -> (i32, i32) {
    %c0_i32 = arith.constant 0 : i32
    %c0_i32_0 = arith.constant 0 : i32
    %c0_i32_1 = arith.constant 0 : i32
    return %c0_i32, %c0_i32_0 : i32, i32
  }
  func.func @transform_2(%arg0: i32) -> (i32, i32) {
    %c0_i32 = arith.constant 0 : i32
    %c0_i32_0 = arith.constant 0 : i32
    %c0_i32_1 = arith.constant 0 : i32
    return %c0_i32, %c0_i32_0 : i32, i32
  }
  func.func @transform_3(%arg0: i32) -> (i32, i32) {
    %c0_i32 = arith.constant 0 : i32
    %c0_i32_0 = arith.constant 0 : i32
    return %arg0, %c0_i32 : i32, i32
  }
  func.func @transform_4(%arg0: i32) -> (i32, i32) {
    %c0_i32 = arith.constant 0 : i32
    %c0_i32_0 = arith.constant 0 : i32
    %c0_i32_1 = arith.constant 0 : i32
    return %c0_i32, %c0_i32_0 : i32, i32
  }
  func.func @transform_5(%arg0: i32) -> (i32, i32) {
    %c0_i32 = arith.constant 0 : i32
    %c0_i32_0 = arith.constant 0 : i32
    %c0_i32_1 = arith.constant 0 : i32
    return %c0_i32, %c0_i32_0 : i32, i32
  }
  func.func @transform_6(%arg0: i32) -> (i32, i32) {
    %c0_i32 = arith.constant 0 : i32
    %c0_i32_0 = arith.constant 0 : i32
    %c0_i32_1 = arith.constant 0 : i32
    return %c0_i32, %c0_i32_0 : i32, i32
  }
  func.func @transform_7(%arg0: i32) -> (i32, i32) {
    %c0_i32 = arith.constant 0 : i32
    %c0_i32_0 = arith.constant 0 : i32
    %c0_i32_1 = arith.constant 0 : i32
    return %c0_i32, %c0_i32_0 : i32, i32
  }
  func.func @transform_8(%arg0: i32) -> (i32, i32) {
    %c0_i32 = arith.constant 0 : i32
    %c0_i32_0 = arith.constant 0 : i32
    return %arg0, %c0_i32 : i32, i32
  }
  func.func @transform_9(%arg0: i32) -> (i32, i32) {
    %c0_i32 = arith.constant 0 : i32
    %c0_i32_0 = arith.constant 0 : i32
    return %arg0, %c0_i32 : i32, i32
  }
}

module attributes {stable_mosaic.version = 11 : i64} {
  func.func @_flash_attn_kernel(%arg0: i32, %arg1: i32, %arg2: i32, %arg3: memref<1x8x32xbf16, #tpu.memory_space<vmem>>, %arg4: memref<1x8x32xbf16, #tpu.memory_space<vmem>>, %arg5: memref<1x8x32xbf16, #tpu.memory_space<vmem>>, %arg6: memref<1x1x8xf32, #tpu.memory_space<vmem>>, %arg7: memref<1x8x32xbf16, #tpu.memory_space<vmem>>, %arg8: memref<4x8x1xf32, #tpu.memory_space<vmem>>, %arg9: memref<4x8x1xf32, #tpu.memory_space<vmem>>, %arg10: memref<4x8x8xf32, #tpu.memory_space<vmem>>) attributes {dimension_semantics = [#tpu.dimension_semantics<parallel>, #tpu.dimension_semantics<parallel>, #tpu.dimension_semantics<arbitrary>], iteration_bounds = array<i64: 2, 1, 1>, scalar_prefetch = 0 : i64, scratch_operands = 3 : i64, tpu.core_type = #tpu.core_type<tc>, window_params = [{transform_indices = @transform_0, window_bounds = array<i64: 1, 8, 32>}, {transform_indices = @transform_1, window_bounds = array<i64: 1, 8, 32>}, {transform_indices = @transform_2, window_bounds = array<i64: 1, 8, 32>}, {transform_indices = @transform_3, window_bounds = array<i64: 1, 1, 8>}, {transform_indices = @transform_4, window_bounds = array<i64: 1, 8, 32>}]} {
    %c0_i32 = arith.constant 0 : i32
    %0 = arith.cmpi eq, %arg2, %c0_i32 : i32
    %1 = arith.extui %0 : i1 to i32
    %c0_i32_0 = arith.constant 0 : i32
    %2 = arith.cmpi ne, %1, %c0_i32_0 : i32
    scf.if %2 {
      %cst = arith.constant 0xFF800000 : f32
      %12 = vector.broadcast %cst : f32 to vector<4x8x1xf32>
      %c0 = arith.constant 0 : index
      %c0_5 = arith.constant 0 : index
      %c0_6 = arith.constant 0 : index
      %13 = vector.load %arg8[%c0, %c0_5, %c0_6] : memref<4x8x1xf32, #tpu.memory_space<vmem>>, vector<4x8x1xf32>
      tpu.vector_store %arg8[%c0, %c0_5, %c0_6], %12 {strides = array<i32>} : memref<4x8x1xf32, #tpu.memory_space<vmem>>, vector<4x8x1xf32>,
      %cst_7 = arith.constant 0.000000e+00 : f32
      %14 = vector.broadcast %cst_7 : f32 to vector<4x8x1xf32>
      %c0_8 = arith.constant 0 : index
      %c0_9 = arith.constant 0 : index
      %c0_10 = arith.constant 0 : index
      %15 = vector.load %arg9[%c0_8, %c0_9, %c0_10] : memref<4x8x1xf32, #tpu.memory_space<vmem>>, vector<4x8x1xf32>
      tpu.vector_store %arg9[%c0_8, %c0_9, %c0_10], %14 {strides = array<i32>} : memref<4x8x1xf32, #tpu.memory_space<vmem>>, vector<4x8x1xf32>,
      %cst_11 = arith.constant 0.000000e+00 : f32
      %16 = vector.broadcast %cst_11 : f32 to vector<4x8x8xf32>
      %c0_12 = arith.constant 0 : index
      %c0_13 = arith.constant 0 : index
      %c0_14 = arith.constant 0 : index
      %17 = vector.load %arg10[%c0_12, %c0_13, %c0_14] : memref<4x8x8xf32, #tpu.memory_space<vmem>>, vector<4x8x8xf32>
      tpu.vector_store %arg10[%c0_12, %c0_13, %c0_14], %16 {strides = array<i32>} : memref<4x8x8xf32, #tpu.memory_space<vmem>>, vector<4x8x8xf32>,
    } else {
    }
    %c8_i32 = arith.constant 8 : i32
    %3 = arith.muli %arg2, %c8_i32 : i32
    %c1_i32 = arith.constant 1 : i32
    %4 = arith.addi %arg1, %c1_i32 : i32
    %c8_i32_1 = arith.constant 8 : i32
    %5 = arith.muli %4, %c8_i32_1 : i32
    %6 = arith.cmpi slt, %3, %5 : i32
    %7 = arith.extui %6 : i1 to i32
    %c0_i32_2 = arith.constant 0 : i32
    %8 = arith.cmpi ne, %7, %c0_i32_2 : i32
    scf.if %8 {
      %c0 = arith.constant 0 : index
      %c0_5 = arith.constant 0 : index
      %c0_6 = arith.constant 0 : index
      %12 = vector.load %arg6[%c0, %c0_5, %c0_6] : memref<1x1x8xf32, #tpu.memory_space<vmem>>, vector<1x1x8xf32>
      %13 = vector.shape_cast %12 : vector<1x1x8xf32> to vector<1x8xf32>
      %cst = arith.constant -1.000000e+09 : f32
      %14 = vector.broadcast %cst : f32 to vector<1x8xf32>
      %15 = arith.mulf %13, %14 : vector<1x8xf32>
      %16 = tpu.iota {dimensions = array<i32: 0>} : vector<8x8xi32>
      %c8_i32_7 = arith.constant 8 : i32
      %17 = arith.muli %arg1, %c8_i32_7 : i32
      %18 = vector.broadcast %17 : i32 to vector<8x8xi32>
      %19 = arith.addi %16, %18 : vector<8x8xi32>
      %20 = tpu.iota {dimensions = array<i32: 1>} : vector<8x8xi32>
      %c8_i32_8 = arith.constant 8 : i32
      %21 = arith.muli %arg2, %c8_i32_8 : i32
      %22 = vector.broadcast %21 : i32 to vector<8x8xi32>
      %23 = arith.addi %20, %22 : vector<8x8xi32>
      %24 = arith.cmpi sgt, %23, %19 : vector<8x8xi32>
      %cst_9 = arith.constant -1.000000e+09 : f32
      %cst_10 = arith.constant 0.000000e+00 : f32
      %25 = vector.broadcast %cst_9 : f32 to vector<8x8xf32>
      %26 = vector.broadcast %cst_10 : f32 to vector<8x8xf32>
      %27 = arith.select %24, %25, %26 : vector<8x8xi1>, vector<8x8xf32>
      %28 = vector.broadcast %15 : vector<1x8xf32> to vector<8x8xf32>
      %29 = arith.addf %28, %27 : vector<8x8xf32>
      %c0_11 = arith.constant 0 : index
      %c0_12 = arith.constant 0 : index
      %c0_13 = arith.constant 0 : index
      %30 = vector.load %arg3[%c0_11, %c0_12, %c0_13] : memref<1x8x32xbf16, #tpu.memory_space<vmem>>, vector<1x8x8xbf16>
      %31 = vector.shape_cast %30 : vector<1x8x8xbf16> to vector<8x8xbf16>
      %c0_14 = arith.constant 0 : index
      %c0_15 = arith.constant 0 : index
      %c0_16 = arith.constant 0 : index
      %32 = vector.load %arg4[%c0_14, %c0_15, %c0_16] : memref<1x8x32xbf16, #tpu.memory_space<vmem>>, vector<1x8x8xbf16>
      %33 = vector.shape_cast %32 : vector<1x8x8xbf16> to vector<8x8xbf16>
      %c0_17 = arith.constant 0 : index
      %c0_18 = arith.constant 0 : index
      %c0_19 = arith.constant 0 : index
      %34 = vector.load %arg5[%c0_17, %c0_18, %c0_19] : memref<1x8x32xbf16, #tpu.memory_space<vmem>>, vector<1x8x8xbf16>
      %35 = vector.shape_cast %34 : vector<1x8x8xbf16> to vector<8x8xbf16>
      %cst_20 = arith.constant dense<0.000000e+00> : vector<8x8xf32>
      %36 = tpu.matmul %31, %33, %cst_20 {dimension_numbers = #tpu.dot_dimension_numbers<[1], [1], [0], [0], [0, 0, 1, 0], [], []>} : vector<8x8xbf16>, vector<8x8xbf16>, vector<8x8xf32> -> vector<8x8xf32>
      %cst_21 = arith.constant 0.353553385 : f32
      %37 = vector.broadcast %cst_21 : f32 to vector<8x8xf32>
      %38 = arith.mulf %36, %37 : vector<8x8xf32>
      %39 = arith.addf %38, %29 : vector<8x8xf32>
      %c0_22 = arith.constant 0 : index
      %c0_23 = arith.constant 0 : index
      %c0_24 = arith.constant 0 : index
      %40 = vector.load %arg8[%c0_22, %c0_23, %c0_24] : memref<4x8x1xf32, #tpu.memory_space<vmem>>, vector<1x8x1xf32>
      %41 = vector.shape_cast %40 : vector<1x8x1xf32> to vector<8x1xf32>
      %cst_25 = arith.constant dense<0xFF800000> : vector<8xf32>
      %42 = vector.multi_reduction <maximumf>, %39, %cst_25 [1] : vector<8x8xf32> to vector<8xf32>
      %43 = vector.shape_cast %42 : vector<8xf32> to vector<8x1xf32>
      %44 = arith.maximumf %41, %43 : vector<8x1xf32>
      %45 = arith.subf %41, %44 : vector<8x1xf32>
      %46 = math.exp %45 : vector<8x1xf32>
      %47 = vector.broadcast %44 : vector<8x1xf32> to vector<8x8xf32>
      %48 = arith.subf %39, %47 : vector<8x8xf32>
      %49 = math.exp %48 : vector<8x8xf32>
      %c0_26 = arith.constant 0 : index
      %c0_27 = arith.constant 0 : index
      %c0_28 = arith.constant 0 : index
      %50 = vector.load %arg9[%c0_26, %c0_27, %c0_28] : memref<4x8x1xf32, #tpu.memory_space<vmem>>, vector<1x8x1xf32>
      %51 = vector.shape_cast %50 : vector<1x8x1xf32> to vector<8x1xf32>
      %52 = arith.mulf %46, %51 : vector<8x1xf32>
      %cst_29 = arith.constant dense<0.000000e+00> : vector<8xf32>
      %53 = vector.multi_reduction <add>, %49, %cst_29 [1] : vector<8x8xf32> to vector<8xf32>
      %54 = vector.shape_cast %53 : vector<8xf32> to vector<8x1xf32>
      %55 = arith.addf %52, %54 : vector<8x1xf32>
      %c0_30 = arith.constant 0 : index
      %c0_31 = arith.constant 0 : index
      %c0_32 = arith.constant 0 : index
      %56 = vector.load %arg9[%c0_30, %c0_31, %c0_32] : memref<4x8x1xf32, #tpu.memory_space<vmem>>, vector<1x8x1xf32>
      %57 = vector.shape_cast %56 : vector<1x8x1xf32> to vector<8x1xf32>
      %58 = vector.shape_cast %55 : vector<8x1xf32> to vector<1x8x1xf32>
      tpu.vector_store %arg9[%c0_30, %c0_31, %c0_32], %58 {strides = array<i32>} : memref<4x8x1xf32, #tpu.memory_space<vmem>>, vector<1x8x1xf32>,
      %c0_33 = arith.constant 0 : index
      %c0_34 = arith.constant 0 : index
      %c0_35 = arith.constant 0 : index
      %59 = vector.load %arg10[%c0_33, %c0_34, %c0_35] : memref<4x8x8xf32, #tpu.memory_space<vmem>>, vector<1x8x8xf32>
      %60 = vector.shape_cast %59 : vector<1x8x8xf32> to vector<8x8xf32>
      %61 = vector.broadcast %46 : vector<8x1xf32> to vector<8x8xf32>
      %62 = arith.mulf %61, %60 : vector<8x8xf32>
      %63 = arith.truncf %49 : vector<8x8xf32> to vector<8x8xbf16>
      %cst_36 = arith.constant dense<0.000000e+00> : vector<8x8xf32>
      %64 = tpu.matmul %63, %35, %cst_36 {dimension_numbers = #tpu.dot_dimension_numbers<[1], [0], [0], [1], [0, 0, 1, 1], [], []>} : vector<8x8xbf16>, vector<8x8xbf16>, vector<8x8xf32> -> vector<8x8xf32>
      %65 = arith.addf %62, %64 : vector<8x8xf32>
      %c0_37 = arith.constant 0 : index
      %c0_38 = arith.constant 0 : index
      %c0_39 = arith.constant 0 : index
      %66 = vector.load %arg10[%c0_37, %c0_38, %c0_39] : memref<4x8x8xf32, #tpu.memory_space<vmem>>, vector<1x8x8xf32>
      %67 = vector.shape_cast %66 : vector<1x8x8xf32> to vector<8x8xf32>
      %68 = vector.shape_cast %65 : vector<8x8xf32> to vector<1x8x8xf32>
      tpu.vector_store %arg10[%c0_37, %c0_38, %c0_39], %68 {strides = array<i32>} : memref<4x8x8xf32, #tpu.memory_space<vmem>>, vector<1x8x8xf32>,
      %c0_40 = arith.constant 0 : index
      %c0_41 = arith.constant 0 : index
      %c0_42 = arith.constant 0 : index
      %69 = vector.load %arg8[%c0_40, %c0_41, %c0_42] : memref<4x8x1xf32, #tpu.memory_space<vmem>>, vector<1x8x1xf32>
      %70 = vector.shape_cast %69 : vector<1x8x1xf32> to vector<8x1xf32>
      %71 = vector.shape_cast %44 : vector<8x1xf32> to vector<1x8x1xf32>
      tpu.vector_store %arg8[%c0_40, %c0_41, %c0_42], %71 {strides = array<i32>} : memref<4x8x1xf32, #tpu.memory_space<vmem>>, vector<1x8x1xf32>,
      %c0_43 = arith.constant 0 : index
      %c0_44 = arith.constant 0 : index
      %c8 = arith.constant 8 : index
      %72 = vector.load %arg3[%c0_43, %c0_44, %c8] : memref<1x8x32xbf16, #tpu.memory_space<vmem>>, vector<1x8x8xbf16>
      %73 = vector.shape_cast %72 : vector<1x8x8xbf16> to vector<8x8xbf16>
      %c0_45 = arith.constant 0 : index
      %c0_46 = arith.constant 0 : index
      %c8_47 = arith.constant 8 : index
      %74 = vector.load %arg4[%c0_45, %c0_46, %c8_47] : memref<1x8x32xbf16, #tpu.memory_space<vmem>>, vector<1x8x8xbf16>
      %75 = vector.shape_cast %74 : vector<1x8x8xbf16> to vector<8x8xbf16>
      %c0_48 = arith.constant 0 : index
      %c0_49 = arith.constant 0 : index
      %c8_50 = arith.constant 8 : index
      %76 = vector.load %arg5[%c0_48, %c0_49, %c8_50] : memref<1x8x32xbf16, #tpu.memory_space<vmem>>, vector<1x8x8xbf16>
      %77 = vector.shape_cast %76 : vector<1x8x8xbf16> to vector<8x8xbf16>
      %cst_51 = arith.constant dense<0.000000e+00> : vector<8x8xf32>
      %78 = tpu.matmul %73, %75, %cst_51 {dimension_numbers = #tpu.dot_dimension_numbers<[1], [1], [0], [0], [0, 0, 1, 0], [], []>} : vector<8x8xbf16>, vector<8x8xbf16>, vector<8x8xf32> -> vector<8x8xf32>
      %cst_52 = arith.constant 0.353553385 : f32
      %79 = vector.broadcast %cst_52 : f32 to vector<8x8xf32>
      %80 = arith.mulf %78, %79 : vector<8x8xf32>
      %81 = arith.addf %80, %29 : vector<8x8xf32>
      %c1 = arith.constant 1 : index
      %c0_53 = arith.constant 0 : index
      %c0_54 = arith.constant 0 : index
      %82 = vector.load %arg8[%c1, %c0_53, %c0_54] : memref<4x8x1xf32, #tpu.memory_space<vmem>>, vector<1x8x1xf32>
      %83 = vector.shape_cast %82 : vector<1x8x1xf32> to vector<8x1xf32>
      %cst_55 = arith.constant dense<0xFF800000> : vector<8xf32>
      %84 = vector.multi_reduction <maximumf>, %81, %cst_55 [1] : vector<8x8xf32> to vector<8xf32>
      %85 = vector.shape_cast %84 : vector<8xf32> to vector<8x1xf32>
      %86 = arith.maximumf %83, %85 : vector<8x1xf32>
      %87 = arith.subf %83, %86 : vector<8x1xf32>
      %88 = math.exp %87 : vector<8x1xf32>
      %89 = vector.broadcast %86 : vector<8x1xf32> to vector<8x8xf32>
      %90 = arith.subf %81, %89 : vector<8x8xf32>
      %91 = math.exp %90 : vector<8x8xf32>
      %c1_56 = arith.constant 1 : index
      %c0_57 = arith.constant 0 : index
      %c0_58 = arith.constant 0 : index
      %92 = vector.load %arg9[%c1_56, %c0_57, %c0_58] : memref<4x8x1xf32, #tpu.memory_space<vmem>>, vector<1x8x1xf32>
      %93 = vector.shape_cast %92 : vector<1x8x1xf32> to vector<8x1xf32>
      %94 = arith.mulf %88, %93 : vector<8x1xf32>
      %cst_59 = arith.constant dense<0.000000e+00> : vector<8xf32>
      %95 = vector.multi_reduction <add>, %91, %cst_59 [1] : vector<8x8xf32> to vector<8xf32>
      %96 = vector.shape_cast %95 : vector<8xf32> to vector<8x1xf32>
      %97 = arith.addf %94, %96 : vector<8x1xf32>
      %c1_60 = arith.constant 1 : index
      %c0_61 = arith.constant 0 : index
      %c0_62 = arith.constant 0 : index
      %98 = vector.load %arg9[%c1_60, %c0_61, %c0_62] : memref<4x8x1xf32, #tpu.memory_space<vmem>>, vector<1x8x1xf32>
      %99 = vector.shape_cast %98 : vector<1x8x1xf32> to vector<8x1xf32>
      %100 = vector.shape_cast %97 : vector<8x1xf32> to vector<1x8x1xf32>
      tpu.vector_store %arg9[%c1_60, %c0_61, %c0_62], %100 {strides = array<i32>} : memref<4x8x1xf32, #tpu.memory_space<vmem>>, vector<1x8x1xf32>,
      %c1_63 = arith.constant 1 : index
      %c0_64 = arith.constant 0 : index
      %c0_65 = arith.constant 0 : index
      %101 = vector.load %arg10[%c1_63, %c0_64, %c0_65] : memref<4x8x8xf32, #tpu.memory_space<vmem>>, vector<1x8x8xf32>
      %102 = vector.shape_cast %101 : vector<1x8x8xf32> to vector<8x8xf32>
      %103 = vector.broadcast %88 : vector<8x1xf32> to vector<8x8xf32>
      %104 = arith.mulf %103, %102 : vector<8x8xf32>
      %105 = arith.truncf %91 : vector<8x8xf32> to vector<8x8xbf16>
      %cst_66 = arith.constant dense<0.000000e+00> : vector<8x8xf32>
      %106 = tpu.matmul %105, %77, %cst_66 {dimension_numbers = #tpu.dot_dimension_numbers<[1], [0], [0], [1], [0, 0, 1, 1], [], []>} : vector<8x8xbf16>, vector<8x8xbf16>, vector<8x8xf32> -> vector<8x8xf32>
      %107 = arith.addf %104, %106 : vector<8x8xf32>
      %c1_67 = arith.constant 1 : index
      %c0_68 = arith.constant 0 : index
      %c0_69 = arith.constant 0 : index
      %108 = vector.load %arg10[%c1_67, %c0_68, %c0_69] : memref<4x8x8xf32, #tpu.memory_space<vmem>>, vector<1x8x8xf32>
      %109 = vector.shape_cast %108 : vector<1x8x8xf32> to vector<8x8xf32>
      %110 = vector.shape_cast %107 : vector<8x8xf32> to vector<1x8x8xf32>
      tpu.vector_store %arg10[%c1_67, %c0_68, %c0_69], %110 {strides = array<i32>} : memref<4x8x8xf32, #tpu.memory_space<vmem>>, vector<1x8x8xf32>,
      %c1_70 = arith.constant 1 : index
      %c0_71 = arith.constant 0 : index
      %c0_72 = arith.constant 0 : index
      %111 = vector.load %arg8[%c1_70, %c0_71, %c0_72] : memref<4x8x1xf32, #tpu.memory_space<vmem>>, vector<1x8x1xf32>
      %112 = vector.shape_cast %111 : vector<1x8x1xf32> to vector<8x1xf32>
      %113 = vector.shape_cast %86 : vector<8x1xf32> to vector<1x8x1xf32>
      tpu.vector_store %arg8[%c1_70, %c0_71, %c0_72], %113 {strides = array<i32>} : memref<4x8x1xf32, #tpu.memory_space<vmem>>, vector<1x8x1xf32>,
      %c0_73 = arith.constant 0 : index
      %c0_74 = arith.constant 0 : index
      %c16 = arith.constant 16 : index
      %114 = vector.load %arg3[%c0_73, %c0_74, %c16] : memref<1x8x32xbf16, #tpu.memory_space<vmem>>, vector<1x8x8xbf16>
      %115 = vector.shape_cast %114 : vector<1x8x8xbf16> to vector<8x8xbf16>
      %c0_75 = arith.constant 0 : index
      %c0_76 = arith.constant 0 : index
      %c16_77 = arith.constant 16 : index
      %116 = vector.load %arg4[%c0_75, %c0_76, %c16_77] : memref<1x8x32xbf16, #tpu.memory_space<vmem>>, vector<1x8x8xbf16>
      %117 = vector.shape_cast %116 : vector<1x8x8xbf16> to vector<8x8xbf16>
      %c0_78 = arith.constant 0 : index
      %c0_79 = arith.constant 0 : index
      %c16_80 = arith.constant 16 : index
      %118 = vector.load %arg5[%c0_78, %c0_79, %c16_80] : memref<1x8x32xbf16, #tpu.memory_space<vmem>>, vector<1x8x8xbf16>
      %119 = vector.shape_cast %118 : vector<1x8x8xbf16> to vector<8x8xbf16>
      %cst_81 = arith.constant dense<0.000000e+00> : vector<8x8xf32>
      %120 = tpu.matmul %115, %117, %cst_81 {dimension_numbers = #tpu.dot_dimension_numbers<[1], [1], [0], [0], [0, 0, 1, 0], [], []>} : vector<8x8xbf16>, vector<8x8xbf16>, vector<8x8xf32> -> vector<8x8xf32>
      %cst_82 = arith.constant 0.353553385 : f32
      %121 = vector.broadcast %cst_82 : f32 to vector<8x8xf32>
      %122 = arith.mulf %120, %121 : vector<8x8xf32>
      %123 = arith.addf %122, %29 : vector<8x8xf32>
      %c2 = arith.constant 2 : index
      %c0_83 = arith.constant 0 : index
      %c0_84 = arith.constant 0 : index
      %124 = vector.load %arg8[%c2, %c0_83, %c0_84] : memref<4x8x1xf32, #tpu.memory_space<vmem>>, vector<1x8x1xf32>
      %125 = vector.shape_cast %124 : vector<1x8x1xf32> to vector<8x1xf32>
      %cst_85 = arith.constant dense<0xFF800000> : vector<8xf32>
      %126 = vector.multi_reduction <maximumf>, %123, %cst_85 [1] : vector<8x8xf32> to vector<8xf32>
      %127 = vector.shape_cast %126 : vector<8xf32> to vector<8x1xf32>
      %128 = arith.maximumf %125, %127 : vector<8x1xf32>
      %129 = arith.subf %125, %128 : vector<8x1xf32>
      %130 = math.exp %129 : vector<8x1xf32>
      %131 = vector.broadcast %128 : vector<8x1xf32> to vector<8x8xf32>
      %132 = arith.subf %123, %131 : vector<8x8xf32>
      %133 = math.exp %132 : vector<8x8xf32>
      %c2_86 = arith.constant 2 : index
      %c0_87 = arith.constant 0 : index
      %c0_88 = arith.constant 0 : index
      %134 = vector.load %arg9[%c2_86, %c0_87, %c0_88] : memref<4x8x1xf32, #tpu.memory_space<vmem>>, vector<1x8x1xf32>
      %135 = vector.shape_cast %134 : vector<1x8x1xf32> to vector<8x1xf32>
      %136 = arith.mulf %130, %135 : vector<8x1xf32>
      %cst_89 = arith.constant dense<0.000000e+00> : vector<8xf32>
      %137 = vector.multi_reduction <add>, %133, %cst_89 [1] : vector<8x8xf32> to vector<8xf32>
      %138 = vector.shape_cast %137 : vector<8xf32> to vector<8x1xf32>
      %139 = arith.addf %136, %138 : vector<8x1xf32>
      %c2_90 = arith.constant 2 : index
      %c0_91 = arith.constant 0 : index
      %c0_92 = arith.constant 0 : index
      %140 = vector.load %arg9[%c2_90, %c0_91, %c0_92] : memref<4x8x1xf32, #tpu.memory_space<vmem>>, vector<1x8x1xf32>
      %141 = vector.shape_cast %140 : vector<1x8x1xf32> to vector<8x1xf32>
      %142 = vector.shape_cast %139 : vector<8x1xf32> to vector<1x8x1xf32>
      tpu.vector_store %arg9[%c2_90, %c0_91, %c0_92], %142 {strides = array<i32>} : memref<4x8x1xf32, #tpu.memory_space<vmem>>, vector<1x8x1xf32>,
      %c2_93 = arith.constant 2 : index
      %c0_94 = arith.constant 0 : index
      %c0_95 = arith.constant 0 : index
      %143 = vector.load %arg10[%c2_93, %c0_94, %c0_95] : memref<4x8x8xf32, #tpu.memory_space<vmem>>, vector<1x8x8xf32>
      %144 = vector.shape_cast %143 : vector<1x8x8xf32> to vector<8x8xf32>
      %145 = vector.broadcast %130 : vector<8x1xf32> to vector<8x8xf32>
      %146 = arith.mulf %145, %144 : vector<8x8xf32>
      %147 = arith.truncf %133 : vector<8x8xf32> to vector<8x8xbf16>
      %cst_96 = arith.constant dense<0.000000e+00> : vector<8x8xf32>
      %148 = tpu.matmul %147, %119, %cst_96 {dimension_numbers = #tpu.dot_dimension_numbers<[1], [0], [0], [1], [0, 0, 1, 1], [], []>} : vector<8x8xbf16>, vector<8x8xbf16>, vector<8x8xf32> -> vector<8x8xf32>
      %149 = arith.addf %146, %148 : vector<8x8xf32>
      %c2_97 = arith.constant 2 : index
      %c0_98 = arith.constant 0 : index
      %c0_99 = arith.constant 0 : index
      %150 = vector.load %arg10[%c2_97, %c0_98, %c0_99] : memref<4x8x8xf32, #tpu.memory_space<vmem>>, vector<1x8x8xf32>
      %151 = vector.shape_cast %150 : vector<1x8x8xf32> to vector<8x8xf32>
      %152 = vector.shape_cast %149 : vector<8x8xf32> to vector<1x8x8xf32>
      tpu.vector_store %arg10[%c2_97, %c0_98, %c0_99], %152 {strides = array<i32>} : memref<4x8x8xf32, #tpu.memory_space<vmem>>, vector<1x8x8xf32>,
      %c2_100 = arith.constant 2 : index
      %c0_101 = arith.constant 0 : index
      %c0_102 = arith.constant 0 : index
      %153 = vector.load %arg8[%c2_100, %c0_101, %c0_102] : memref<4x8x1xf32, #tpu.memory_space<vmem>>, vector<1x8x1xf32>
      %154 = vector.shape_cast %153 : vector<1x8x1xf32> to vector<8x1xf32>
      %155 = vector.shape_cast %128 : vector<8x1xf32> to vector<1x8x1xf32>
      tpu.vector_store %arg8[%c2_100, %c0_101, %c0_102], %155 {strides = array<i32>} : memref<4x8x1xf32, #tpu.memory_space<vmem>>, vector<1x8x1xf32>,
      %c0_103 = arith.constant 0 : index
      %c0_104 = arith.constant 0 : index
      %c24 = arith.constant 24 : index
      %156 = vector.load %arg3[%c0_103, %c0_104, %c24] : memref<1x8x32xbf16, #tpu.memory_space<vmem>>, vector<1x8x8xbf16>
      %157 = vector.shape_cast %156 : vector<1x8x8xbf16> to vector<8x8xbf16>
      %c0_105 = arith.constant 0 : index
      %c0_106 = arith.constant 0 : index
      %c24_107 = arith.constant 24 : index
      %158 = vector.load %arg4[%c0_105, %c0_106, %c24_107] : memref<1x8x32xbf16, #tpu.memory_space<vmem>>, vector<1x8x8xbf16>
      %159 = vector.shape_cast %158 : vector<1x8x8xbf16> to vector<8x8xbf16>
      %c0_108 = arith.constant 0 : index
      %c0_109 = arith.constant 0 : index
      %c24_110 = arith.constant 24 : index
      %160 = vector.load %arg5[%c0_108, %c0_109, %c24_110] : memref<1x8x32xbf16, #tpu.memory_space<vmem>>, vector<1x8x8xbf16>
      %161 = vector.shape_cast %160 : vector<1x8x8xbf16> to vector<8x8xbf16>
      %cst_111 = arith.constant dense<0.000000e+00> : vector<8x8xf32>
      %162 = tpu.matmul %157, %159, %cst_111 {dimension_numbers = #tpu.dot_dimension_numbers<[1], [1], [0], [0], [0, 0, 1, 0], [], []>} : vector<8x8xbf16>, vector<8x8xbf16>, vector<8x8xf32> -> vector<8x8xf32>
      %cst_112 = arith.constant 0.353553385 : f32
      %163 = vector.broadcast %cst_112 : f32 to vector<8x8xf32>
      %164 = arith.mulf %162, %163 : vector<8x8xf32>
      %165 = arith.addf %164, %29 : vector<8x8xf32>
      %c3 = arith.constant 3 : index
      %c0_113 = arith.constant 0 : index
      %c0_114 = arith.constant 0 : index
      %166 = vector.load %arg8[%c3, %c0_113, %c0_114] : memref<4x8x1xf32, #tpu.memory_space<vmem>>, vector<1x8x1xf32>
      %167 = vector.shape_cast %166 : vector<1x8x1xf32> to vector<8x1xf32>
      %cst_115 = arith.constant dense<0xFF800000> : vector<8xf32>
      %168 = vector.multi_reduction <maximumf>, %165, %cst_115 [1] : vector<8x8xf32> to vector<8xf32>
      %169 = vector.shape_cast %168 : vector<8xf32> to vector<8x1xf32>
      %170 = arith.maximumf %167, %169 : vector<8x1xf32>
      %171 = arith.subf %167, %170 : vector<8x1xf32>
      %172 = math.exp %171 : vector<8x1xf32>
      %173 = vector.broadcast %170 : vector<8x1xf32> to vector<8x8xf32>
      %174 = arith.subf %165, %173 : vector<8x8xf32>
      %175 = math.exp %174 : vector<8x8xf32>
      %c3_116 = arith.constant 3 : index
      %c0_117 = arith.constant 0 : index
      %c0_118 = arith.constant 0 : index
      %176 = vector.load %arg9[%c3_116, %c0_117, %c0_118] : memref<4x8x1xf32, #tpu.memory_space<vmem>>, vector<1x8x1xf32>
      %177 = vector.shape_cast %176 : vector<1x8x1xf32> to vector<8x1xf32>
      %178 = arith.mulf %172, %177 : vector<8x1xf32>
      %cst_119 = arith.constant dense<0.000000e+00> : vector<8xf32>
      %179 = vector.multi_reduction <add>, %175, %cst_119 [1] : vector<8x8xf32> to vector<8xf32>
      %180 = vector.shape_cast %179 : vector<8xf32> to vector<8x1xf32>
      %181 = arith.addf %178, %180 : vector<8x1xf32>
      %c3_120 = arith.constant 3 : index
      %c0_121 = arith.constant 0 : index
      %c0_122 = arith.constant 0 : index
      %182 = vector.load %arg9[%c3_120, %c0_121, %c0_122] : memref<4x8x1xf32, #tpu.memory_space<vmem>>, vector<1x8x1xf32>
      %183 = vector.shape_cast %182 : vector<1x8x1xf32> to vector<8x1xf32>
      %184 = vector.shape_cast %181 : vector<8x1xf32> to vector<1x8x1xf32>
      tpu.vector_store %arg9[%c3_120, %c0_121, %c0_122], %184 {strides = array<i32>} : memref<4x8x1xf32, #tpu.memory_space<vmem>>, vector<1x8x1xf32>,
      %c3_123 = arith.constant 3 : index
      %c0_124 = arith.constant 0 : index
      %c0_125 = arith.constant 0 : index
      %185 = vector.load %arg10[%c3_123, %c0_124, %c0_125] : memref<4x8x8xf32, #tpu.memory_space<vmem>>, vector<1x8x8xf32>
      %186 = vector.shape_cast %185 : vector<1x8x8xf32> to vector<8x8xf32>
      %187 = vector.broadcast %172 : vector<8x1xf32> to vector<8x8xf32>
      %188 = arith.mulf %187, %186 : vector<8x8xf32>
      %189 = arith.truncf %175 : vector<8x8xf32> to vector<8x8xbf16>
      %cst_126 = arith.constant dense<0.000000e+00> : vector<8x8xf32>
      %190 = tpu.matmul %189, %161, %cst_126 {dimension_numbers = #tpu.dot_dimension_numbers<[1], [0], [0], [1], [0, 0, 1, 1], [], []>} : vector<8x8xbf16>, vector<8x8xbf16>, vector<8x8xf32> -> vector<8x8xf32>
      %191 = arith.addf %188, %190 : vector<8x8xf32>
      %c3_127 = arith.constant 3 : index
      %c0_128 = arith.constant 0 : index
      %c0_129 = arith.constant 0 : index
      %192 = vector.load %arg10[%c3_127, %c0_128, %c0_129] : memref<4x8x8xf32, #tpu.memory_space<vmem>>, vector<1x8x8xf32>
      %193 = vector.shape_cast %192 : vector<1x8x8xf32> to vector<8x8xf32>
      %194 = vector.shape_cast %191 : vector<8x8xf32> to vector<1x8x8xf32>
      tpu.vector_store %arg10[%c3_127, %c0_128, %c0_129], %194 {strides = array<i32>} : memref<4x8x8xf32, #tpu.memory_space<vmem>>, vector<1x8x8xf32>,
      %c3_130 = arith.constant 3 : index
      %c0_131 = arith.constant 0 : index
      %c0_132 = arith.constant 0 : index
      %195 = vector.load %arg8[%c3_130, %c0_131, %c0_132] : memref<4x8x1xf32, #tpu.memory_space<vmem>>, vector<1x8x1xf32>
      %196 = vector.shape_cast %195 : vector<1x8x1xf32> to vector<8x1xf32>
      %197 = vector.shape_cast %170 : vector<8x1xf32> to vector<1x8x1xf32>
      tpu.vector_store %arg8[%c3_130, %c0_131, %c0_132], %197 {strides = array<i32>} : memref<4x8x1xf32, #tpu.memory_space<vmem>>, vector<1x8x1xf32>,
    } else {
    }
    %c0_i32_3 = arith.constant 0 : i32
    %9 = arith.cmpi eq, %arg2, %c0_i32_3 : i32
    %10 = arith.extui %9 : i1 to i32
    %c0_i32_4 = arith.constant 0 : i32
    %11 = arith.cmpi ne, %10, %c0_i32_4 : i32
    scf.if %11 {
      %c0 = arith.constant 0 : index
      %c0_5 = arith.constant 0 : index
      %c0_6 = arith.constant 0 : index
      %12 = vector.load %arg10[%c0, %c0_5, %c0_6] : memref<4x8x8xf32, #tpu.memory_space<vmem>>, vector<1x8x8xf32>
      %13 = vector.shape_cast %12 : vector<1x8x8xf32> to vector<8x8xf32>
      %c0_7 = arith.constant 0 : index
      %c0_8 = arith.constant 0 : index
      %c0_9 = arith.constant 0 : index
      %14 = vector.load %arg9[%c0_7, %c0_8, %c0_9] : memref<4x8x1xf32, #tpu.memory_space<vmem>>, vector<1x8x1xf32>
      %15 = vector.shape_cast %14 : vector<1x8x1xf32> to vector<8x1xf32>
      %16 = tpu.reciprocal %15 {approx = true} : vector<8x1xf32> -> vector<8x1xf32>
      %17 = vector.broadcast %16 : vector<8x1xf32> to vector<8x8xf32>
      %18 = arith.mulf %13, %17 : vector<8x8xf32>
      %c1 = arith.constant 1 : index
      %c0_10 = arith.constant 0 : index
      %c0_11 = arith.constant 0 : index
      %19 = vector.load %arg10[%c1, %c0_10, %c0_11] : memref<4x8x8xf32, #tpu.memory_space<vmem>>, vector<1x8x8xf32>
      %20 = vector.shape_cast %19 : vector<1x8x8xf32> to vector<8x8xf32>
      %c1_12 = arith.constant 1 : index
      %c0_13 = arith.constant 0 : index
      %c0_14 = arith.constant 0 : index
      %21 = vector.load %arg9[%c1_12, %c0_13, %c0_14] : memref<4x8x1xf32, #tpu.memory_space<vmem>>, vector<1x8x1xf32>
      %22 = vector.shape_cast %21 : vector<1x8x1xf32> to vector<8x1xf32>
      %23 = tpu.reciprocal %22 {approx = true} : vector<8x1xf32> -> vector<8x1xf32>
      %24 = vector.broadcast %23 : vector<8x1xf32> to vector<8x8xf32>
      %25 = arith.mulf %20, %24 : vector<8x8xf32>
      %c2 = arith.constant 2 : index
      %c0_15 = arith.constant 0 : index
      %c0_16 = arith.constant 0 : index
      %26 = vector.load %arg10[%c2, %c0_15, %c0_16] : memref<4x8x8xf32, #tpu.memory_space<vmem>>, vector<1x8x8xf32>
      %27 = vector.shape_cast %26 : vector<1x8x8xf32> to vector<8x8xf32>
      %c2_17 = arith.constant 2 : index
      %c0_18 = arith.constant 0 : index
      %c0_19 = arith.constant 0 : index
      %28 = vector.load %arg9[%c2_17, %c0_18, %c0_19] : memref<4x8x1xf32, #tpu.memory_space<vmem>>, vector<1x8x1xf32>
      %29 = vector.shape_cast %28 : vector<1x8x1xf32> to vector<8x1xf32>
      %30 = tpu.reciprocal %29 {approx = true} : vector<8x1xf32> -> vector<8x1xf32>
      %31 = vector.broadcast %30 : vector<8x1xf32> to vector<8x8xf32>
      %32 = arith.mulf %27, %31 : vector<8x8xf32>
      %c3 = arith.constant 3 : index
      %c0_20 = arith.constant 0 : index
      %c0_21 = arith.constant 0 : index
      %33 = vector.load %arg10[%c3, %c0_20, %c0_21] : memref<4x8x8xf32, #tpu.memory_space<vmem>>, vector<1x8x8xf32>
      %34 = vector.shape_cast %33 : vector<1x8x8xf32> to vector<8x8xf32>
      %c3_22 = arith.constant 3 : index
      %c0_23 = arith.constant 0 : index
      %c0_24 = arith.constant 0 : index
      %35 = vector.load %arg9[%c3_22, %c0_23, %c0_24] : memref<4x8x1xf32, #tpu.memory_space<vmem>>, vector<1x8x1xf32>
      %36 = vector.shape_cast %35 : vector<1x8x1xf32> to vector<8x1xf32>
      %37 = tpu.reciprocal %36 {approx = true} : vector<8x1xf32> -> vector<8x1xf32>
      %38 = vector.broadcast %37 : vector<8x1xf32> to vector<8x8xf32>
      %39 = arith.mulf %34, %38 : vector<8x8xf32>
      %40 = tpu.concatenate %18, %25, %32, %39 in 1 : vector<8x8xf32>, vector<8x8xf32>, vector<8x8xf32>, vector<8x8xf32> -> vector<8x32xf32>
      %41 = arith.truncf %40 : vector<8x32xf32> to vector<8x32xbf16>
      %c0_25 = arith.constant 0 : index
      %c0_26 = arith.constant 0 : index
      %c0_27 = arith.constant 0 : index
      %42 = vector.load %arg7[%c0_25, %c0_26, %c0_27] : memref<1x8x32xbf16, #tpu.memory_space<vmem>>, vector<1x8x32xbf16>
      %43 = vector.shape_cast %42 : vector<1x8x32xbf16> to vector<8x32xbf16>
      %44 = vector.shape_cast %41 : vector<8x32xbf16> to vector<1x8x32xbf16>
      tpu.vector_store %arg7[%c0_25, %c0_26, %c0_27], %44 {strides = array<i32>} : memref<1x8x32xbf16, #tpu.memory_space<vmem>>, vector<1x8x32xbf16>,
    } else {
    }
    return
  }
  func.func @transform_0(%arg0: i32, %arg1: i32, %arg2: i32) -> (i32, i32, i32) {
    %c0_i32 = arith.constant 0 : i32
    %c0_i32_0 = arith.constant 0 : i32
    return %arg0, %arg1, %c0_i32 : i32, i32, i32
  }
  func.func @transform_1(%arg0: i32, %arg1: i32, %arg2: i32) -> (i32, i32, i32) {
    %c0_i32 = arith.constant 0 : i32
    %c0_i32_0 = arith.constant 0 : i32
    return %arg0, %arg2, %c0_i32 : i32, i32, i32
  }
  func.func @transform_2(%arg0: i32, %arg1: i32, %arg2: i32) -> (i32, i32, i32) {
    %c0_i32 = arith.constant 0 : i32
    %c0_i32_0 = arith.constant 0 : i32
    return %arg0, %arg2, %c0_i32 : i32, i32, i32
  }
  func.func @transform_3(%arg0: i32, %arg1: i32, %arg2: i32) -> (i32, i32, i32) {
    %c0_i32 = arith.constant 0 : i32
    %c0_i32_0 = arith.constant 0 : i32
    return %arg0, %c0_i32, %arg2 : i32, i32, i32
  }
  func.func @transform_4(%arg0: i32, %arg1: i32, %arg2: i32) -> (i32, i32, i32) {
    %c0_i32 = arith.constant 0 : i32
    %c0_i32_0 = arith.constant 0 : i32
    return %arg0, %arg1, %c0_i32 : i32, i32, i32
  }
}

module attributes {stable_mosaic.version = 11 : i64} {
  func.func @_flash_attn_kernel(%arg0: i32, %arg1: i32, %arg2: i32, %arg3: memref<1x8x32xbf16, #tpu.memory_space<vmem>>, %arg4: memref<1x8x32xbf16, #tpu.memory_space<vmem>>, %arg5: memref<1x8x32xbf16, #tpu.memory_space<vmem>>, %arg6: memref<1x1x8xf32, #tpu.memory_space<vmem>>, %arg7: memref<1x8x32xbf16, #tpu.memory_space<vmem>>, %arg8: memref<4x8x1xf32, #tpu.memory_space<vmem>>, %arg9: memref<4x8x1xf32, #tpu.memory_space<vmem>>, %arg10: memref<4x8x8xf32, #tpu.memory_space<vmem>>) attributes {dimension_semantics = [#tpu.dimension_semantics<parallel>, #tpu.dimension_semantics<parallel>, #tpu.dimension_semantics<arbitrary>], iteration_bounds = array<i64: 2, 1, 1>, scalar_prefetch = 0 : i64, scratch_operands = 3 : i64, tpu.core_type = #tpu.core_type<tc>, window_params = [{transform_indices = @transform_0, window_bounds = array<i64: 1, 8, 32>}, {transform_indices = @transform_1, window_bounds = array<i64: 1, 8, 32>}, {transform_indices = @transform_2, window_bounds = array<i64: 1, 8, 32>}, {transform_indices = @transform_3, window_bounds = array<i64: 1, 1, 8>}, {transform_indices = @transform_4, window_bounds = array<i64: 1, 8, 32>}]} {
    %c0_i32 = arith.constant 0 : i32
    %0 = arith.cmpi eq, %arg2, %c0_i32 : i32
    %1 = arith.extui %0 : i1 to i32
    %c0_i32_0 = arith.constant 0 : i32
    %2 = arith.cmpi ne, %1, %c0_i32_0 : i32
    scf.if %2 {
      %cst_127 = arith.constant 0xFF800000 : f32
      %182 = vector.broadcast %cst_127 : f32 to vector<4x8x1xf32>
      %c0_128 = arith.constant 0 : index
      %c0_129 = arith.constant 0 : index
      %c0_130 = arith.constant 0 : index
      %183 = vector.load %arg8[%c0_128, %c0_129, %c0_130] : memref<4x8x1xf32, #tpu.memory_space<vmem>>, vector<4x8x1xf32>
      tpu.vector_store %arg8[%c0_128, %c0_129, %c0_130], %182 {strides = array<i32>} : memref<4x8x1xf32, #tpu.memory_space<vmem>>, vector<4x8x1xf32>,
      %cst_131 = arith.constant 0.000000e+00 : f32
      %184 = vector.broadcast %cst_131 : f32 to vector<4x8x1xf32>
      %c0_132 = arith.constant 0 : index
      %c0_133 = arith.constant 0 : index
      %c0_134 = arith.constant 0 : index
      %185 = vector.load %arg9[%c0_132, %c0_133, %c0_134] : memref<4x8x1xf32, #tpu.memory_space<vmem>>, vector<4x8x1xf32>
      tpu.vector_store %arg9[%c0_132, %c0_133, %c0_134], %184 {strides = array<i32>} : memref<4x8x1xf32, #tpu.memory_space<vmem>>, vector<4x8x1xf32>,
      %cst_135 = arith.constant 0.000000e+00 : f32
      %186 = vector.broadcast %cst_135 : f32 to vector<4x8x8xf32>
      %c0_136 = arith.constant 0 : index
      %c0_137 = arith.constant 0 : index
      %c0_138 = arith.constant 0 : index
      %187 = vector.load %arg10[%c0_136, %c0_137, %c0_138] : memref<4x8x8xf32, #tpu.memory_space<vmem>>, vector<4x8x8xf32>
      tpu.vector_store %arg10[%c0_136, %c0_137, %c0_138], %186 {strides = array<i32>} : memref<4x8x8xf32, #tpu.memory_space<vmem>>, vector<4x8x8xf32>,
    } else {
    }
    %c0 = arith.constant 0 : index
    %c0_1 = arith.constant 0 : index
    %c0_2 = arith.constant 0 : index
    %3 = vector.load %arg6[%c0, %c0_1, %c0_2] : memref<1x1x8xf32, #tpu.memory_space<vmem>>, vector<1x1x8xf32>
    %4 = vector.shape_cast %3 : vector<1x1x8xf32> to vector<1x8xf32>
    %cst = arith.constant -1.000000e+09 : f32
    %5 = vector.broadcast %cst : f32 to vector<1x8xf32>
    %6 = arith.mulf %4, %5 : vector<1x8xf32>
    %c0_3 = arith.constant 0 : index
    %c0_4 = arith.constant 0 : index
    %c0_5 = arith.constant 0 : index
    %7 = vector.load %arg3[%c0_3, %c0_4, %c0_5] : memref<1x8x32xbf16, #tpu.memory_space<vmem>>, vector<1x8x8xbf16>
    %8 = vector.shape_cast %7 : vector<1x8x8xbf16> to vector<8x8xbf16>
    %c0_6 = arith.constant 0 : index
    %c0_7 = arith.constant 0 : index
    %c0_8 = arith.constant 0 : index
    %9 = vector.load %arg4[%c0_6, %c0_7, %c0_8] : memref<1x8x32xbf16, #tpu.memory_space<vmem>>, vector<1x8x8xbf16>
    %10 = vector.shape_cast %9 : vector<1x8x8xbf16> to vector<8x8xbf16>
    %c0_9 = arith.constant 0 : index
    %c0_10 = arith.constant 0 : index
    %c0_11 = arith.constant 0 : index
    %11 = vector.load %arg5[%c0_9, %c0_10, %c0_11] : memref<1x8x32xbf16, #tpu.memory_space<vmem>>, vector<1x8x8xbf16>
    %12 = vector.shape_cast %11 : vector<1x8x8xbf16> to vector<8x8xbf16>
    %cst_12 = arith.constant dense<0.000000e+00> : vector<8x8xf32>
    %13 = tpu.matmul %8, %10, %cst_12 {dimension_numbers = #tpu.dot_dimension_numbers<[1], [1], [0], [0], [0, 0, 1, 0], [], []>} : vector<8x8xbf16>, vector<8x8xbf16>, vector<8x8xf32> -> vector<8x8xf32>
    %cst_13 = arith.constant 0.353553385 : f32
    %14 = vector.broadcast %cst_13 : f32 to vector<8x8xf32>
    %15 = arith.mulf %13, %14 : vector<8x8xf32>
    %16 = vector.broadcast %6 : vector<1x8xf32> to vector<8x8xf32>
    %17 = arith.addf %15, %16 : vector<8x8xf32>
    %c0_14 = arith.constant 0 : index
    %c0_15 = arith.constant 0 : index
    %c0_16 = arith.constant 0 : index
    %18 = vector.load %arg8[%c0_14, %c0_15, %c0_16] : memref<4x8x1xf32, #tpu.memory_space<vmem>>, vector<1x8x1xf32>
    %19 = vector.shape_cast %18 : vector<1x8x1xf32> to vector<8x1xf32>
    %cst_17 = arith.constant dense<0xFF800000> : vector<8xf32>
    %20 = vector.multi_reduction <maximumf>, %17, %cst_17 [1] : vector<8x8xf32> to vector<8xf32>
    %21 = vector.shape_cast %20 : vector<8xf32> to vector<8x1xf32>
    %22 = arith.maximumf %19, %21 : vector<8x1xf32>
    %23 = arith.subf %19, %22 : vector<8x1xf32>
    %24 = math.exp %23 : vector<8x1xf32>
    %25 = vector.broadcast %22 : vector<8x1xf32> to vector<8x8xf32>
    %26 = arith.subf %17, %25 : vector<8x8xf32>
    %27 = math.exp %26 : vector<8x8xf32>
    %c0_18 = arith.constant 0 : index
    %c0_19 = arith.constant 0 : index
    %c0_20 = arith.constant 0 : index
    %28 = vector.load %arg9[%c0_18, %c0_19, %c0_20] : memref<4x8x1xf32, #tpu.memory_space<vmem>>, vector<1x8x1xf32>
    %29 = vector.shape_cast %28 : vector<1x8x1xf32> to vector<8x1xf32>
    %30 = arith.mulf %24, %29 : vector<8x1xf32>
    %cst_21 = arith.constant dense<0.000000e+00> : vector<8xf32>
    %31 = vector.multi_reduction <add>, %27, %cst_21 [1] : vector<8x8xf32> to vector<8xf32>
    %32 = vector.shape_cast %31 : vector<8xf32> to vector<8x1xf32>
    %33 = arith.addf %30, %32 : vector<8x1xf32>
    %c0_22 = arith.constant 0 : index
    %c0_23 = arith.constant 0 : index
    %c0_24 = arith.constant 0 : index
    %34 = vector.load %arg9[%c0_22, %c0_23, %c0_24] : memref<4x8x1xf32, #tpu.memory_space<vmem>>, vector<1x8x1xf32>
    %35 = vector.shape_cast %34 : vector<1x8x1xf32> to vector<8x1xf32>
    %36 = vector.shape_cast %33 : vector<8x1xf32> to vector<1x8x1xf32>
    tpu.vector_store %arg9[%c0_22, %c0_23, %c0_24], %36 {strides = array<i32>} : memref<4x8x1xf32, #tpu.memory_space<vmem>>, vector<1x8x1xf32>,
    %c0_25 = arith.constant 0 : index
    %c0_26 = arith.constant 0 : index
    %c0_27 = arith.constant 0 : index
    %37 = vector.load %arg10[%c0_25, %c0_26, %c0_27] : memref<4x8x8xf32, #tpu.memory_space<vmem>>, vector<1x8x8xf32>
    %38 = vector.shape_cast %37 : vector<1x8x8xf32> to vector<8x8xf32>
    %39 = vector.broadcast %24 : vector<8x1xf32> to vector<8x8xf32>
    %40 = arith.mulf %39, %38 : vector<8x8xf32>
    %41 = arith.truncf %27 : vector<8x8xf32> to vector<8x8xbf16>
    %cst_28 = arith.constant dense<0.000000e+00> : vector<8x8xf32>
    %42 = tpu.matmul %41, %12, %cst_28 {dimension_numbers = #tpu.dot_dimension_numbers<[1], [0], [0], [1], [0, 0, 1, 1], [], []>} : vector<8x8xbf16>, vector<8x8xbf16>, vector<8x8xf32> -> vector<8x8xf32>
    %43 = arith.addf %40, %42 : vector<8x8xf32>
    %c0_29 = arith.constant 0 : index
    %c0_30 = arith.constant 0 : index
    %c0_31 = arith.constant 0 : index
    %44 = vector.load %arg10[%c0_29, %c0_30, %c0_31] : memref<4x8x8xf32, #tpu.memory_space<vmem>>, vector<1x8x8xf32>
    %45 = vector.shape_cast %44 : vector<1x8x8xf32> to vector<8x8xf32>
    %46 = vector.shape_cast %43 : vector<8x8xf32> to vector<1x8x8xf32>
    tpu.vector_store %arg10[%c0_29, %c0_30, %c0_31], %46 {strides = array<i32>} : memref<4x8x8xf32, #tpu.memory_space<vmem>>, vector<1x8x8xf32>,
    %c0_32 = arith.constant 0 : index
    %c0_33 = arith.constant 0 : index
    %c0_34 = arith.constant 0 : index
    %47 = vector.load %arg8[%c0_32, %c0_33, %c0_34] : memref<4x8x1xf32, #tpu.memory_space<vmem>>, vector<1x8x1xf32>
    %48 = vector.shape_cast %47 : vector<1x8x1xf32> to vector<8x1xf32>
    %49 = vector.shape_cast %22 : vector<8x1xf32> to vector<1x8x1xf32>
    tpu.vector_store %arg8[%c0_32, %c0_33, %c0_34], %49 {strides = array<i32>} : memref<4x8x1xf32, #tpu.memory_space<vmem>>, vector<1x8x1xf32>,
    %c0_35 = arith.constant 0 : index
    %c0_36 = arith.constant 0 : index
    %c8 = arith.constant 8 : index
    %50 = vector.load %arg3[%c0_35, %c0_36, %c8] : memref<1x8x32xbf16, #tpu.memory_space<vmem>>, vector<1x8x8xbf16>
    %51 = vector.shape_cast %50 : vector<1x8x8xbf16> to vector<8x8xbf16>
    %c0_37 = arith.constant 0 : index
    %c0_38 = arith.constant 0 : index
    %c8_39 = arith.constant 8 : index
    %52 = vector.load %arg4[%c0_37, %c0_38, %c8_39] : memref<1x8x32xbf16, #tpu.memory_space<vmem>>, vector<1x8x8xbf16>
    %53 = vector.shape_cast %52 : vector<1x8x8xbf16> to vector<8x8xbf16>
    %c0_40 = arith.constant 0 : index
    %c0_41 = arith.constant 0 : index
    %c8_42 = arith.constant 8 : index
    %54 = vector.load %arg5[%c0_40, %c0_41, %c8_42] : memref<1x8x32xbf16, #tpu.memory_space<vmem>>, vector<1x8x8xbf16>
    %55 = vector.shape_cast %54 : vector<1x8x8xbf16> to vector<8x8xbf16>
    %cst_43 = arith.constant dense<0.000000e+00> : vector<8x8xf32>
    %56 = tpu.matmul %51, %53, %cst_43 {dimension_numbers = #tpu.dot_dimension_numbers<[1], [1], [0], [0], [0, 0, 1, 0], [], []>} : vector<8x8xbf16>, vector<8x8xbf16>, vector<8x8xf32> -> vector<8x8xf32>
    %cst_44 = arith.constant 0.353553385 : f32
    %57 = vector.broadcast %cst_44 : f32 to vector<8x8xf32>
    %58 = arith.mulf %56, %57 : vector<8x8xf32>
    %59 = vector.broadcast %6 : vector<1x8xf32> to vector<8x8xf32>
    %60 = arith.addf %58, %59 : vector<8x8xf32>
    %c1 = arith.constant 1 : index
    %c0_45 = arith.constant 0 : index
    %c0_46 = arith.constant 0 : index
    %61 = vector.load %arg8[%c1, %c0_45, %c0_46] : memref<4x8x1xf32, #tpu.memory_space<vmem>>, vector<1x8x1xf32>
    %62 = vector.shape_cast %61 : vector<1x8x1xf32> to vector<8x1xf32>
    %cst_47 = arith.constant dense<0xFF800000> : vector<8xf32>
    %63 = vector.multi_reduction <maximumf>, %60, %cst_47 [1] : vector<8x8xf32> to vector<8xf32>
    %64 = vector.shape_cast %63 : vector<8xf32> to vector<8x1xf32>
    %65 = arith.maximumf %62, %64 : vector<8x1xf32>
    %66 = arith.subf %62, %65 : vector<8x1xf32>
    %67 = math.exp %66 : vector<8x1xf32>
    %68 = vector.broadcast %65 : vector<8x1xf32> to vector<8x8xf32>
    %69 = arith.subf %60, %68 : vector<8x8xf32>
    %70 = math.exp %69 : vector<8x8xf32>
    %c1_48 = arith.constant 1 : index
    %c0_49 = arith.constant 0 : index
    %c0_50 = arith.constant 0 : index
    %71 = vector.load %arg9[%c1_48, %c0_49, %c0_50] : memref<4x8x1xf32, #tpu.memory_space<vmem>>, vector<1x8x1xf32>
    %72 = vector.shape_cast %71 : vector<1x8x1xf32> to vector<8x1xf32>
    %73 = arith.mulf %67, %72 : vector<8x1xf32>
    %cst_51 = arith.constant dense<0.000000e+00> : vector<8xf32>
    %74 = vector.multi_reduction <add>, %70, %cst_51 [1] : vector<8x8xf32> to vector<8xf32>
    %75 = vector.shape_cast %74 : vector<8xf32> to vector<8x1xf32>
    %76 = arith.addf %73, %75 : vector<8x1xf32>
    %c1_52 = arith.constant 1 : index
    %c0_53 = arith.constant 0 : index
    %c0_54 = arith.constant 0 : index
    %77 = vector.load %arg9[%c1_52, %c0_53, %c0_54] : memref<4x8x1xf32, #tpu.memory_space<vmem>>, vector<1x8x1xf32>
    %78 = vector.shape_cast %77 : vector<1x8x1xf32> to vector<8x1xf32>
    %79 = vector.shape_cast %76 : vector<8x1xf32> to vector<1x8x1xf32>
    tpu.vector_store %arg9[%c1_52, %c0_53, %c0_54], %79 {strides = array<i32>} : memref<4x8x1xf32, #tpu.memory_space<vmem>>, vector<1x8x1xf32>,
    %c1_55 = arith.constant 1 : index
    %c0_56 = arith.constant 0 : index
    %c0_57 = arith.constant 0 : index
    %80 = vector.load %arg10[%c1_55, %c0_56, %c0_57] : memref<4x8x8xf32, #tpu.memory_space<vmem>>, vector<1x8x8xf32>
    %81 = vector.shape_cast %80 : vector<1x8x8xf32> to vector<8x8xf32>
    %82 = vector.broadcast %67 : vector<8x1xf32> to vector<8x8xf32>
    %83 = arith.mulf %82, %81 : vector<8x8xf32>
    %84 = arith.truncf %70 : vector<8x8xf32> to vector<8x8xbf16>
    %cst_58 = arith.constant dense<0.000000e+00> : vector<8x8xf32>
    %85 = tpu.matmul %84, %55, %cst_58 {dimension_numbers = #tpu.dot_dimension_numbers<[1], [0], [0], [1], [0, 0, 1, 1], [], []>} : vector<8x8xbf16>, vector<8x8xbf16>, vector<8x8xf32> -> vector<8x8xf32>
    %86 = arith.addf %83, %85 : vector<8x8xf32>
    %c1_59 = arith.constant 1 : index
    %c0_60 = arith.constant 0 : index
    %c0_61 = arith.constant 0 : index
    %87 = vector.load %arg10[%c1_59, %c0_60, %c0_61] : memref<4x8x8xf32, #tpu.memory_space<vmem>>, vector<1x8x8xf32>
    %88 = vector.shape_cast %87 : vector<1x8x8xf32> to vector<8x8xf32>
    %89 = vector.shape_cast %86 : vector<8x8xf32> to vector<1x8x8xf32>
    tpu.vector_store %arg10[%c1_59, %c0_60, %c0_61], %89 {strides = array<i32>} : memref<4x8x8xf32, #tpu.memory_space<vmem>>, vector<1x8x8xf32>,
    %c1_62 = arith.constant 1 : index
    %c0_63 = arith.constant 0 : index
    %c0_64 = arith.constant 0 : index
    %90 = vector.load %arg8[%c1_62, %c0_63, %c0_64] : memref<4x8x1xf32, #tpu.memory_space<vmem>>, vector<1x8x1xf32>
    %91 = vector.shape_cast %90 : vector<1x8x1xf32> to vector<8x1xf32>
    %92 = vector.shape_cast %65 : vector<8x1xf32> to vector<1x8x1xf32>
    tpu.vector_store %arg8[%c1_62, %c0_63, %c0_64], %92 {strides = array<i32>} : memref<4x8x1xf32, #tpu.memory_space<vmem>>, vector<1x8x1xf32>,
    %c0_65 = arith.constant 0 : index
    %c0_66 = arith.constant 0 : index
    %c16 = arith.constant 16 : index
    %93 = vector.load %arg3[%c0_65, %c0_66, %c16] : memref<1x8x32xbf16, #tpu.memory_space<vmem>>, vector<1x8x8xbf16>
    %94 = vector.shape_cast %93 : vector<1x8x8xbf16> to vector<8x8xbf16>
    %c0_67 = arith.constant 0 : index
    %c0_68 = arith.constant 0 : index
    %c16_69 = arith.constant 16 : index
    %95 = vector.load %arg4[%c0_67, %c0_68, %c16_69] : memref<1x8x32xbf16, #tpu.memory_space<vmem>>, vector<1x8x8xbf16>
    %96 = vector.shape_cast %95 : vector<1x8x8xbf16> to vector<8x8xbf16>
    %c0_70 = arith.constant 0 : index
    %c0_71 = arith.constant 0 : index
    %c16_72 = arith.constant 16 : index
    %97 = vector.load %arg5[%c0_70, %c0_71, %c16_72] : memref<1x8x32xbf16, #tpu.memory_space<vmem>>, vector<1x8x8xbf16>
    %98 = vector.shape_cast %97 : vector<1x8x8xbf16> to vector<8x8xbf16>
    %cst_73 = arith.constant dense<0.000000e+00> : vector<8x8xf32>
    %99 = tpu.matmul %94, %96, %cst_73 {dimension_numbers = #tpu.dot_dimension_numbers<[1], [1], [0], [0], [0, 0, 1, 0], [], []>} : vector<8x8xbf16>, vector<8x8xbf16>, vector<8x8xf32> -> vector<8x8xf32>
    %cst_74 = arith.constant 0.353553385 : f32
    %100 = vector.broadcast %cst_74 : f32 to vector<8x8xf32>
    %101 = arith.mulf %99, %100 : vector<8x8xf32>
    %102 = vector.broadcast %6 : vector<1x8xf32> to vector<8x8xf32>
    %103 = arith.addf %101, %102 : vector<8x8xf32>
    %c2 = arith.constant 2 : index
    %c0_75 = arith.constant 0 : index
    %c0_76 = arith.constant 0 : index
    %104 = vector.load %arg8[%c2, %c0_75, %c0_76] : memref<4x8x1xf32, #tpu.memory_space<vmem>>, vector<1x8x1xf32>
    %105 = vector.shape_cast %104 : vector<1x8x1xf32> to vector<8x1xf32>
    %cst_77 = arith.constant dense<0xFF800000> : vector<8xf32>
    %106 = vector.multi_reduction <maximumf>, %103, %cst_77 [1] : vector<8x8xf32> to vector<8xf32>
    %107 = vector.shape_cast %106 : vector<8xf32> to vector<8x1xf32>
    %108 = arith.maximumf %105, %107 : vector<8x1xf32>
    %109 = arith.subf %105, %108 : vector<8x1xf32>
    %110 = math.exp %109 : vector<8x1xf32>
    %111 = vector.broadcast %108 : vector<8x1xf32> to vector<8x8xf32>
    %112 = arith.subf %103, %111 : vector<8x8xf32>
    %113 = math.exp %112 : vector<8x8xf32>
    %c2_78 = arith.constant 2 : index
    %c0_79 = arith.constant 0 : index
    %c0_80 = arith.constant 0 : index
    %114 = vector.load %arg9[%c2_78, %c0_79, %c0_80] : memref<4x8x1xf32, #tpu.memory_space<vmem>>, vector<1x8x1xf32>
    %115 = vector.shape_cast %114 : vector<1x8x1xf32> to vector<8x1xf32>
    %116 = arith.mulf %110, %115 : vector<8x1xf32>
    %cst_81 = arith.constant dense<0.000000e+00> : vector<8xf32>
    %117 = vector.multi_reduction <add>, %113, %cst_81 [1] : vector<8x8xf32> to vector<8xf32>
    %118 = vector.shape_cast %117 : vector<8xf32> to vector<8x1xf32>
    %119 = arith.addf %116, %118 : vector<8x1xf32>
    %c2_82 = arith.constant 2 : index
    %c0_83 = arith.constant 0 : index
    %c0_84 = arith.constant 0 : index
    %120 = vector.load %arg9[%c2_82, %c0_83, %c0_84] : memref<4x8x1xf32, #tpu.memory_space<vmem>>, vector<1x8x1xf32>
    %121 = vector.shape_cast %120 : vector<1x8x1xf32> to vector<8x1xf32>
    %122 = vector.shape_cast %119 : vector<8x1xf32> to vector<1x8x1xf32>
    tpu.vector_store %arg9[%c2_82, %c0_83, %c0_84], %122 {strides = array<i32>} : memref<4x8x1xf32, #tpu.memory_space<vmem>>, vector<1x8x1xf32>,
    %c2_85 = arith.constant 2 : index
    %c0_86 = arith.constant 0 : index
    %c0_87 = arith.constant 0 : index
    %123 = vector.load %arg10[%c2_85, %c0_86, %c0_87] : memref<4x8x8xf32, #tpu.memory_space<vmem>>, vector<1x8x8xf32>
    %124 = vector.shape_cast %123 : vector<1x8x8xf32> to vector<8x8xf32>
    %125 = vector.broadcast %110 : vector<8x1xf32> to vector<8x8xf32>
    %126 = arith.mulf %125, %124 : vector<8x8xf32>
    %127 = arith.truncf %113 : vector<8x8xf32> to vector<8x8xbf16>
    %cst_88 = arith.constant dense<0.000000e+00> : vector<8x8xf32>
    %128 = tpu.matmul %127, %98, %cst_88 {dimension_numbers = #tpu.dot_dimension_numbers<[1], [0], [0], [1], [0, 0, 1, 1], [], []>} : vector<8x8xbf16>, vector<8x8xbf16>, vector<8x8xf32> -> vector<8x8xf32>
    %129 = arith.addf %126, %128 : vector<8x8xf32>
    %c2_89 = arith.constant 2 : index
    %c0_90 = arith.constant 0 : index
    %c0_91 = arith.constant 0 : index
    %130 = vector.load %arg10[%c2_89, %c0_90, %c0_91] : memref<4x8x8xf32, #tpu.memory_space<vmem>>, vector<1x8x8xf32>
    %131 = vector.shape_cast %130 : vector<1x8x8xf32> to vector<8x8xf32>
    %132 = vector.shape_cast %129 : vector<8x8xf32> to vector<1x8x8xf32>
    tpu.vector_store %arg10[%c2_89, %c0_90, %c0_91], %132 {strides = array<i32>} : memref<4x8x8xf32, #tpu.memory_space<vmem>>, vector<1x8x8xf32>,
    %c2_92 = arith.constant 2 : index
    %c0_93 = arith.constant 0 : index
    %c0_94 = arith.constant 0 : index
    %133 = vector.load %arg8[%c2_92, %c0_93, %c0_94] : memref<4x8x1xf32, #tpu.memory_space<vmem>>, vector<1x8x1xf32>
    %134 = vector.shape_cast %133 : vector<1x8x1xf32> to vector<8x1xf32>
    %135 = vector.shape_cast %108 : vector<8x1xf32> to vector<1x8x1xf32>
    tpu.vector_store %arg8[%c2_92, %c0_93, %c0_94], %135 {strides = array<i32>} : memref<4x8x1xf32, #tpu.memory_space<vmem>>, vector<1x8x1xf32>,
    %c0_95 = arith.constant 0 : index
    %c0_96 = arith.constant 0 : index
    %c24 = arith.constant 24 : index
    %136 = vector.load %arg3[%c0_95, %c0_96, %c24] : memref<1x8x32xbf16, #tpu.memory_space<vmem>>, vector<1x8x8xbf16>
    %137 = vector.shape_cast %136 : vector<1x8x8xbf16> to vector<8x8xbf16>
    %c0_97 = arith.constant 0 : index
    %c0_98 = arith.constant 0 : index
    %c24_99 = arith.constant 24 : index
    %138 = vector.load %arg4[%c0_97, %c0_98, %c24_99] : memref<1x8x32xbf16, #tpu.memory_space<vmem>>, vector<1x8x8xbf16>
    %139 = vector.shape_cast %138 : vector<1x8x8xbf16> to vector<8x8xbf16>
    %c0_100 = arith.constant 0 : index
    %c0_101 = arith.constant 0 : index
    %c24_102 = arith.constant 24 : index
    %140 = vector.load %arg5[%c0_100, %c0_101, %c24_102] : memref<1x8x32xbf16, #tpu.memory_space<vmem>>, vector<1x8x8xbf16>
    %141 = vector.shape_cast %140 : vector<1x8x8xbf16> to vector<8x8xbf16>
    %cst_103 = arith.constant dense<0.000000e+00> : vector<8x8xf32>
    %142 = tpu.matmul %137, %139, %cst_103 {dimension_numbers = #tpu.dot_dimension_numbers<[1], [1], [0], [0], [0, 0, 1, 0], [], []>} : vector<8x8xbf16>, vector<8x8xbf16>, vector<8x8xf32> -> vector<8x8xf32>
    %cst_104 = arith.constant 0.353553385 : f32
    %143 = vector.broadcast %cst_104 : f32 to vector<8x8xf32>
    %144 = arith.mulf %142, %143 : vector<8x8xf32>
    %145 = vector.broadcast %6 : vector<1x8xf32> to vector<8x8xf32>
    %146 = arith.addf %144, %145 : vector<8x8xf32>
    %c3 = arith.constant 3 : index
    %c0_105 = arith.constant 0 : index
    %c0_106 = arith.constant 0 : index
    %147 = vector.load %arg8[%c3, %c0_105, %c0_106] : memref<4x8x1xf32, #tpu.memory_space<vmem>>, vector<1x8x1xf32>
    %148 = vector.shape_cast %147 : vector<1x8x1xf32> to vector<8x1xf32>
    %cst_107 = arith.constant dense<0xFF800000> : vector<8xf32>
    %149 = vector.multi_reduction <maximumf>, %146, %cst_107 [1] : vector<8x8xf32> to vector<8xf32>
    %150 = vector.shape_cast %149 : vector<8xf32> to vector<8x1xf32>
    %151 = arith.maximumf %148, %150 : vector<8x1xf32>
    %152 = arith.subf %148, %151 : vector<8x1xf32>
    %153 = math.exp %152 : vector<8x1xf32>
    %154 = vector.broadcast %151 : vector<8x1xf32> to vector<8x8xf32>
    %155 = arith.subf %146, %154 : vector<8x8xf32>
    %156 = math.exp %155 : vector<8x8xf32>
    %c3_108 = arith.constant 3 : index
    %c0_109 = arith.constant 0 : index
    %c0_110 = arith.constant 0 : index
    %157 = vector.load %arg9[%c3_108, %c0_109, %c0_110] : memref<4x8x1xf32, #tpu.memory_space<vmem>>, vector<1x8x1xf32>
    %158 = vector.shape_cast %157 : vector<1x8x1xf32> to vector<8x1xf32>
    %159 = arith.mulf %153, %158 : vector<8x1xf32>
    %cst_111 = arith.constant dense<0.000000e+00> : vector<8xf32>
    %160 = vector.multi_reduction <add>, %156, %cst_111 [1] : vector<8x8xf32> to vector<8xf32>
    %161 = vector.shape_cast %160 : vector<8xf32> to vector<8x1xf32>
    %162 = arith.addf %159, %161 : vector<8x1xf32>
    %c3_112 = arith.constant 3 : index
    %c0_113 = arith.constant 0 : index
    %c0_114 = arith.constant 0 : index
    %163 = vector.load %arg9[%c3_112, %c0_113, %c0_114] : memref<4x8x1xf32, #tpu.memory_space<vmem>>, vector<1x8x1xf32>
    %164 = vector.shape_cast %163 : vector<1x8x1xf32> to vector<8x1xf32>
    %165 = vector.shape_cast %162 : vector<8x1xf32> to vector<1x8x1xf32>
    tpu.vector_store %arg9[%c3_112, %c0_113, %c0_114], %165 {strides = array<i32>} : memref<4x8x1xf32, #tpu.memory_space<vmem>>, vector<1x8x1xf32>,
    %c3_115 = arith.constant 3 : index
    %c0_116 = arith.constant 0 : index
    %c0_117 = arith.constant 0 : index
    %166 = vector.load %arg10[%c3_115, %c0_116, %c0_117] : memref<4x8x8xf32, #tpu.memory_space<vmem>>, vector<1x8x8xf32>
    %167 = vector.shape_cast %166 : vector<1x8x8xf32> to vector<8x8xf32>
    %168 = vector.broadcast %153 : vector<8x1xf32> to vector<8x8xf32>
    %169 = arith.mulf %168, %167 : vector<8x8xf32>
    %170 = arith.truncf %156 : vector<8x8xf32> to vector<8x8xbf16>
    %cst_118 = arith.constant dense<0.000000e+00> : vector<8x8xf32>
    %171 = tpu.matmul %170, %141, %cst_118 {dimension_numbers = #tpu.dot_dimension_numbers<[1], [0], [0], [1], [0, 0, 1, 1], [], []>} : vector<8x8xbf16>, vector<8x8xbf16>, vector<8x8xf32> -> vector<8x8xf32>
    %172 = arith.addf %169, %171 : vector<8x8xf32>
    %c3_119 = arith.constant 3 : index
    %c0_120 = arith.constant 0 : index
    %c0_121 = arith.constant 0 : index
    %173 = vector.load %arg10[%c3_119, %c0_120, %c0_121] : memref<4x8x8xf32, #tpu.memory_space<vmem>>, vector<1x8x8xf32>
    %174 = vector.shape_cast %173 : vector<1x8x8xf32> to vector<8x8xf32>
    %175 = vector.shape_cast %172 : vector<8x8xf32> to vector<1x8x8xf32>
    tpu.vector_store %arg10[%c3_119, %c0_120, %c0_121], %175 {strides = array<i32>} : memref<4x8x8xf32, #tpu.memory_space<vmem>>, vector<1x8x8xf32>,
    %c3_122 = arith.constant 3 : index
    %c0_123 = arith.constant 0 : index
    %c0_124 = arith.constant 0 : index
    %176 = vector.load %arg8[%c3_122, %c0_123, %c0_124] : memref<4x8x1xf32, #tpu.memory_space<vmem>>, vector<1x8x1xf32>
    %177 = vector.shape_cast %176 : vector<1x8x1xf32> to vector<8x1xf32>
    %178 = vector.shape_cast %151 : vector<8x1xf32> to vector<1x8x1xf32>
    tpu.vector_store %arg8[%c3_122, %c0_123, %c0_124], %178 {strides = array<i32>} : memref<4x8x1xf32, #tpu.memory_space<vmem>>, vector<1x8x1xf32>,
    %c0_i32_125 = arith.constant 0 : i32
    %179 = arith.cmpi eq, %arg2, %c0_i32_125 : i32
    %180 = arith.extui %179 : i1 to i32
    %c0_i32_126 = arith.constant 0 : i32
    %181 = arith.cmpi ne, %180, %c0_i32_126 : i32
    scf.if %181 {
      %c0_127 = arith.constant 0 : index
      %c0_128 = arith.constant 0 : index
      %c0_129 = arith.constant 0 : index
      %182 = vector.load %arg10[%c0_127, %c0_128, %c0_129] : memref<4x8x8xf32, #tpu.memory_space<vmem>>, vector<1x8x8xf32>
      %183 = vector.shape_cast %182 : vector<1x8x8xf32> to vector<8x8xf32>
      %c0_130 = arith.constant 0 : index
      %c0_131 = arith.constant 0 : index
      %c0_132 = arith.constant 0 : index
      %184 = vector.load %arg9[%c0_130, %c0_131, %c0_132] : memref<4x8x1xf32, #tpu.memory_space<vmem>>, vector<1x8x1xf32>
      %185 = vector.shape_cast %184 : vector<1x8x1xf32> to vector<8x1xf32>
      %186 = tpu.reciprocal %185 {approx = true} : vector<8x1xf32> -> vector<8x1xf32>
      %187 = vector.broadcast %186 : vector<8x1xf32> to vector<8x8xf32>
      %188 = arith.mulf %183, %187 : vector<8x8xf32>
      %c1_133 = arith.constant 1 : index
      %c0_134 = arith.constant 0 : index
      %c0_135 = arith.constant 0 : index
      %189 = vector.load %arg10[%c1_133, %c0_134, %c0_135] : memref<4x8x8xf32, #tpu.memory_space<vmem>>, vector<1x8x8xf32>
      %190 = vector.shape_cast %189 : vector<1x8x8xf32> to vector<8x8xf32>
      %c1_136 = arith.constant 1 : index
      %c0_137 = arith.constant 0 : index
      %c0_138 = arith.constant 0 : index
      %191 = vector.load %arg9[%c1_136, %c0_137, %c0_138] : memref<4x8x1xf32, #tpu.memory_space<vmem>>, vector<1x8x1xf32>
      %192 = vector.shape_cast %191 : vector<1x8x1xf32> to vector<8x1xf32>
      %193 = tpu.reciprocal %192 {approx = true} : vector<8x1xf32> -> vector<8x1xf32>
      %194 = vector.broadcast %193 : vector<8x1xf32> to vector<8x8xf32>
      %195 = arith.mulf %190, %194 : vector<8x8xf32>
      %c2_139 = arith.constant 2 : index
      %c0_140 = arith.constant 0 : index
      %c0_141 = arith.constant 0 : index
      %196 = vector.load %arg10[%c2_139, %c0_140, %c0_141] : memref<4x8x8xf32, #tpu.memory_space<vmem>>, vector<1x8x8xf32>
      %197 = vector.shape_cast %196 : vector<1x8x8xf32> to vector<8x8xf32>
      %c2_142 = arith.constant 2 : index
      %c0_143 = arith.constant 0 : index
      %c0_144 = arith.constant 0 : index
      %198 = vector.load %arg9[%c2_142, %c0_143, %c0_144] : memref<4x8x1xf32, #tpu.memory_space<vmem>>, vector<1x8x1xf32>
      %199 = vector.shape_cast %198 : vector<1x8x1xf32> to vector<8x1xf32>
      %200 = tpu.reciprocal %199 {approx = true} : vector<8x1xf32> -> vector<8x1xf32>
      %201 = vector.broadcast %200 : vector<8x1xf32> to vector<8x8xf32>
      %202 = arith.mulf %197, %201 : vector<8x8xf32>
      %c3_145 = arith.constant 3 : index
      %c0_146 = arith.constant 0 : index
      %c0_147 = arith.constant 0 : index
      %203 = vector.load %arg10[%c3_145, %c0_146, %c0_147] : memref<4x8x8xf32, #tpu.memory_space<vmem>>, vector<1x8x8xf32>
      %204 = vector.shape_cast %203 : vector<1x8x8xf32> to vector<8x8xf32>
      %c3_148 = arith.constant 3 : index
      %c0_149 = arith.constant 0 : index
      %c0_150 = arith.constant 0 : index
      %205 = vector.load %arg9[%c3_148, %c0_149, %c0_150] : memref<4x8x1xf32, #tpu.memory_space<vmem>>, vector<1x8x1xf32>
      %206 = vector.shape_cast %205 : vector<1x8x1xf32> to vector<8x1xf32>
      %207 = tpu.reciprocal %206 {approx = true} : vector<8x1xf32> -> vector<8x1xf32>
      %208 = vector.broadcast %207 : vector<8x1xf32> to vector<8x8xf32>
      %209 = arith.mulf %204, %208 : vector<8x8xf32>
      %210 = tpu.concatenate %188, %195, %202, %209 in 1 : vector<8x8xf32>, vector<8x8xf32>, vector<8x8xf32>, vector<8x8xf32> -> vector<8x32xf32>
      %211 = arith.truncf %210 : vector<8x32xf32> to vector<8x32xbf16>
      %c0_151 = arith.constant 0 : index
      %c0_152 = arith.constant 0 : index
      %c0_153 = arith.constant 0 : index
      %212 = vector.load %arg7[%c0_151, %c0_152, %c0_153] : memref<1x8x32xbf16, #tpu.memory_space<vmem>>, vector<1x8x32xbf16>
      %213 = vector.shape_cast %212 : vector<1x8x32xbf16> to vector<8x32xbf16>
      %214 = vector.shape_cast %211 : vector<8x32xbf16> to vector<1x8x32xbf16>
      tpu.vector_store %arg7[%c0_151, %c0_152, %c0_153], %214 {strides = array<i32>} : memref<1x8x32xbf16, #tpu.memory_space<vmem>>, vector<1x8x32xbf16>,
    } else {
    }
    return
  }
  func.func @transform_0(%arg0: i32, %arg1: i32, %arg2: i32) -> (i32, i32, i32) {
    %c0_i32 = arith.constant 0 : i32
    %c0_i32_0 = arith.constant 0 : i32
    return %arg0, %arg1, %c0_i32 : i32, i32, i32
  }
  func.func @transform_1(%arg0: i32, %arg1: i32, %arg2: i32) -> (i32, i32, i32) {
    %c0_i32 = arith.constant 0 : i32
    %c0_i32_0 = arith.constant 0 : i32
    return %arg0, %arg2, %c0_i32 : i32, i32, i32
  }
  func.func @transform_2(%arg0: i32, %arg1: i32, %arg2: i32) -> (i32, i32, i32) {
    %c0_i32 = arith.constant 0 : i32
    %c0_i32_0 = arith.constant 0 : i32
    return %arg0, %arg2, %c0_i32 : i32, i32, i32
  }
  func.func @transform_3(%arg0: i32, %arg1: i32, %arg2: i32) -> (i32, i32, i32) {
    %c0_i32 = arith.constant 0 : i32
    %c0_i32_0 = arith.constant 0 : i32
    return %arg0, %c0_i32, %arg2 : i32, i32, i32
  }
  func.func @transform_4(%arg0: i32, %arg1: i32, %arg2: i32) -> (i32, i32, i32) {
    %c0_i32 = arith.constant 0 : i32
    %c0_i32_0 = arith.constant 0 : i32
    return %arg0, %arg1, %c0_i32 : i32, i32, i32
  }
}

module attributes {stable_mosaic.version = 11 : i64} {
  func.func @_proj_res_ln_kernel(%arg0: i32, %arg1: memref<16x32xbf16, #tpu.memory_space<vmem>>, %arg2: memref<32x32xbf16, #tpu.memory_space<vmem>>, %arg3: memref<1x32xf32, #tpu.memory_space<vmem>>, %arg4: memref<16x32xf32, #tpu.memory_space<vmem>>, %arg5: memref<1x32xf32, #tpu.memory_space<vmem>>, %arg6: memref<1x32xf32, #tpu.memory_space<vmem>>, %arg7: memref<16x32xf32, #tpu.memory_space<vmem>>) attributes {dimension_semantics = [#tpu.dimension_semantics<parallel>], iteration_bounds = array<i64: 1>, scalar_prefetch = 0 : i64, scratch_operands = 0 : i64, tpu.core_type = #tpu.core_type<tc>, window_params = [{transform_indices = @transform_0, window_bounds = array<i64: 16, 32>}, {pipeline_mode = #tpu.pipeline_mode<synchronous>, transform_indices = @transform_1, window_bounds = array<i64: 32, 32>}, {pipeline_mode = #tpu.pipeline_mode<synchronous>, transform_indices = @transform_2, window_bounds = array<i64: 1, 32>}, {transform_indices = @transform_3, window_bounds = array<i64: 16, 32>}, {pipeline_mode = #tpu.pipeline_mode<synchronous>, transform_indices = @transform_4, window_bounds = array<i64: 1, 32>}, {pipeline_mode = #tpu.pipeline_mode<synchronous>, transform_indices = @transform_5, window_bounds = array<i64: 1, 32>}, {transform_indices = @transform_6, window_bounds = array<i64: 16, 32>}]} {
    %c0 = arith.constant 0 : index
    %c0_0 = arith.constant 0 : index
    %0 = vector.load %arg1[%c0, %c0_0] : memref<16x32xbf16, #tpu.memory_space<vmem>>, vector<16x32xbf16>
    %c0_1 = arith.constant 0 : index
    %c0_2 = arith.constant 0 : index
    %1 = vector.load %arg2[%c0_1, %c0_2] : memref<32x32xbf16, #tpu.memory_space<vmem>>, vector<32x32xbf16>
    %cst = arith.constant dense<0.000000e+00> : vector<16x32xf32>
    %2 = tpu.matmul %0, %1, %cst {dimension_numbers = #tpu.dot_dimension_numbers<[1], [0], [0], [1], [0, 0, 1, 1], [], []>} : vector<16x32xbf16>, vector<32x32xbf16>, vector<16x32xf32> -> vector<16x32xf32>
    %c0_3 = arith.constant 0 : index
    %c0_4 = arith.constant 0 : index
    %3 = vector.load %arg3[%c0_3, %c0_4] : memref<1x32xf32, #tpu.memory_space<vmem>>, vector<1x32xf32>
    %4 = vector.broadcast %3 : vector<1x32xf32> to vector<16x32xf32>
    %5 = arith.addf %2, %4 : vector<16x32xf32>
    %c0_5 = arith.constant 0 : index
    %c0_6 = arith.constant 0 : index
    %6 = vector.load %arg4[%c0_5, %c0_6] : memref<16x32xf32, #tpu.memory_space<vmem>>, vector<16x32xf32>
    %7 = arith.addf %5, %6 : vector<16x32xf32>
    %c0_7 = arith.constant 0 : index
    %c0_8 = arith.constant 0 : index
    %8 = vector.load %arg5[%c0_7, %c0_8] : memref<1x32xf32, #tpu.memory_space<vmem>>, vector<1x32xf32>
    %c0_9 = arith.constant 0 : index
    %c0_10 = arith.constant 0 : index
    %9 = vector.load %arg6[%c0_9, %c0_10] : memref<1x32xf32, #tpu.memory_space<vmem>>, vector<1x32xf32>
    %cst_11 = arith.constant dense<0.000000e+00> : vector<16xf32>
    %10 = vector.multi_reduction <add>, %7, %cst_11 [1] : vector<16x32xf32> to vector<16xf32>
    %11 = vector.shape_cast %10 : vector<16xf32> to vector<16x1xf32>
    %cst_12 = arith.constant 3.200000e+01 : f32
    %12 = vector.broadcast %cst_12 : f32 to vector<16x1xf32>
    %13 = arith.divf %11, %12 : vector<16x1xf32>
    %14 = vector.broadcast %13 : vector<16x1xf32> to vector<16x32xf32>
    %15 = arith.subf %7, %14 : vector<16x32xf32>
    %16 = arith.mulf %15, %15 : vector<16x32xf32>
    %cst_13 = arith.constant dense<0.000000e+00> : vector<16xf32>
    %17 = vector.multi_reduction <add>, %16, %cst_13 [1] : vector<16x32xf32> to vector<16xf32>
    %18 = vector.shape_cast %17 : vector<16xf32> to vector<16x1xf32>
    %cst_14 = arith.constant 3.200000e+01 : f32
    %19 = vector.broadcast %cst_14 : f32 to vector<16x1xf32>
    %20 = arith.divf %18, %19 : vector<16x1xf32>
    %21 = vector.broadcast %13 : vector<16x1xf32> to vector<16x32xf32>
    %22 = arith.subf %7, %21 : vector<16x32xf32>
    %cst_15 = arith.constant 9.99999974E-6 : f32
    %23 = vector.broadcast %cst_15 : f32 to vector<16x1xf32>
    %24 = arith.addf %20, %23 : vector<16x1xf32>
    %25 = math.rsqrt %24 : vector<16x1xf32>
    %26 = vector.broadcast %25 : vector<16x1xf32> to vector<16x32xf32>
    %27 = arith.mulf %22, %26 : vector<16x32xf32>
    %28 = vector.broadcast %8 : vector<1x32xf32> to vector<16x32xf32>
    %29 = arith.mulf %27, %28 : vector<16x32xf32>
    %30 = vector.broadcast %9 : vector<1x32xf32> to vector<16x32xf32>
    %31 = arith.addf %29, %30 : vector<16x32xf32>
    %c0_16 = arith.constant 0 : index
    %c0_17 = arith.constant 0 : index
    %32 = vector.load %arg7[%c0_16, %c0_17] : memref<16x32xf32, #tpu.memory_space<vmem>>, vector<16x32xf32>
    tpu.vector_store %arg7[%c0_16, %c0_17], %31 {strides = array<i32>} : memref<16x32xf32, #tpu.memory_space<vmem>>, vector<16x32xf32>,
    return
  }
  func.func @transform_0(%arg0: i32) -> (i32, i32) {
    %c0_i32 = arith.constant 0 : i32
    %c0_i32_0 = arith.constant 0 : i32
    return %arg0, %c0_i32 : i32, i32
  }
  func.func @transform_1(%arg0: i32) -> (i32, i32) {
    %c0_i32 = arith.constant 0 : i32
    %c0_i32_0 = arith.constant 0 : i32
    %c0_i32_1 = arith.constant 0 : i32
    return %c0_i32, %c0_i32_0 : i32, i32
  }
  func.func @transform_2(%arg0: i32) -> (i32, i32) {
    %c0_i32 = arith.constant 0 : i32
    %c0_i32_0 = arith.constant 0 : i32
    %c0_i32_1 = arith.constant 0 : i32
    return %c0_i32, %c0_i32_0 : i32, i32
  }
  func.func @transform_3(%arg0: i32) -> (i32, i32) {
    %c0_i32 = arith.constant 0 : i32
    %c0_i32_0 = arith.constant 0 : i32
    return %arg0, %c0_i32 : i32, i32
  }
  func.func @transform_4(%arg0: i32) -> (i32, i32) {
    %c0_i32 = arith.constant 0 : i32
    %c0_i32_0 = arith.constant 0 : i32
    %c0_i32_1 = arith.constant 0 : i32
    return %c0_i32, %c0_i32_0 : i32, i32
  }
  func.func @transform_5(%arg0: i32) -> (i32, i32) {
    %c0_i32 = arith.constant 0 : i32
    %c0_i32_0 = arith.constant 0 : i32
    %c0_i32_1 = arith.constant 0 : i32
    return %c0_i32, %c0_i32_0 : i32, i32
  }
  func.func @transform_6(%arg0: i32) -> (i32, i32) {
    %c0_i32 = arith.constant 0 : i32
    %c0_i32_0 = arith.constant 0 : i32
    return %arg0, %c0_i32 : i32, i32
  }
}

module attributes {stable_mosaic.version = 11 : i64} {
  func.func @_ffn_kernel(%arg0: i32, %arg1: i32, %arg2: memref<16x32xf32, #tpu.memory_space<vmem>>, %arg3: memref<32x64xbf16, #tpu.memory_space<vmem>>, %arg4: memref<1x64xf32, #tpu.memory_space<vmem>>, %arg5: memref<64x32xbf16, #tpu.memory_space<vmem>>, %arg6: memref<1x32xf32, #tpu.memory_space<vmem>>, %arg7: memref<1x32xf32, #tpu.memory_space<vmem>>, %arg8: memref<1x32xf32, #tpu.memory_space<vmem>>, %arg9: memref<16x32xf32, #tpu.memory_space<vmem>>, %arg10: memref<16x32xf32, #tpu.memory_space<vmem>>) attributes {dimension_semantics = [#tpu.dimension_semantics<parallel>, #tpu.dimension_semantics<arbitrary>], iteration_bounds = array<i64: 1, 1>, scalar_prefetch = 0 : i64, scratch_operands = 1 : i64, tpu.core_type = #tpu.core_type<tc>, window_params = [{transform_indices = @transform_0, window_bounds = array<i64: 16, 32>}, {transform_indices = @transform_1, window_bounds = array<i64: 32, 64>}, {transform_indices = @transform_2, window_bounds = array<i64: 1, 64>}, {transform_indices = @transform_3, window_bounds = array<i64: 64, 32>}, {pipeline_mode = #tpu.pipeline_mode<synchronous>, transform_indices = @transform_4, window_bounds = array<i64: 1, 32>}, {pipeline_mode = #tpu.pipeline_mode<synchronous>, transform_indices = @transform_5, window_bounds = array<i64: 1, 32>}, {pipeline_mode = #tpu.pipeline_mode<synchronous>, transform_indices = @transform_6, window_bounds = array<i64: 1, 32>}, {transform_indices = @transform_7, window_bounds = array<i64: 16, 32>}]} {
    %c0_i32 = arith.constant 0 : i32
    %0 = arith.cmpi eq, %arg1, %c0_i32 : i32
    %1 = arith.extui %0 : i1 to i32
    %c0_i32_0 = arith.constant 0 : i32
    %2 = arith.cmpi ne, %1, %c0_i32_0 : i32
    scf.if %2 {
      %cst_16 = arith.constant 0.000000e+00 : f32
      %21 = vector.broadcast %cst_16 : f32 to vector<16x32xf32>
      %c0_17 = arith.constant 0 : index
      %c0_18 = arith.constant 0 : index
      %22 = vector.load %arg10[%c0_17, %c0_18] : memref<16x32xf32, #tpu.memory_space<vmem>>, vector<16x32xf32>
      tpu.vector_store %arg10[%c0_17, %c0_18], %21 {strides = array<i32>} : memref<16x32xf32, #tpu.memory_space<vmem>>, vector<16x32xf32>,
    } else {
    }
    %c0 = arith.constant 0 : index
    %c0_1 = arith.constant 0 : index
    %3 = vector.load %arg2[%c0, %c0_1] : memref<16x32xf32, #tpu.memory_space<vmem>>, vector<16x32xf32>
    %4 = arith.truncf %3 : vector<16x32xf32> to vector<16x32xbf16>
    %c0_2 = arith.constant 0 : index
    %c0_3 = arith.constant 0 : index
    %5 = vector.load %arg3[%c0_2, %c0_3] : memref<32x64xbf16, #tpu.memory_space<vmem>>, vector<32x64xbf16>
    %cst = arith.constant dense<0.000000e+00> : vector<16x64xf32>
    %6 = tpu.matmul %4, %5, %cst {dimension_numbers = #tpu.dot_dimension_numbers<[1], [0], [0], [1], [0, 0, 1, 1], [], []>} : vector<16x32xbf16>, vector<32x64xbf16>, vector<16x64xf32> -> vector<16x64xf32>
    %c0_4 = arith.constant 0 : index
    %c0_5 = arith.constant 0 : index
    %7 = vector.load %arg4[%c0_4, %c0_5] : memref<1x64xf32, #tpu.memory_space<vmem>>, vector<1x64xf32>
    %8 = vector.broadcast %7 : vector<1x64xf32> to vector<16x64xf32>
    %9 = arith.addf %6, %8 : vector<16x64xf32>
    %cst_6 = arith.constant 0.000000e+00 : f32
    %10 = vector.broadcast %cst_6 : f32 to vector<16x64xf32>
    %11 = arith.maximumf %9, %10 : vector<16x64xf32>
    %12 = arith.truncf %11 : vector<16x64xf32> to vector<16x64xbf16>
    %c0_7 = arith.constant 0 : index
    %c0_8 = arith.constant 0 : index
    %13 = vector.load %arg10[%c0_7, %c0_8] : memref<16x32xf32, #tpu.memory_space<vmem>>, vector<16x32xf32>
    %c0_9 = arith.constant 0 : index
    %c0_10 = arith.constant 0 : index
    %14 = vector.load %arg5[%c0_9, %c0_10] : memref<64x32xbf16, #tpu.memory_space<vmem>>, vector<64x32xbf16>
    %cst_11 = arith.constant dense<0.000000e+00> : vector<16x32xf32>
    %15 = tpu.matmul %12, %14, %cst_11 {dimension_numbers = #tpu.dot_dimension_numbers<[1], [0], [0], [1], [0, 0, 1, 1], [], []>} : vector<16x64xbf16>, vector<64x32xbf16>, vector<16x32xf32> -> vector<16x32xf32>
    %16 = arith.addf %13, %15 : vector<16x32xf32>
    %c0_12 = arith.constant 0 : index
    %c0_13 = arith.constant 0 : index
    %17 = vector.load %arg10[%c0_12, %c0_13] : memref<16x32xf32, #tpu.memory_space<vmem>>, vector<16x32xf32>
    tpu.vector_store %arg10[%c0_12, %c0_13], %16 {strides = array<i32>} : memref<16x32xf32, #tpu.memory_space<vmem>>, vector<16x32xf32>,
    %c0_i32_14 = arith.constant 0 : i32
    %18 = arith.cmpi eq, %arg1, %c0_i32_14 : i32
    %19 = arith.extui %18 : i1 to i32
    %c0_i32_15 = arith.constant 0 : i32
    %20 = arith.cmpi ne, %19, %c0_i32_15 : i32
    scf.if %20 {
      %c0_16 = arith.constant 0 : index
      %c0_17 = arith.constant 0 : index
      %21 = vector.load %arg10[%c0_16, %c0_17] : memref<16x32xf32, #tpu.memory_space<vmem>>, vector<16x32xf32>
      %c0_18 = arith.constant 0 : index
      %c0_19 = arith.constant 0 : index
      %22 = vector.load %arg6[%c0_18, %c0_19] : memref<1x32xf32, #tpu.memory_space<vmem>>, vector<1x32xf32>
      %23 = vector.broadcast %22 : vector<1x32xf32> to vector<16x32xf32>
      %24 = arith.addf %21, %23 : vector<16x32xf32>
      %c0_20 = arith.constant 0 : index
      %c0_21 = arith.constant 0 : index
      %25 = vector.load %arg2[%c0_20, %c0_21] : memref<16x32xf32, #tpu.memory_space<vmem>>, vector<16x32xf32>
      %26 = arith.addf %24, %25 : vector<16x32xf32>
      %c0_22 = arith.constant 0 : index
      %c0_23 = arith.constant 0 : index
      %27 = vector.load %arg7[%c0_22, %c0_23] : memref<1x32xf32, #tpu.memory_space<vmem>>, vector<1x32xf32>
      %c0_24 = arith.constant 0 : index
      %c0_25 = arith.constant 0 : index
      %28 = vector.load %arg8[%c0_24, %c0_25] : memref<1x32xf32, #tpu.memory_space<vmem>>, vector<1x32xf32>
      %cst_26 = arith.constant dense<0.000000e+00> : vector<16xf32>
      %29 = vector.multi_reduction <add>, %26, %cst_26 [1] : vector<16x32xf32> to vector<16xf32>
      %30 = vector.shape_cast %29 : vector<16xf32> to vector<16x1xf32>
      %cst_27 = arith.constant 3.200000e+01 : f32
      %31 = vector.broadcast %cst_27 : f32 to vector<16x1xf32>
      %32 = arith.divf %30, %31 : vector<16x1xf32>
      %33 = vector.broadcast %32 : vector<16x1xf32> to vector<16x32xf32>
      %34 = arith.subf %26, %33 : vector<16x32xf32>
      %35 = arith.mulf %34, %34 : vector<16x32xf32>
      %cst_28 = arith.constant dense<0.000000e+00> : vector<16xf32>
      %36 = vector.multi_reduction <add>, %35, %cst_28 [1] : vector<16x32xf32> to vector<16xf32>
      %37 = vector.shape_cast %36 : vector<16xf32> to vector<16x1xf32>
      %cst_29 = arith.constant 3.200000e+01 : f32
      %38 = vector.broadcast %cst_29 : f32 to vector<16x1xf32>
      %39 = arith.divf %37, %38 : vector<16x1xf32>
      %40 = vector.broadcast %32 : vector<16x1xf32> to vector<16x32xf32>
      %41 = arith.subf %26, %40 : vector<16x32xf32>
      %cst_30 = arith.constant 9.99999974E-6 : f32
      %42 = vector.broadcast %cst_30 : f32 to vector<16x1xf32>
      %43 = arith.addf %39, %42 : vector<16x1xf32>
      %44 = math.rsqrt %43 : vector<16x1xf32>
      %45 = vector.broadcast %44 : vector<16x1xf32> to vector<16x32xf32>
      %46 = arith.mulf %41, %45 : vector<16x32xf32>
      %47 = vector.broadcast %27 : vector<1x32xf32> to vector<16x32xf32>
      %48 = arith.mulf %46, %47 : vector<16x32xf32>
      %49 = vector.broadcast %28 : vector<1x32xf32> to vector<16x32xf32>
      %50 = arith.addf %48, %49 : vector<16x32xf32>
      %c0_31 = arith.constant 0 : index
      %c0_32 = arith.constant 0 : index
      %51 = vector.load %arg9[%c0_31, %c0_32] : memref<16x32xf32, #tpu.memory_space<vmem>>, vector<16x32xf32>
      tpu.vector_store %arg9[%c0_31, %c0_32], %50 {strides = array<i32>} : memref<16x32xf32, #tpu.memory_space<vmem>>, vector<16x32xf32>,
    } else {
    }
    return
  }
  func.func @transform_0(%arg0: i32, %arg1: i32) -> (i32, i32) {
    %c0_i32 = arith.constant 0 : i32
    %c0_i32_0 = arith.constant 0 : i32
    return %arg0, %c0_i32 : i32, i32
  }
  func.func @transform_1(%arg0: i32, %arg1: i32) -> (i32, i32) {
    %c0_i32 = arith.constant 0 : i32
    %c0_i32_0 = arith.constant 0 : i32
    return %c0_i32, %arg1 : i32, i32
  }
  func.func @transform_2(%arg0: i32, %arg1: i32) -> (i32, i32) {
    %c0_i32 = arith.constant 0 : i32
    %c0_i32_0 = arith.constant 0 : i32
    return %c0_i32, %arg1 : i32, i32
  }
  func.func @transform_3(%arg0: i32, %arg1: i32) -> (i32, i32) {
    %c0_i32 = arith.constant 0 : i32
    %c0_i32_0 = arith.constant 0 : i32
    return %arg1, %c0_i32 : i32, i32
  }
  func.func @transform_4(%arg0: i32, %arg1: i32) -> (i32, i32) {
    %c0_i32 = arith.constant 0 : i32
    %c0_i32_0 = arith.constant 0 : i32
    %c0_i32_1 = arith.constant 0 : i32
    return %c0_i32, %c0_i32_0 : i32, i32
  }
  func.func @transform_5(%arg0: i32, %arg1: i32) -> (i32, i32) {
    %c0_i32 = arith.constant 0 : i32
    %c0_i32_0 = arith.constant 0 : i32
    %c0_i32_1 = arith.constant 0 : i32
    return %c0_i32, %c0_i32_0 : i32, i32
  }
  func.func @transform_6(%arg0: i32, %arg1: i32) -> (i32, i32) {
    %c0_i32 = arith.constant 0 : i32
    %c0_i32_0 = arith.constant 0 : i32
    %c0_i32_1 = arith.constant 0 : i32
    return %c0_i32, %c0_i32_0 : i32, i32
  }
  func.func @transform_7(%arg0: i32, %arg1: i32) -> (i32, i32) {
    %c0_i32 = arith.constant 0 : i32
    %c0_i32_0 = arith.constant 0 : i32
    return %arg0, %c0_i32 : i32, i32
  }
}

module attributes {stable_mosaic.version = 11 : i64} {
  func.func @_sub_lse_kernel(%arg0: i32, %arg1: i32, %arg2: memref<16x64xf32, #tpu.memory_space<vmem>>, %arg3: memref<16x1xf32, #tpu.memory_space<vmem>>, %arg4: memref<16x64xf32, #tpu.memory_space<vmem>>) attributes {dimension_semantics = [#tpu.dimension_semantics<parallel>, #tpu.dimension_semantics<parallel>], iteration_bounds = array<i64: 1, 1>, scalar_prefetch = 0 : i64, scratch_operands = 0 : i64, tpu.core_type = #tpu.core_type<tc>, window_params = [{transform_indices = @transform_0, window_bounds = array<i64: 16, 64>}, {transform_indices = @transform_1, window_bounds = array<i64: 16, 1>}, {transform_indices = @transform_2, window_bounds = array<i64: 16, 64>}]} {
    %c0 = arith.constant 0 : index
    %c0_0 = arith.constant 0 : index
    %0 = vector.load %arg2[%c0, %c0_0] : memref<16x64xf32, #tpu.memory_space<vmem>>, vector<16x64xf32>
    %c0_1 = arith.constant 0 : index
    %c0_2 = arith.constant 0 : index
    %1 = vector.load %arg3[%c0_1, %c0_2] : memref<16x1xf32, #tpu.memory_space<vmem>>, vector<16x1xf32>
    %2 = vector.broadcast %1 : vector<16x1xf32> to vector<16x64xf32>
    %3 = arith.subf %0, %2 : vector<16x64xf32>
    %c0_3 = arith.constant 0 : index
    %c0_4 = arith.constant 0 : index
    %4 = vector.load %arg4[%c0_3, %c0_4] : memref<16x64xf32, #tpu.memory_space<vmem>>, vector<16x64xf32>
    tpu.vector_store %arg4[%c0_3, %c0_4], %3 {strides = array<i32>} : memref<16x64xf32, #tpu.memory_space<vmem>>, vector<16x64xf32>,
    return
  }
  func.func @transform_0(%arg0: i32, %arg1: i32) -> (i32, i32) {
    %c0_i32 = arith.constant 0 : i32
    return %arg0, %arg1 : i32, i32
  }
  func.func @transform_1(%arg0: i32, %arg1: i32) -> (i32, i32) {
    %c0_i32 = arith.constant 0 : i32
    %c0_i32_0 = arith.constant 0 : i32
    return %arg0, %c0_i32 : i32, i32
  }
  func.func @transform_2(%arg0: i32, %arg1: i32) -> (i32, i32) {
    %c0_i32 = arith.constant 0 : i32
    return %arg0, %arg1 : i32, i32
  }
}

module attributes {stable_mosaic.version = 11 : i64} {
  func.func @_tied_logits_kernel(%arg0: i32, %arg1: i32, %arg2: memref<16x32xbf16, #tpu.memory_space<vmem>>, %arg3: memref<64x32xbf16, #tpu.memory_space<vmem>>, %arg4: memref<16x64xf32, #tpu.memory_space<vmem>>, %arg5: memref<16x1xf32, #tpu.memory_space<vmem>>, %arg6: memref<16x1xf32, #tpu.memory_space<vmem>>, %arg7: memref<16x1xf32, #tpu.memory_space<vmem>>) attributes {dimension_semantics = [#tpu.dimension_semantics<parallel>, #tpu.dimension_semantics<arbitrary>], iteration_bounds = array<i64: 1, 1>, scalar_prefetch = 0 : i64, scratch_operands = 2 : i64, tpu.core_type = #tpu.core_type<tc>, window_params = [{transform_indices = @transform_0, window_bounds = array<i64: 16, 32>}, {transform_indices = @transform_1, window_bounds = array<i64: 64, 32>}, {transform_indices = @transform_2, window_bounds = array<i64: 16, 64>}, {transform_indices = @transform_3, window_bounds = array<i64: 16, 1>}]} {
    %c0_i32 = arith.constant 0 : i32
    %0 = arith.cmpi eq, %arg1, %c0_i32 : i32
    %1 = arith.extui %0 : i1 to i32
    %c0_i32_0 = arith.constant 0 : i32
    %2 = arith.cmpi ne, %1, %c0_i32_0 : i32
    scf.if %2 {
      %cst_18 = arith.constant 0xFF800000 : f32
      %26 = vector.broadcast %cst_18 : f32 to vector<16x1xf32>
      %c0_19 = arith.constant 0 : index
      %c0_20 = arith.constant 0 : index
      %27 = vector.load %arg6[%c0_19, %c0_20] : memref<16x1xf32, #tpu.memory_space<vmem>>, vector<16x1xf32>
      tpu.vector_store %arg6[%c0_19, %c0_20], %26 {strides = array<i32>} : memref<16x1xf32, #tpu.memory_space<vmem>>, vector<16x1xf32>,
      %cst_21 = arith.constant 0.000000e+00 : f32
      %28 = vector.broadcast %cst_21 : f32 to vector<16x1xf32>
      %c0_22 = arith.constant 0 : index
      %c0_23 = arith.constant 0 : index
      %29 = vector.load %arg7[%c0_22, %c0_23] : memref<16x1xf32, #tpu.memory_space<vmem>>, vector<16x1xf32>
      tpu.vector_store %arg7[%c0_22, %c0_23], %28 {strides = array<i32>} : memref<16x1xf32, #tpu.memory_space<vmem>>, vector<16x1xf32>,
    } else {
    }
    %c0 = arith.constant 0 : index
    %c0_1 = arith.constant 0 : index
    %3 = vector.load %arg2[%c0, %c0_1] : memref<16x32xbf16, #tpu.memory_space<vmem>>, vector<16x32xbf16>
    %c0_2 = arith.constant 0 : index
    %c0_3 = arith.constant 0 : index
    %4 = vector.load %arg3[%c0_2, %c0_3] : memref<64x32xbf16, #tpu.memory_space<vmem>>, vector<64x32xbf16>
    %cst = arith.constant dense<0.000000e+00> : vector<16x64xf32>
    %5 = tpu.matmul %3, %4, %cst {dimension_numbers = #tpu.dot_dimension_numbers<[1], [1], [0], [0], [0, 0, 1, 0], [], []>} : vector<16x32xbf16>, vector<64x32xbf16>, vector<16x64xf32> -> vector<16x64xf32>
    %c0_4 = arith.constant 0 : index
    %c0_5 = arith.constant 0 : index
    %6 = vector.load %arg4[%c0_4, %c0_5] : memref<16x64xf32, #tpu.memory_space<vmem>>, vector<16x64xf32>
    tpu.vector_store %arg4[%c0_4, %c0_5], %5 {strides = array<i32>} : memref<16x64xf32, #tpu.memory_space<vmem>>, vector<16x64xf32>,
    %c0_6 = arith.constant 0 : index
    %c0_7 = arith.constant 0 : index
    %7 = vector.load %arg6[%c0_6, %c0_7] : memref<16x1xf32, #tpu.memory_space<vmem>>, vector<16x1xf32>
    %cst_8 = arith.constant dense<0xFF800000> : vector<16xf32>
    %8 = vector.multi_reduction <maximumf>, %5, %cst_8 [1] : vector<16x64xf32> to vector<16xf32>
    %9 = vector.shape_cast %8 : vector<16xf32> to vector<16x1xf32>
    %10 = arith.maximumf %7, %9 : vector<16x1xf32>
    %11 = arith.subf %7, %10 : vector<16x1xf32>
    %12 = math.exp %11 : vector<16x1xf32>
    %c0_9 = arith.constant 0 : index
    %c0_10 = arith.constant 0 : index
    %13 = vector.load %arg7[%c0_9, %c0_10] : memref<16x1xf32, #tpu.memory_space<vmem>>, vector<16x1xf32>
    %14 = arith.mulf %12, %13 : vector<16x1xf32>
    %15 = vector.broadcast %10 : vector<16x1xf32> to vector<16x64xf32>
    %16 = arith.subf %5, %15 : vector<16x64xf32>
    %17 = math.exp %16 : vector<16x64xf32>
    %cst_11 = arith.constant dense<0.000000e+00> : vector<16xf32>
    %18 = vector.multi_reduction <add>, %17, %cst_11 [1] : vector<16x64xf32> to vector<16xf32>
    %19 = vector.shape_cast %18 : vector<16xf32> to vector<16x1xf32>
    %20 = arith.addf %14, %19 : vector<16x1xf32>
    %c0_12 = arith.constant 0 : index
    %c0_13 = arith.constant 0 : index
    %21 = vector.load %arg7[%c0_12, %c0_13] : memref<16x1xf32, #tpu.memory_space<vmem>>, vector<16x1xf32>
    tpu.vector_store %arg7[%c0_12, %c0_13], %20 {strides = array<i32>} : memref<16x1xf32, #tpu.memory_space<vmem>>, vector<16x1xf32>,
    %c0_14 = arith.constant 0 : index
    %c0_15 = arith.constant 0 : index
    %22 = vector.load %arg6[%c0_14, %c0_15] : memref<16x1xf32, #tpu.memory_space<vmem>>, vector<16x1xf32>
    tpu.vector_store %arg6[%c0_14, %c0_15], %10 {strides = array<i32>} : memref<16x1xf32, #tpu.memory_space<vmem>>, vector<16x1xf32>,
    %c0_i32_16 = arith.constant 0 : i32
    %23 = arith.cmpi eq, %arg1, %c0_i32_16 : i32
    %24 = arith.extui %23 : i1 to i32
    %c0_i32_17 = arith.constant 0 : i32
    %25 = arith.cmpi ne, %24, %c0_i32_17 : i32
    scf.if %25 {
      %c0_18 = arith.constant 0 : index
      %c0_19 = arith.constant 0 : index
      %26 = vector.load %arg6[%c0_18, %c0_19] : memref<16x1xf32, #tpu.memory_space<vmem>>, vector<16x1xf32>
      %c0_20 = arith.constant 0 : index
      %c0_21 = arith.constant 0 : index
      %27 = vector.load %arg7[%c0_20, %c0_21] : memref<16x1xf32, #tpu.memory_space<vmem>>, vector<16x1xf32>
      %28 = math.log %27 : vector<16x1xf32>
      %29 = arith.addf %26, %28 : vector<16x1xf32>
      %c0_22 = arith.constant 0 : index
      %c0_23 = arith.constant 0 : index
      %30 = vector.load %arg5[%c0_22, %c0_23] : memref<16x1xf32, #tpu.memory_space<vmem>>, vector<16x1xf32>
      tpu.vector_store %arg5[%c0_22, %c0_23], %29 {strides = array<i32>} : memref<16x1xf32, #tpu.memory_space<vmem>>, vector<16x1xf32>,
    } else {
    }
    return
  }
  func.func @transform_0(%arg0: i32, %arg1: i32) -> (i32, i32) {
    %c0_i32 = arith.constant 0 : i32
    %c0_i32_0 = arith.constant 0 : i32
    return %arg0, %c0_i32 : i32, i32
  }
  func.func @transform_1(%arg0: i32, %arg1: i32) -> (i32, i32) {
    %c0_i32 = arith.constant 0 : i32
    %c0_i32_0 = arith.constant 0 : i32
    return %arg1, %c0_i32 : i32, i32
  }
  func.func @transform_2(%arg0: i32, %arg1: i32) -> (i32, i32) {
    %c0_i32 = arith.constant 0 : i32
    return %arg0, %arg1 : i32, i32
  }
  func.func @transform_3(%arg0: i32, %arg1: i32) -> (i32, i32) {
    %c0_i32 = arith.constant 0 : i32
    %c0_i32_0 = arith.constant 0 : i32
    return %arg0, %c0_i32 : i32, i32
  }
}

</mosaic_0001>

<llo_original>
// kernel: decoder_stack_forward.16
$region0: #{decoder_stack_forward.16}
  #allocation0 [shape = 'u32[]', space=smem, size = 0x4, offset = 0x4, fixed_abs, tag = 'smem constant byte address 0x4 - core index']
  #allocation1 [shape = 'u32[144,128]{1,0:T(1,128)}', space=vmem, size = 0x12000, scoped, tag = 'internal scratch']
  %s0 = inlined_call_operand.vmem [shape: f32[16,32], index: 0, kind: input, shape index: {}]
  %s1 = inlined_call_operand.vmem [shape: bf16[32,96], index: 1, kind: input, shape index: {}]
  %s2 = inlined_call_operand.vmem [shape: f32[1,96], index: 2, kind: input, shape index: {}]
  %s3 = inlined_call_operand.vmem [shape: bf16[16,32], index: 3, kind: output, shape index: {0}]
  %s4 = inlined_call_operand.vmem [shape: bf16[16,32], index: 4, kind: output, shape index: {1}]
  %s5 = inlined_call_operand.vmem [shape: bf16[16,32], index: 5, kind: output, shape index: {2}]
  %6 = xla_tuple %s3, %s4, %s5
  %s7 = sld [smem:[#allocation0]]
  $region38: #{decoder_stack_forward.16} parent=0
    _
  %s9 = ssub.s32 1, %s7
  %s10 = scalar_select 0, %s9, %s7
  // Predicated region
  $region2: #{decoder_stack_forward.16} parent=0 // pred_check
    _
  $region3: #{decoder_stack_forward.16} parent=0 // pred_check_branch
    %12 = sbr.rel (0) target = $region5
  $region4: #{decoder_stack_forward.16} parent=0 // pred_region
    _
  $region5: #{decoder_stack_forward.16} parent=0 // pred_fallthru
    _
  // Predicated region
  $region6: #{decoder_stack_forward.16} parent=0 // pred_check
    _
  $region7: #{decoder_stack_forward.16} parent=0 // pred_check_branch
    %14 = sbr.rel (0) target = $region9
  $region8: #{decoder_stack_forward.16} parent=0 // pred_region
    _
  $region9: #{decoder_stack_forward.16} parent=0 // pred_fallthru
    _
  // Predicated region
  $region10: #{decoder_stack_forward.16} parent=0 // pred_check
    _
  $region11: #{decoder_stack_forward.16} parent=0 // pred_check_branch
    %16 = sbr.rel (0) target = $region13
  $region12: #{decoder_stack_forward.16} parent=0 // pred_region
    _
  $region13: #{decoder_stack_forward.16} parent=0 // pred_fallthru
    _
  %v18 = vld [vmem:[%s0] sm:$0xff]
  %v19 = vld [vmem:[%s0 + $0x8] sm:$0xff]
  %v20 = vpack.c.bf16 %v19, %v18
  %v21 = vld [vmem:[%s1] sm:$0xf]
  %v22 = vld [vmem:[%s1 + $0x4] sm:$0xf]
  %v23 = vld [vmem:[%s1 + $0x8] sm:$0xf]
  %v24 = vld [vmem:[%s1 + $0xc] sm:$0xf]
  %v25 = vld [vmem:[%s2] sm:$0x1]
  %v27 = vlaneseq
  %v28 = vshrl.u32 %v27, 7
  %v29 = vsub.s32 0, %v28
  %v30 = vrot.slane %v25, %v29
  %v36 = vunpack.c.l.b16 %v21
  %v37 = vunpack.c.l.b16 %v22
  %v38 = vunpack.c.l.b16 %v23
  %v39 = vunpack.c.l.b16 %v24
  %v40 = vpack.c.b16 %v37, %v36
  %v41 = vpack.c.b16 %v39, %v38
  %vm44 = vcmask 261120
  %v46 = vsel %vm44, %v20, 0
  %48 = vmatprep.subr.bf16.mxu0 0
  %49 = vmatpush1.bf16.msra.mxu0 %v40
  %50 = vmatprep.subr.bf16.mxu0 0
  %51 = vmatpush1.bf16.msra.mxu0 %v41
  %52 = vmatprep.subr.bf16.mxu0 0
  %53 = vmatpush1.bf16.msra.mxu0 0
  %54 = vmatprep.subr.bf16.mxu0 0
  %55 = vmatpush1.bf16.msra.mxu0 0
  %56 = vmatprep.subr.bf16.mxu0 0
  %57 = vmatpush1.bf16.msra.mxu0 0
  %58 = vmatprep.subr.bf16.mxu0 0
  %59 = vmatpush1.bf16.msra.mxu0 0
  %60 = vmatprep.subr.bf16.mxu0 0
  %61 = vmatpush1.bf16.msra.mxu0 0
  %62 = vmatprep.subr.bf16.mxu0 0
  %63 = vmatpush1.bf16.msra.mxu0 0
  %64 = vmatprep.subr.bf16.mxu0 0
  %65 = vmatpush1.bf16.msra.mxu0 0
  %66 = vmatprep.subr.bf16.mxu0 0
  %67 = vmatpush1.bf16.msra.mxu0 0
  %68 = vmatprep.subr.bf16.mxu0 0
  %69 = vmatpush1.bf16.msra.mxu0 0
  %70 = vmatprep.subr.bf16.mxu0 0
  %71 = vmatpush1.bf16.msra.mxu0 0
  %72 = vmatprep.subr.bf16.mxu0 0
  %73 = vmatpush1.bf16.msra.mxu0 0
  %74 = vmatprep.subr.bf16.mxu0 0
  %75 = vmatpush1.bf16.msra.mxu0 0
  %76 = vmatprep.subr.bf16.mxu0 0
  %77 = vmatpush1.bf16.msra.mxu0 0
  %78 = vmatprep.subr.bf16.mxu0 0
  %79 = vmatpush1.bf16.msra.mxu0 0
  %80 = vmatprep.mubr.bf16.mxu0 0
  %81 = vmatmul.mubr.bf16.gmra.mrb[0].mxu0 %v46
  %v82 = vpop.f32.mrb[0].mxu0
  %v83 = vadd.f32 %v30, %v82
  %v84 = vpop.f32.mrb[0].mxu0
  %v85 = vpop.f32.mrb[0].mxu0
  %v86 = vadd.f32 %v30, %v85
  %v87 = vpop.f32.mrb[0].mxu0
  %88 = vdwg.mxu0
  %v89 = vpack.c.bf16 %v86, %v83
  %v91 = vunpack.c.l.b16 %v89
  %v92 = vunpack.c.h.b16 %v89
  %v93 = vpack.c.b16 %v91, %v91
  %v94 = vpack.c.b16 %v92, %v92
  %vm97 = vcmask 257024
  %98 = vst.msk [vmem:[%s3] sm:$0xf] %vm97, %v93
  %99 = vst.msk [vmem:[%s3 + $0x4] sm:$0xf] %vm97, %v94
  %100 = vrot.lane.b32.xlu0 %v93, 96
  %v101 = vpop.permute.xlu0 %100
  %102 = vrot.lane.b32.xlu0 %v94, 96
  %v103 = vpop.permute.xlu0 %102
  %106 = vst.msk [vmem:[%s4] sm:$0xf] %vm97, %v101
  %107 = vst.msk [vmem:[%s4 + $0x4] sm:$0xf] %vm97, %v103
  %108 = vrot.lane.b32.xlu0 %v93, 64
  %v109 = vpop.permute.xlu0 %108
  %110 = vrot.lane.b32.xlu0 %v94, 64
  %v111 = vpop.permute.xlu0 %110
  %114 = vst.msk [vmem:[%s5] sm:$0xf] %vm97, %v109
  %115 = vst.msk [vmem:[%s5 + $0x4] sm:$0xf] %vm97, %v111
  // Predicated region
  $region14: #{decoder_stack_forward.16} parent=0 // pred_check
    _
  $region15: #{decoder_stack_forward.16} parent=0 // pred_check_branch
    %117 = sbr.rel (0) target = $region17
  $region16: #{decoder_stack_forward.16} parent=0 // pred_region
    _
  $region17: #{decoder_stack_forward.16} parent=0 // pred_fallthru
    _
  // Predicated region
  $region18: #{decoder_stack_forward.16} parent=0 // pred_check
    _
  $region19: #{decoder_stack_forward.16} parent=0 // pred_check_branch
    %119 = sbr.rel (0) target = $region21
  $region20: #{decoder_stack_forward.16} parent=0 // pred_region
    _
  $region21: #{decoder_stack_forward.16} parent=0 // pred_fallthru
    _
  // Predicated region
  $region22: #{decoder_stack_forward.16} parent=0 // pred_check
    _
  $region23: #{decoder_stack_forward.16} parent=0 // pred_check_branch
    %121 = sbr.rel (0) target = $region25
  $region24: #{decoder_stack_forward.16} parent=0 // pred_region
    _
  $region25: #{decoder_stack_forward.16} parent=0 // pred_fallthru
    _
  // Predicated region
  $region26: #{decoder_stack_forward.16} parent=0 // pred_check
    _
  $region27: #{decoder_stack_forward.16} parent=0 // pred_check_branch
    %123 = sbr.rel (0) target = $region29
  $region28: #{decoder_stack_forward.16} parent=0 // pred_region
    _
  $region29: #{decoder_stack_forward.16} parent=0 // pred_fallthru
    _
  // Predicated region
  $region30: #{decoder_stack_forward.16} parent=0 // pred_check
    _
  $region31: #{decoder_stack_forward.16} parent=0 // pred_check_branch
    %125 = sbr.rel (0) target = $region33
  $region32: #{decoder_stack_forward.16} parent=0 // pred_region
    _
  $region33: #{decoder_stack_forward.16} parent=0 // pred_fallthru
    _
  // Predicated region
  $region34: #{decoder_stack_forward.16} parent=0 // pred_check
    _
  $region35: #{decoder_stack_forward.16} parent=0 // pred_check_branch
    %127 = sbr.rel (0) target = $region37
  $region36: #{decoder_stack_forward.16} parent=0 // pred_region
    _
  $region37: #{decoder_stack_forward.16} parent=0 // pred_fallthru
    _

// kernel: decoder_stack_forward.15
$region0: #{decoder_stack_forward.15}
  #allocation0 [shape = 'u32[]', space=smem, size = 0x4, offset = 0x4, fixed_abs, tag = 'smem constant byte address 0x4 - core index']
  #allocation1 [shape = 'u32[144,128]{1,0:T(1,128)}', space=vmem, size = 0x12000, scoped, tag = 'internal scratch']
  %s0 = inlined_call_operand.vmem [shape: f32[16,32], index: 0, kind: input, shape index: {}]
  %s1 = inlined_call_operand.vmem [shape: bf16[32,64], index: 1, kind: input, shape index: {}]
  %s2 = inlined_call_operand.vmem [shape: f32[1,64], index: 2, kind: input, shape index: {}]
  %s3 = inlined_call_operand.vmem [shape: bf16[16,32], index: 3, kind: output, shape index: {0}]
  %s4 = inlined_call_operand.vmem [shape: bf16[16,32], index: 4, kind: output, shape index: {1}]
  %5 = xla_tuple %s3, %s4
  %s6 = sld [smem:[#allocation0]]
  $region30: #{decoder_stack_forward.15} parent=0
    _
  %s8 = ssub.s32 1, %s6
  %s9 = scalar_select 0, %s8, %s6
  // Predicated region
  $region2: #{decoder_stack_forward.15} parent=0 // pred_check
    _
  $region3: #{decoder_stack_forward.15} parent=0 // pred_check_branch
    %11 = sbr.rel (0) target = $region5
  $region4: #{decoder_stack_forward.15} parent=0 // pred_region
    _
  $region5: #{decoder_stack_forward.15} parent=0 // pred_fallthru
    _
  // Predicated region
  $region6: #{decoder_stack_forward.15} parent=0 // pred_check
    _
  $region7: #{decoder_stack_forward.15} parent=0 // pred_check_branch
    %13 = sbr.rel (0) target = $region9
  $region8: #{decoder_stack_forward.15} parent=0 // pred_region
    _
  $region9: #{decoder_stack_forward.15} parent=0 // pred_fallthru
    _
  // Predicated region
  $region10: #{decoder_stack_forward.15} parent=0 // pred_check
    _
  $region11: #{decoder_stack_forward.15} parent=0 // pred_check_branch
    %15 = sbr.rel (0) target = $region13
  $region12: #{decoder_stack_forward.15} parent=0 // pred_region
    _
  $region13: #{decoder_stack_forward.15} parent=0 // pred_fallthru
    _
  %v17 = vld [vmem:[%s0] sm:$0xff]
  %v18 = vld [vmem:[%s0 + $0x8] sm:$0xff]
  %v19 = vpack.c.bf16 %v18, %v17
  %v20 = vld [vmem:[%s1] sm:$0xf]
  %v21 = vld [vmem:[%s1 + $0x4] sm:$0xf]
  %v22 = vld [vmem:[%s1 + $0x8] sm:$0xf]
  %v23 = vld [vmem:[%s1 + $0xc] sm:$0xf]
  %v24 = vld [vmem:[%s2] sm:$0x1]
  %v26 = vlaneseq
  %v27 = vshrl.u32 %v26, 7
  %v28 = vsub.s32 0, %v27
  %v29 = vrot.slane %v24, %v28
  %v35 = vunpack.c.l.b16 %v20
  %v36 = vunpack.c.l.b16 %v21
  %v37 = vunpack.c.l.b16 %v22
  %v38 = vunpack.c.l.b16 %v23
  %v39 = vpack.c.b16 %v36, %v35
  %v40 = vpack.c.b16 %v38, %v37
  %vm43 = vcmask 261120
  %v45 = vsel %vm43, %v19, 0
  %47 = vmatprep.subr.bf16.mxu0 0
  %48 = vmatpush1.bf16.msra.mxu0 %v39
  %49 = vmatprep.subr.bf16.mxu0 0
  %50 = vmatpush1.bf16.msra.mxu0 %v40
  %51 = vmatprep.subr.bf16.mxu0 0
  %52 = vmatpush1.bf16.msra.mxu0 0
  %53 = vmatprep.subr.bf16.mxu0 0
  %54 = vmatpush1.bf16.msra.mxu0 0
  %55 = vmatprep.subr.bf16.mxu0 0
  %56 = vmatpush1.bf16.msra.mxu0 0
  %57 = vmatprep.subr.bf16.mxu0 0
  %58 = vmatpush1.bf16.msra.mxu0 0
  %59 = vmatprep.subr.bf16.mxu0 0
  %60 = vmatpush1.bf16.msra.mxu0 0
  %61 = vmatprep.subr.bf16.mxu0 0
  %62 = vmatpush1.bf16.msra.mxu0 0
  %63 = vmatprep.subr.bf16.mxu0 0
  %64 = vmatpush1.bf16.msra.mxu0 0
  %65 = vmatprep.subr.bf16.mxu0 0
  %66 = vmatpush1.bf16.msra.mxu0 0
  %67 = vmatprep.subr.bf16.mxu0 0
  %68 = vmatpush1.bf16.msra.mxu0 0
  %69 = vmatprep.subr.bf16.mxu0 0
  %70 = vmatpush1.bf16.msra.mxu0 0
  %71 = vmatprep.subr.bf16.mxu0 0
  %72 = vmatpush1.bf16.msra.mxu0 0
  %73 = vmatprep.subr.bf16.mxu0 0
  %74 = vmatpush1.bf16.msra.mxu0 0
  %75 = vmatprep.subr.bf16.mxu0 0
  %76 = vmatpush1.bf16.msra.mxu0 0
  %77 = vmatprep.subr.bf16.mxu0 0
  %78 = vmatpush1.bf16.msra.mxu0 0
  %79 = vmatprep.mubr.bf16.mxu0 0
  %80 = vmatmul.mubr.bf16.gmra.mrb[0].mxu0 %v45
  %v81 = vpop.f32.mrb[0].mxu0
  %v82 = vadd.f32 %v29, %v81
  %v83 = vpop.f32.mrb[0].mxu0
  %v84 = vpop.f32.mrb[0].mxu0
  %v85 = vadd.f32 %v29, %v84
  %v86 = vpop.f32.mrb[0].mxu0
  %87 = vdwg.mxu0
  %v88 = vpack.c.bf16 %v85, %v82
  %v90 = vunpack.c.l.b16 %v88
  %v91 = vunpack.c.h.b16 %v88
  %v92 = vpack.c.b16 %v90, %v90
  %v93 = vpack.c.b16 %v91, %v91
  %vm96 = vcmask 257024
  %97 = vst.msk [vmem:[%s3] sm:$0xf] %vm96, %v92
  %98 = vst.msk [vmem:[%s3 + $0x4] sm:$0xf] %vm96, %v93
  %99 = vrot.lane.b32.xlu0 %v92, 96
  %v100 = vpop.permute.xlu0 %99
  %101 = vrot.lane.b32.xlu0 %v93, 96
  %v102 = vpop.permute.xlu0 %101
  %105 = vst.msk [vmem:[%s4] sm:$0xf] %vm96, %v100
  %106 = vst.msk [vmem:[%s4 + $0x4] sm:$0xf] %vm96, %v102
  // Predicated region
  $region14: #{decoder_stack_forward.15} parent=0 // pred_check
    _
  $region15: #{decoder_stack_forward.15} parent=0 // pred_check_branch
    %108 = sbr.rel (0) target = $region17
  $region16: #{decoder_stack_forward.15} parent=0 // pred_region
    _
  $region17: #{decoder_stack_forward.15} parent=0 // pred_fallthru
    _
  // Predicated region
  $region18: #{decoder_stack_forward.15} parent=0 // pred_check
    _
  $region19: #{decoder_stack_forward.15} parent=0 // pred_check_branch
    %110 = sbr.rel (0) target = $region21
  $region20: #{decoder_stack_forward.15} parent=0 // pred_region
    _
  $region21: #{decoder_stack_forward.15} parent=0 // pred_fallthru
    _
  // Predicated region
  $region22: #{decoder_stack_forward.15} parent=0 // pred_check
    _
  $region23: #{decoder_stack_forward.15} parent=0 // pred_check_branch
    %112 = sbr.rel (0) target = $region25
  $region24: #{decoder_stack_forward.15} parent=0 // pred_region
    _
  $region25: #{decoder_stack_forward.15} parent=0 // pred_fallthru
    _
  // Predicated region
  $region26: #{decoder_stack_forward.15} parent=0 // pred_check
    _
  $region27: #{decoder_stack_forward.15} parent=0 // pred_check_branch
    %114 = sbr.rel (0) target = $region29
  $region28: #{decoder_stack_forward.15} parent=0 // pred_region
    _
  $region29: #{decoder_stack_forward.15} parent=0 // pred_fallthru
    _

// kernel: decoder_stack_forward.18
$region0: #{decoder_stack_forward.18}
  #allocation0 [shape = 'u32[]', space=smem, size = 0x4, offset = 0x4, fixed_abs, tag = 'smem constant byte address 0x4 - core index']
  #allocation1 [shape = 'u32[144,128]{1,0:T(1,128)}', space=vmem, size = 0x12000, scoped, tag = 'internal scratch']
  %s0 = inlined_call_operand.vmem [shape: bf16[16,32], index: 0, kind: input, shape index: {}]
  %s1 = inlined_call_operand.vmem [shape: bf16[32,32], index: 1, kind: input, shape index: {}]
  %s2 = inlined_call_operand.vmem [shape: f32[1,32], index: 2, kind: input, shape index: {}]
  %s3 = inlined_call_operand.vmem [shape: f32[16,32], index: 3, kind: input, shape index: {}]
  %s4 = inlined_call_operand.vmem [shape: f32[1,32], index: 4, kind: input, shape index: {}]
  %s5 = inlined_call_operand.vmem [shape: f32[1,32], index: 5, kind: input, shape index: {}]
  %s6 = inlined_call_operand.vmem [shape: bf16[32,32], index: 6, kind: input, shape index: {}]
  %s7 = inlined_call_operand.vmem [shape: f32[1,32], index: 7, kind: input, shape index: {}]
  %s8 = inlined_call_operand.vmem [shape: f32[16,32], index: 8, kind: output, shape index: {0}]
  %s9 = inlined_call_operand.vmem [shape: bf16[16,32], index: 9, kind: output, shape index: {1}]
  %10 = xla_tuple %s8, %s9
  %s11 = sld [smem:[#allocation0]]
  $region50: #{decoder_stack_forward.18} parent=0
    _
  %s13 = ssub.s32 1, %s11
  %s14 = scalar_select 0, %s13, %s11
  // Predicated region
  $region2: #{decoder_stack_forward.18} parent=0 // pred_check
    _
  $region3: #{decoder_stack_forward.18} parent=0 // pred_check_branch
    %16 = sbr.rel (0) target = $region5
  $region4: #{decoder_stack_forward.18} parent=0 // pred_region
    _
  $region5: #{decoder_stack_forward.18} parent=0 // pred_fallthru
    _
  // Predicated region
  $region6: #{decoder_stack_forward.18} parent=0 // pred_check
    _
  $region7: #{decoder_stack_forward.18} parent=0 // pred_check_branch
    %18 = sbr.rel (0) target = $region9
  $region8: #{decoder_stack_forward.18} parent=0 // pred_region
    _
  $region9: #{decoder_stack_forward.18} parent=0 // pred_fallthru
    _
  // Predicated region
  $region10: #{decoder_stack_forward.18} parent=0 // pred_check
    _
  $region11: #{decoder_stack_forward.18} parent=0 // pred_check_branch
    %20 = sbr.rel (0) target = $region13
  $region12: #{decoder_stack_forward.18} parent=0 // pred_region
    _
  $region13: #{decoder_stack_forward.18} parent=0 // pred_fallthru
    _
  // Predicated region
  $region14: #{decoder_stack_forward.18} parent=0 // pred_check
    _
  $region15: #{decoder_stack_forward.18} parent=0 // pred_check_branch
    %22 = sbr.rel (0) target = $region17
  $region16: #{decoder_stack_forward.18} parent=0 // pred_region
    _
  $region17: #{decoder_stack_forward.18} parent=0 // pred_fallthru
    _
  // Predicated region
  $region18: #{decoder_stack_forward.18} parent=0 // pred_check
    _
  $region19: #{decoder_stack_forward.18} parent=0 // pred_check_branch
    %24 = sbr.rel (0) target = $region21
  $region20: #{decoder_stack_forward.18} parent=0 // pred_region
    _
  $region21: #{decoder_stack_forward.18} parent=0 // pred_fallthru
    _
  // Predicated region
  $region22: #{decoder_stack_forward.18} parent=0 // pred_check
    _
  $region23: #{decoder_stack_forward.18} parent=0 // pred_check_branch
    %26 = sbr.rel (0) target = $region25
  $region24: #{decoder_stack_forward.18} parent=0 // pred_region
    _
  $region25: #{decoder_stack_forward.18} parent=0 // pred_fallthru
    _
  // Predicated region
  $region26: #{decoder_stack_forward.18} parent=0 // pred_check
    _
  $region27: #{decoder_stack_forward.18} parent=0 // pred_check_branch
    %28 = sbr.rel (0) target = $region29
  $region28: #{decoder_stack_forward.18} parent=0 // pred_region
    _
  $region29: #{decoder_stack_forward.18} parent=0 // pred_fallthru
    _
  // Predicated region
  $region30: #{decoder_stack_forward.18} parent=0 // pred_check
    _
  $region31: #{decoder_stack_forward.18} parent=0 // pred_check_branch
    %30 = sbr.rel (0) target = $region33
  $region32: #{decoder_stack_forward.18} parent=0 // pred_region
    _
  $region33: #{decoder_stack_forward.18} parent=0 // pred_fallthru
    _
  %v32 = vld [vmem:[%s0] sm:$0xf]
  %v33 = vld [vmem:[%s0 + $0x4] sm:$0xf]
  %v34 = vld [vmem:[%s1] sm:$0xf]
  %v35 = vld [vmem:[%s1 + $0x4] sm:$0xf]
  %v36 = vld [vmem:[%s1 + $0x8] sm:$0xf]
  %v37 = vld [vmem:[%s1 + $0xc] sm:$0xf]
  %v38 = vld [vmem:[%s2] sm:$0x1]
  %v40 = vlaneseq
  %v41 = vshrl.u32 %v40, 7
  %v42 = vsub.s32 0, %v41
  %v43 = vrot.slane %v38, %v42
  %v47 = vunpack.c.l.b16 %v32
  %v48 = vunpack.c.l.b16 %v33
  %v49 = vpack.c.b16 %v48, %v47
  %v54 = vunpack.c.l.b16 %v34
  %v55 = vunpack.c.l.b16 %v35
  %v56 = vunpack.c.l.b16 %v36
  %v57 = vunpack.c.l.b16 %v37
  %v58 = vpack.c.b16 %v55, %v54
  %v59 = vpack.c.b16 %v57, %v56
  %vm62 = vcmask 261120
  %v64 = vsel %vm62, %v49, 0
  %66 = vmatprep.subr.bf16.mxu0 0
  %67 = vmatpush1.bf16.msra.mxu0 %v58
  %68 = vmatprep.subr.bf16.mxu0 0
  %69 = vmatpush1.bf16.msra.mxu0 %v59
  %70 = vmatprep.subr.bf16.mxu0 0
  %71 = vmatpush1.bf16.msra.mxu0 0
  %72 = vmatprep.subr.bf16.mxu0 0
  %73 = vmatpush1.bf16.msra.mxu0 0
  %74 = vmatprep.subr.bf16.mxu0 0
  %75 = vmatpush1.bf16.msra.mxu0 0
  %76 = vmatprep.subr.bf16.mxu0 0
  %77 = vmatpush1.bf16.msra.mxu0 0
  %78 = vmatprep.subr.bf16.mxu0 0
  %79 = vmatpush1.bf16.msra.mxu0 0
  %80 = vmatprep.subr.bf16.mxu0 0
  %81 = vmatpush1.bf16.msra.mxu0 0
  %82 = vmatprep.subr.bf16.mxu0 0
  %83 = vmatpush1.bf16.msra.mxu0 0
  %84 = vmatprep.subr.bf16.mxu0 0
  %85 = vmatpush1.bf16.msra.mxu0 0
  %86 = vmatprep.subr.bf16.mxu0 0
  %87 = vmatpush1.bf16.msra.mxu0 0
  %88 = vmatprep.subr.bf16.mxu0 0
  %89 = vmatpush1.bf16.msra.mxu0 0
  %90 = vmatprep.subr.bf16.mxu0 0
  %91 = vmatpush1.bf16.msra.mxu0 0
  %92 = vmatprep.subr.bf16.mxu0 0
  %93 = vmatpush1.bf16.msra.mxu0 0
  %94 = vmatprep.subr.bf16.mxu0 0
  %95 = vmatpush1.bf16.msra.mxu0 0
  %96 = vmatprep.subr.bf16.mxu0 0
  %97 = vmatpush1.bf16.msra.mxu0 0
  %98 = vmatprep.mubr.bf16.mxu0 0
  %99 = vmatmul.mubr.bf16.gmra.mrb[0].mxu0 %v64
  %v100 = vpop.f32.mrb[0].mxu0
  %v101 = vadd.f32 %v43, %v100
  %v102 = vpop.f32.mrb[0].mxu0
  %v103 = vpop.f32.mrb[0].mxu0
  %v104 = vadd.f32 %v43, %v103
  %v105 = vpop.f32.mrb[0].mxu0
  %106 = vdwg.mxu0
  %v107 = vld [vmem:[%s3] sm:$0xff]
  %v108 = vld [vmem:[%s3 + $0x8] sm:$0xff]
  %v109 = vadd.f32 %v101, %v107
  %v110 = vadd.f32 %v104, %v108
  %v111 = vld [vmem:[%s4] sm:$0x1]
  %v112 = vld [vmem:[%s5] sm:$0x1]
  %v113 = vsel %vm62, %v109, 0.0
  %114 = vadd.xlane.f32.xlu0 %v113
  %v115 = vpop.xlane.xlu0 %114
  %v116 = vsel %vm62, %v110, 0.0
  %117 = vadd.xlane.f32.xlu0 %v116
  %v118 = vpop.xlane.xlu0 %117
  %v119 = vrcp.pop 32.0
  %v120 = vmul.f32 %v115, %v119
  %v121 = vmul.f32 %v118, %v119
  %v122 = vsub.f32 %v109, %v120
  %v123 = vsub.f32 %v110, %v121
  %v124 = vmul.f32 %v122, %v122
  %v125 = vmul.f32 %v123, %v123
  %v126 = vsel %vm62, %v124, 0.0
  %127 = vadd.xlane.f32.xlu0 %v126
  %v128 = vpop.xlane.xlu0 %127
  %v129 = vsel %vm62, %v125, 0.0
  %130 = vadd.xlane.f32.xlu0 %v129
  %v131 = vpop.xlane.xlu0 %130
  %v132 = vmul.f32 %v128, %v119
  %v133 = vmul.f32 %v131, %v119
  %v134 = vadd.f32 %v132, 1e-05
  %v135 = vadd.f32 %v133, 1e-05
  %v136 = vrsqrt.pop %v134
  %v137 = vrsqrt.pop %v135
  %v138 = vmul.f32 %v122, %v136
  %v139 = vmul.f32 %v123, %v137
  %v141 = vlaneseq
  %v142 = vshrl.u32 %v141, 7
  %v143 = vsub.s32 0, %v142
  %v144 = vrot.slane %v111, %v143
  %v146 = vmul.f32 %v138, %v144
  %v147 = vmul.f32 %v139, %v144
  %v149 = vlaneseq
  %v150 = vshrl.u32 %v149, 7
  %v151 = vsub.s32 0, %v150
  %v152 = vrot.slane %v112, %v151
  %v154 = vadd.f32 %v146, %v152
  %v155 = vadd.f32 %v147, %v152
  %156 = vst.msk [vmem:[%s8] sm:$0xff] %vm62, %v154
  %157 = vst.msk [vmem:[%s8 + $0x8] sm:$0xff] %vm62, %v155
  %v158 = vpack.c.bf16 %v155, %v154
  %v159 = vld [vmem:[%s6] sm:$0xf]
  %v160 = vld [vmem:[%s6 + $0x4] sm:$0xf]
  %v161 = vld [vmem:[%s6 + $0x8] sm:$0xf]
  %v162 = vld [vmem:[%s6 + $0xc] sm:$0xf]
  %v163 = vld [vmem:[%s7] sm:$0x1]
  %v165 = vlaneseq
  %v166 = vshrl.u32 %v165, 7
  %v167 = vsub.s32 0, %v166
  %v168 = vrot.slane %v163, %v167
  %v174 = vunpack.c.l.b16 %v159
  %v175 = vunpack.c.l.b16 %v160
  %v176 = vunpack.c.l.b16 %v161
  %v177 = vunpack.c.l.b16 %v162
  %v178 = vpack.c.b16 %v175, %v174
  %v179 = vpack.c.b16 %v177, %v176
  %v183 = vsel %vm62, %v158, 0
  %185 = vmatprep.subr.bf16.mxu0 0
  %186 = vmatpush1.bf16.msra.mxu0 %v178
  %187 = vmatprep.subr.bf16.mxu0 0
  %188 = vmatpush1.bf16.msra.mxu0 %v179
  %189 = vmatprep.subr.bf16.mxu0 0
  %190 = vmatpush1.bf16.msra.mxu0 0
  %191 = vmatprep.subr.bf16.mxu0 0
  %192 = vmatpush1.bf16.msra.mxu0 0
  %193 = vmatprep.subr.bf16.mxu0 0
  %194 = vmatpush1.bf16.msra.mxu0 0
  %195 = vmatprep.subr.bf16.mxu0 0
  %196 = vmatpush1.bf16.msra.mxu0 0
  %197 = vmatprep.subr.bf16.mxu0 0
  %198 = vmatpush1.bf16.msra.mxu0 0
  %199 = vmatprep.subr.bf16.mxu0 0
  %200 = vmatpush1.bf16.msra.mxu0 0
  %201 = vmatprep.subr.bf16.mxu0 0
  %202 = vmatpush1.bf16.msra.mxu0 0
  %203 = vmatprep.subr.bf16.mxu0 0
  %204 = vmatpush1.bf16.msra.mxu0 0
  %205 = vmatprep.subr.bf16.mxu0 0
  %206 = vmatpush1.bf16.msra.mxu0 0
  %207 = vmatprep.subr.bf16.mxu0 0
  %208 = vmatpush1.bf16.msra.mxu0 0
  %209 = vmatprep.subr.bf16.mxu0 0
  %210 = vmatpush1.bf16.msra.mxu0 0
  %211 = vmatprep.subr.bf16.mxu0 0
  %212 = vmatpush1.bf16.msra.mxu0 0
  %213 = vmatprep.subr.bf16.mxu0 0
  %214 = vmatpush1.bf16.msra.mxu0 0
  %215 = vmatprep.subr.bf16.mxu0 0
  %216 = vmatpush1.bf16.msra.mxu0 0
  %217 = vmatprep.mubr.bf16.mxu0 0
  %218 = vmatmul.mubr.bf16.gmra.mrb[0].mxu0 %v183
  %v219 = vpop.f32.mrb[0].mxu0
  %v220 = vadd.f32 %v168, %v219
  %v221 = vpop.f32.mrb[0].mxu0
  %v222 = vpop.f32.mrb[0].mxu0
  %v223 = vadd.f32 %v168, %v222
  %v224 = vpop.f32.mrb[0].mxu0
  %225 = vdwg.mxu0
  %v226 = vpack.c.bf16 %v223, %v220
  %v228 = vunpack.c.l.b16 %v226
  %v229 = vunpack.c.h.b16 %v226
  %v230 = vpack.c.b16 %v228, %v228
  %v231 = vpack.c.b16 %v229, %v229
  %vm234 = vcmask 257024
  %235 = vst.msk [vmem:[%s9] sm:$0xf] %vm234, %v230
  %236 = vst.msk [vmem:[%s9 + $0x4] sm:$0xf] %vm234, %v231
  // Predicated region
  $region34: #{decoder_stack_forward.18} parent=0 // pred_check
    _
  $region35: #{decoder_stack_forward.18} parent=0 // pred_check_branch
    %238 = sbr.rel (0) target = $region37
  $region36: #{decoder_stack_forward.18} parent=0 // pred_region
    _
  $region37: #{decoder_stack_forward.18} parent=0 // pred_fallthru
    _
  // Predicated region
  $region38: #{decoder_stack_forward.18} parent=0 // pred_check
    _
  $region39: #{decoder_stack_forward.18} parent=0 // pred_check_branch
    %240 = sbr.rel (0) target = $region41
  $region40: #{decoder_stack_forward.18} parent=0 // pred_region
    _
  $region41: #{decoder_stack_forward.18} parent=0 // pred_fallthru
    _
  // Predicated region
  $region42: #{decoder_stack_forward.18} parent=0 // pred_check
    _
  $region43: #{decoder_stack_forward.18} parent=0 // pred_check_branch
    %242 = sbr.rel (0) target = $region45
  $region44: #{decoder_stack_forward.18} parent=0 // pred_region
    _
  $region45: #{decoder_stack_forward.18} parent=0 // pred_fallthru
    _
  // Predicated region
  $region46: #{decoder_stack_forward.18} parent=0 // pred_check
    _
  $region47: #{decoder_stack_forward.18} parent=0 // pred_check_branch
    %244 = sbr.rel (0) target = $region49
  $region48: #{decoder_stack_forward.18} parent=0 // pred_region
    _
  $region49: #{decoder_stack_forward.18} parent=0 // pred_fallthru
    _

// kernel: decoder_stack_forward.17
$region0: #{decoder_stack_forward.17}
  #allocation0 [shape = 'u32[]', space=smem, size = 0x4, offset = 0x4, fixed_abs, tag = 'smem constant byte address 0x4 - core index']
  #allocation1 [shape = 'u32[144,128]{1,0:T(1,128)}', space=vmem, size = 0x12000, scoped, tag = 'internal scratch']
  #allocation2 [shape = 'f32[4,8,1]{2,1,0:T(8,128)}', space=vmem, size = 0x4000, scoped, tag = 'scratch operand']
  #allocation3 [shape = 'f32[4,8,1]{2,1,0:T(8,128)}', space=vmem, size = 0x4000, scoped, tag = 'scratch operand']
  #allocation4 [shape = 'f32[4,8,8]{2,1,0:T(8,128)}', space=vmem, size = 0x4000, scoped, tag = 'scratch operand']
  %s0 = inlined_call_operand.vmem [shape: bf16[2,8,32], index: 0, kind: input, shape index: {}]
  %s1 = inlined_call_operand.vmem [shape: bf16[2,8,32], index: 1, kind: input, shape index: {}]
  %s2 = inlined_call_operand.vmem [shape: bf16[2,8,32], index: 2, kind: input, shape index: {}]
  %s3 = inlined_call_operand.vmem [shape: f32[2,1,8], index: 3, kind: input, shape index: {}]
  %s4 = inlined_call_operand.vmem [shape: bf16[2,8,32], index: 4, kind: output, shape index: {}]
  %s5 = sld [smem:[#allocation0]]
  $region61: #{decoder_stack_forward.17} parent=0
    _
  %s7 = ssub.s32 1, %s5
  %s8 = scalar_select 0, %s7, %s5
  loop: start=0, step=1, limit=4
  $region2: #{decoder_stack_forward.17} parent=0 // loop_pre_header
    _
  $region3: #{decoder_stack_forward.17} parent=0 // loop_header
    %s10 = sphi 0, %s14
    %p11 = scmp.ge.s32.totalorder %s10, 4
    %s17 = sphi 0, %s36
    %s18 = sphi 0, %s32
    %s19 = sphi 0, %s28
    %s20 = sphi 0, %s17
    %s21 = sphi 0, %s18
    %s22 = sphi 0, %s19
    %s23 = sphi 0, %s20
    %s24 = sphi 0, %s21
    %s25 = sphi 0, %s22
    %s41 = sphi 0, %s43
    %s44 = sphi 0, %s41
    %s45 = sphi 0, %s44
    %s61 = sphi 0, %s45
    %s69 = sphi 0, %s71
    %s72 = sphi 0, %s69
    %s73 = sphi 0, %s72
    %s89 = sphi 0, %s73
    %s97 = sphi 0, %s99
    %s100 = sphi 0, %s97
    %s101 = sphi 0, %s100
    %s117 = sphi 0, %s101
    %s125 = sphi 0, %s127
    %s128 = sphi 0, %s125
    %s129 = sphi 0, %s128
    %s145 = sphi 0, %s129
    %s153 = sphi 0, %s155
    %s156 = sphi 0, %s153
    %s157 = sphi 0, %s156
    %s173 = sphi 0, %s157
  $region4: #{decoder_stack_forward.17} parent=0 // loop_header_branch
    %13 = sbr.rel (%p11) target = $region8
  $region5: #{decoder_stack_forward.17} parent=0 // loop_body
    %s15 = ssub.s32 %s10, 1
    %s16 = ssub.s32 %s10, 2
    %s26 = sadd.s32 1, %s19
    %p27 = scmp.ge.s32.totalorder %s26, 1
    %s28 = scalar_select %p27, 0, %s26
    %s29 = sadd.s32 1, %s18
    %s30 = scalar_select %p27, %s29, %s18
    %p31 = scmp.ge.s32.totalorder %s30, 1
    %s32 = scalar_select %p31, 0, %s30
    %s33 = sadd.s32 1, %s17
    %s34 = scalar_select %p31, %s33, %s17
    %p35 = scmp.ge.s32.totalorder %s34, 2
    %s36 = scalar_select %p35, 0, %s34
    %s37 = ssub.s32 %s17, %s36
    %s38 = ssub.s32 %s18, %s32
    %s39 = sor.u32 %s37, %s38
    %p40 = scmp.eq.s32.totalorder %s39, 0
    %s42 = sadd.s32 %s41, 1
    %s43 = scalar_select %p40, %s41, %s42
    %p46 = pneg %p40
    %p47 = scmp.eq.s32.totalorder %s10, 1
    %p48 = por %p46, %p47
    %p49 = scmp.ne.s32.totalorder %s41, %s44
    %p50 = scmp.eq.s32.totalorder %s10, 0
    %p51 = por %p49, %p50
    %p52 = scmp.ne.s32.totalorder %s41, %s44
    %p53 = scmp.eq.s32.totalorder %s15, 1
    %p54 = por %p52, %p53
    %p55 = scmp.ne.s32.totalorder %s44, %s45
    %p56 = scmp.eq.s32.totalorder %s15, 0
    %p57 = por %p55, %p56
    %p58 = scmp.ne.s32.totalorder %s44, %s45
    %p59 = scmp.eq.s32.totalorder %s16, 1
    %p60 = por %p58, %p59
    %p62 = scmp.ne.s32.totalorder %s45, %s61
    %p63 = scmp.eq.s32.totalorder %s16, 0
    %p64 = por %p62, %p63
    %s65 = ssub.s32 %s17, %s36
    %s66 = ssub.s32 %s19, %s28
    %s67 = sor.u32 %s65, %s66
    %p68 = scmp.eq.s32.totalorder %s67, 0
    %s70 = sadd.s32 %s69, 1
    %s71 = scalar_select %p68, %s69, %s70
    %p74 = pneg %p68
    %p75 = scmp.eq.s32.totalorder %s10, 1
    %p76 = por %p74, %p75
    %p77 = scmp.ne.s32.totalorder %s69, %s72
    %p78 = scmp.eq.s32.totalorder %s10, 0
    %p79 = por %p77, %p78
    %p80 = scmp.ne.s32.totalorder %s69, %s72
    %p81 = scmp.eq.s32.totalorder %s15, 1
    %p82 = por %p80, %p81
    %p83 = scmp.ne.s32.totalorder %s72, %s73
    %p84 = scmp.eq.s32.totalorder %s15, 0
    %p85 = por %p83, %p84
    %p86 = scmp.ne.s32.totalorder %s72, %s73
    %p87 = scmp.eq.s32.totalorder %s16, 1
    %p88 = por %p86, %p87
    %p90 = scmp.ne.s32.totalorder %s73, %s89
    %p91 = scmp.eq.s32.totalorder %s16, 0
    %p92 = por %p90, %p91
    %s93 = ssub.s32 %s17, %s36
    %s94 = ssub.s32 %s19, %s28
    %s95 = sor.u32 %s93, %s94
    %p96 = scmp.eq.s32.totalorder %s95, 0
    %s98 = sadd.s32 %s97, 1
    %s99 = scalar_select %p96, %s97, %s98
    %p102 = pneg %p96
    %p103 = scmp.eq.s32.totalorder %s10, 1
    %p104 = por %p102, %p103
    %p105 = scmp.ne.s32.totalorder %s97, %s100
    %p106 = scmp.eq.s32.totalorder %s10, 0
    %p107 = por %p105, %p106
    %p108 = scmp.ne.s32.totalorder %s97, %s100
    %p109 = scmp.eq.s32.totalorder %s15, 1
    %p110 = por %p108, %p109
    %p111 = scmp.ne.s32.totalorder %s100, %s101
    %p112 = scmp.eq.s32.totalorder %s15, 0
    %p113 = por %p111, %p112
    %p114 = scmp.ne.s32.totalorder %s100, %s101
    %p115 = scmp.eq.s32.totalorder %s16, 1
    %p116 = por %p114, %p115
    %p118 = scmp.ne.s32.totalorder %s101, %s117
    %p119 = scmp.eq.s32.totalorder %s16, 0
    %p120 = por %p118, %p119
    %s121 = ssub.s32 %s17, %s36
    %s122 = ssub.s32 %s19, %s28
    %s123 = sor.u32 %s121, %s122
    %p124 = scmp.eq.s32.totalorder %s123, 0
    %s126 = sadd.s32 %s125, 1
    %s127 = scalar_select %p124, %s125, %s126
    %p130 = pneg %p124
    %p131 = scmp.eq.s32.totalorder %s10, 1
    %p132 = por %p130, %p131
    %p133 = scmp.ne.s32.totalorder %s125, %s128
    %p134 = scmp.eq.s32.totalorder %s10, 0
    %p135 = por %p133, %p134
    %p136 = scmp.ne.s32.totalorder %s125, %s128
    %p137 = scmp.eq.s32.totalorder %s15, 1
    %p138 = por %p136, %p137
    %p139 = scmp.ne.s32.totalorder %s128, %s129
    %p140 = scmp.eq.s32.totalorder %s15, 0
    %p141 = por %p139, %p140
    %p142 = scmp.ne.s32.totalorder %s128, %s129
    %p143 = scmp.eq.s32.totalorder %s16, 1
    %p144 = por %p142, %p143
    %p146 = scmp.ne.s32.totalorder %s129, %s145
    %p147 = scmp.eq.s32.totalorder %s16, 0
    %p148 = por %p146, %p147
    %s149 = ssub.s32 %s17, %s36
    %s150 = ssub.s32 %s18, %s32
    %s151 = sor.u32 %s149, %s150
    %p152 = scmp.eq.s32.totalorder %s151, 0
    %s154 = sadd.s32 %s153, 1
    %s155 = scalar_select %p152, %s153, %s154
    %p158 = pneg %p152
    %p159 = scmp.eq.s32.totalorder %s10, 1
    %p160 = por %p158, %p159
    %p161 = scmp.ne.s32.totalorder %s153, %s156
    %p162 = scmp.eq.s32.totalorder %s10, 0
    %p163 = por %p161, %p162
    %p164 = scmp.ne.s32.totalorder %s153, %s156
    %p165 = scmp.eq.s32.totalorder %s15, 1
    %p166 = por %p164, %p165
    %p167 = scmp.ne.s32.totalorder %s156, %s157
    %p168 = scmp.eq.s32.totalorder %s15, 0
    %p169 = por %p167, %p168
    %p170 = scmp.ne.s32.totalorder %s156, %s157
    %p171 = scmp.eq.s32.totalorder %s16, 1
    %p172 = por %p170, %p171
    %p174 = scmp.ne.s32.totalorder %s157, %s173
    %p175 = scmp.eq.s32.totalorder %s16, 0
    %p176 = por %p174, %p175
    %p177 = scmp.le.s32.totalorder 1, %s10
    %p178 = scmp.lt.s32.totalorder %s10, 3
    %p179 = pnand %p177, %p178
    %p180 = pneg %p179
    // Predicated region
    $region9: #{decoder_stack_forward.17} parent=5 // pred_check
      _
    $region10: #{decoder_stack_forward.17} parent=5 // pred_check_branch
      %182 = sbr.rel (%p179) target = $region12
    $region11: #{decoder_stack_forward.17} parent=5 // pred_region
      %s183 = ssub.s32 %s10, 1
    $region12: #{decoder_stack_forward.17} parent=5 // pred_fallthru
      _
    %p184 = scmp.lt.s32.totalorder %s10, 2
    // Predicated region
    $region13: #{decoder_stack_forward.17} parent=5 // pred_check
      %p185 = pneg %p184
    $region14: #{decoder_stack_forward.17} parent=5 // pred_check_branch
      %187 = sbr.rel (%p185) target = $region16
    $region15: #{decoder_stack_forward.17} parent=5 // pred_region
      // Predicated region
      $region17: #{decoder_stack_forward.17} parent=15 // pred_check
        %p188 = pneg %p51
      $region18: #{decoder_stack_forward.17} parent=15 // pred_check_branch
        %190 = sbr.rel (%p188) target = $region20
      $region19: #{decoder_stack_forward.17} parent=15 // pred_region
        %p191 = scmp.lt.s32.totalorder %s17, 1
        %s192 = scalar_select %p191, %s17, 1
        %p193 = scmp.lt.s32.totalorder %s18, 0
        %s194 = scalar_select %p193, %s18, 0
        %s195 = sadd.s32 %s194, %s192
        %s196 = smul.addr %s195, 4
        %s197 = scalar_lea.vmem %s0, %s196
      $region20: #{decoder_stack_forward.17} parent=15 // pred_fallthru
        _
      // Predicated region
      $region21: #{decoder_stack_forward.17} parent=15 // pred_check
        %p198 = pneg %p79
      $region22: #{decoder_stack_forward.17} parent=15 // pred_check_branch
        %200 = sbr.rel (%p198) target = $region24
      $region23: #{decoder_stack_forward.17} parent=15 // pred_region
        %p201 = scmp.lt.s32.totalorder %s17, 1
        %s202 = scalar_select %p201, %s17, 1
        %p203 = scmp.lt.s32.totalorder %s19, 0
        %s204 = scalar_select %p203, %s19, 0
        %s205 = sadd.s32 %s204, %s202
        %s206 = smul.addr %s205, 4
        %s207 = scalar_lea.vmem %s1, %s206
      $region24: #{decoder_stack_forward.17} parent=15 // pred_fallthru
        _
      // Predicated region
      $region25: #{decoder_stack_forward.17} parent=15 // pred_check
        %p208 = pneg %p107
      $region26: #{decoder_stack_forward.17} parent=15 // pred_check_branch
        %210 = sbr.rel (%p208) target = $region28
      $region27: #{decoder_stack_forward.17} parent=15 // pred_region
        %p211 = scmp.lt.s32.totalorder %s17, 1
        %s212 = scalar_select %p211, %s17, 1
        %p213 = scmp.lt.s32.totalorder %s19, 0
        %s214 = scalar_select %p213, %s19, 0
        %s215 = sadd.s32 %s214, %s212
        %s216 = smul.addr %s215, 4
        %s217 = scalar_lea.vmem %s2, %s216
      $region28: #{decoder_stack_forward.17} parent=15 // pred_fallthru
        _
      // Predicated region
      $region29: #{decoder_stack_forward.17} parent=15 // pred_check
        %p218 = pneg %p135
      $region30: #{decoder_stack_forward.17} parent=15 // pred_check_branch
        %220 = sbr.rel (%p218) target = $region32
      $region31: #{decoder_stack_forward.17} parent=15 // pred_region
        %p221 = scmp.lt.s32.totalorder %s17, 1
        %s222 = scalar_select %p221, %s17, 1
        %p223 = scmp.lt.s32.totalorder %s19, 0
        %s224 = scalar_select %p223, %s19, 0
        %s225 = sadd.s32 %s224, %s222
        %s226 = scalar_lea.vmem %s3, %s225
      $region32: #{decoder_stack_forward.17} parent=15 // pred_fallthru
        _
    $region16: #{decoder_stack_forward.17} parent=5 // pred_fallthru
      _
    %p227 = scmp.le.s32.totalorder 1, %s10
    %p228 = scmp.lt.s32.totalorder %s10, 3
    %p229 = pnand %p227, %p228
    %p230 = pneg %p229
    // Predicated region
    $region33: #{decoder_stack_forward.17} parent=5 // pred_check
      _
    $region34: #{decoder_stack_forward.17} parent=5 // pred_check_branch
      %232 = sbr.rel (%p229) target = $region36
    $region35: #{decoder_stack_forward.17} parent=5 // pred_region
      %s233 = ssub.s32 %s10, 1
      %p234 = scmp.lt.s32.totalorder %s20, 1
      %s235 = scalar_select %p234, %s20, 1
      %p236 = scmp.lt.s32.totalorder %s21, 0
      %s237 = scalar_select %p236, %s21, 0
      %s238 = sadd.s32 %s237, %s235
      %s239 = smul.addr %s238, 4
      %s240 = scalar_lea.vmem %s0, %s239
      %p241 = pneg %p57
      %p242 = pneg %p54
      %p243 = scmp.lt.s32.totalorder %s20, 1
      %s244 = scalar_select %p243, %s20, 1
      %p245 = scmp.lt.s32.totalorder %s22, 0
      %s246 = scalar_select %p245, %s22, 0
      %s247 = sadd.s32 %s246, %s244
      %s248 = smul.addr %s247, 4
      %s249 = scalar_lea.vmem %s1, %s248
      %p250 = pneg %p85
      %p251 = pneg %p82
      %p252 = scmp.lt.s32.totalorder %s20, 1
      %s253 = scalar_select %p252, %s20, 1
      %p254 = scmp.lt.s32.totalorder %s22, 0
      %s255 = scalar_select %p254, %s22, 0
      %s256 = sadd.s32 %s255, %s253
      %s257 = smul.addr %s256, 4
      %s258 = scalar_lea.vmem %s2, %s257
      %p259 = pneg %p113
      %p260 = pneg %p110
      %p261 = scmp.lt.s32.totalorder %s20, 1
      %s262 = scalar_select %p261, %s20, 1
      %p263 = scmp.lt.s32.totalorder %s22, 0
      %s264 = scalar_select %p263, %s22, 0
      %s265 = sadd.s32 %s264, %s262
      %s266 = scalar_lea.vmem %s3, %s265
      %p267 = pneg %p141
      %p268 = pneg %p138
      %p269 = pneg %p169
      %p270 = pneg %p166
      %p271 = scmp.lt.s32.totalorder %s20, 1
      %s272 = scalar_select %p271, %s20, 1
      %p273 = scmp.lt.s32.totalorder %s21, 0
      %s274 = scalar_select %p273, %s21, 0
      %s275 = sadd.s32 %s274, %s272
      %s276 = smul.addr %s275, 4
      %s277 = scalar_lea.vmem %s4, %s276
      %p278 = scmp.lt.s32.totalorder %s20, 1
      %s279 = scalar_select %p278, %s20, 1
      %p280 = scmp.lt.s32.totalorder %s21, 0
      %s281 = scalar_select %p280, %s21, 0
      %s282 = sadd.s32 %s281, %s279
      %s283 = smul.addr %s282, 4
      %s284 = scalar_lea.vmem %s0, %s283
      %p285 = scmp.lt.s32.totalorder %s20, 1
      %s286 = scalar_select %p285, %s20, 1
      %p287 = scmp.lt.s32.totalorder %s22, 0
      %s288 = scalar_select %p287, %s22, 0
      %s289 = sadd.s32 %s288, %s286
      %s290 = smul.addr %s289, 4
      %s291 = scalar_lea.vmem %s1, %s290
      %p292 = scmp.lt.s32.totalorder %s20, 1
      %s293 = scalar_select %p292, %s20, 1
      %p294 = scmp.lt.s32.totalorder %s22, 0
      %s295 = scalar_select %p294, %s22, 0
      %s296 = sadd.s32 %s295, %s293
      %s297 = smul.addr %s296, 4
      %s298 = scalar_lea.vmem %s2, %s297
      %p299 = scmp.lt.s32.totalorder %s20, 1
      %s300 = scalar_select %p299, %s20, 1
      %p301 = scmp.lt.s32.totalorder %s22, 0
      %s302 = scalar_select %p301, %s22, 0
      %s303 = sadd.s32 %s302, %s300
      %s304 = scalar_lea.vmem %s3, %s303
      %p305 = scmp.lt.s32.totalorder %s20, 1
      %s306 = scalar_select %p305, %s20, 1
      %p307 = scmp.lt.s32.totalorder %s21, 0
      %s308 = scalar_select %p307, %s21, 0
      %s309 = sadd.s32 %s308, %s306
      %s310 = smul.addr %s309, 4
      %s311 = scalar_lea.vmem %s4, %s310
      %p313 = scmp.eq.s32.totalorder %s22, 0
      // Predicated region
      $region37: #{decoder_stack_forward.17} parent=35 // pred_check
        %p314 = pneg %p313
      $region38: #{decoder_stack_forward.17} parent=35 // pred_check_branch
        %316 = sbr.rel (%p314) target = $region40
      $region39: #{decoder_stack_forward.17} parent=35 // pred_region
        %vm317 = vcmask 7168
        %318 = vst.msk [vmem:[#allocation2] sm:$0xff] %vm317, -inf
        %319 = vst.msk [vmem:[#allocation2 + $0x8] sm:$0xff] %vm317, -inf
        %320 = vst.msk [vmem:[#allocation2 + $0x10] sm:$0xff] %vm317, -inf
        %321 = vst.msk [vmem:[#allocation2 + $0x18] sm:$0xff] %vm317, -inf
        %322 = vst.msk [vmem:[#allocation3] sm:$0xff] %vm317, 0.0
        %323 = vst.msk [vmem:[#allocation3 + $0x8] sm:$0xff] %vm317, 0.0
        %324 = vst.msk [vmem:[#allocation3 + $0x10] sm:$0xff] %vm317, 0.0
        %325 = vst.msk [vmem:[#allocation3 + $0x18] sm:$0xff] %vm317, 0.0
        %vm326 = vcmask 64512
        %327 = vst.msk [vmem:[#allocation4] sm:$0xff] %vm326, 0.0
        %328 = vst.msk [vmem:[#allocation4 + $0x8] sm:$0xff] %vm326, 0.0
        %329 = vst.msk [vmem:[#allocation4 + $0x10] sm:$0xff] %vm326, 0.0
        %330 = vst.msk [vmem:[#allocation4 + $0x18] sm:$0xff] %vm326, 0.0
      $region40: #{decoder_stack_forward.17} parent=35 // pred_fallthru
        _
      %s331 = smul.u32 %s22, 8
      %s332 = sadd.s32 %s21, 1
      %s333 = smul.u32 %s332, 8
      %p334 = scmp.lt.s32.totalorder %s331, %s333
      // Predicated region
      $region41: #{decoder_stack_forward.17} parent=35 // pred_check
        %p335 = pneg %p334
      $region42: #{decoder_stack_forward.17} parent=35 // pred_check_branch
        %337 = sbr.rel (%p335) target = $region44
      $region43: #{decoder_stack_forward.17} parent=35 // pred_region
        %v338 = vld [vmem:[%s304] sm:$0x1]
        %v339 = vmul.f32 %v338, -1e+09
        %v340 = vlaneseq
        %v341 = vshrl.u32 %v340, 7
        %s342 = smul.u32 %s21, 8
        %v343 = vstv %s342
        %v344 = vadd.s32 %v341, %v343
        %v345 = vlaneseq
        %v346 = vand.u32 %v345, 127
        %v347 = vstv %s331
        %v348 = vadd.s32 %v346, %v347
        %vm349 = vcmp.gt.s32.totalorder %v348, %v344
        %v350 = vsel %vm349, -1e+09, 0.0
        %v352 = vlaneseq
        %v353 = vshrl.u32 %v352, 7
        %v354 = vsub.s32 0, %v353
        %v355 = vrot.slane %v339, %v354
        %v357 = vadd.f32 %v355, %v350
        %v358 = vld [vmem:[%s284] sm:$0xf]
        %v359 = vld [vmem:[%s291] sm:$0xf]
        %v360 = vld [vmem:[%s298] sm:$0xf]
        %vm361 = vcmask 64512
        %v363 = vsel %vm361, %v358, 0
        %v366 = vsel %vm361, %v359, 0
        %368 = vmatprep.subr.bf16.mxu0 0
        %369 = vmatpush1.bf16.xpose.msra.mxu0 %v366
        %370 = vmatprep.subr.bf16.mxu0 0
        %371 = vmatpush1.bf16.xpose.msra.mxu0 0
        %372 = vmatprep.subr.bf16.mxu0 0
        %373 = vmatpush1.bf16.xpose.msra.mxu0 0
        %374 = vmatprep.subr.bf16.mxu0 0
        %375 = vmatpush1.bf16.xpose.msra.mxu0 0
        %376 = vmatprep.subr.bf16.mxu0 0
        %377 = vmatpush1.bf16.xpose.msra.mxu0 0
        %378 = vmatprep.subr.bf16.mxu0 0
        %379 = vmatpush1.bf16.xpose.msra.mxu0 0
        %380 = vmatprep.subr.bf16.mxu0 0
        %381 = vmatpush1.bf16.xpose.msra.mxu0 0
        %382 = vmatprep.subr.bf16.mxu0 0
        %383 = vmatpush1.bf16.xpose.msra.mxu0 0
        %384 = vmatprep.subr.bf16.mxu0 0
        %385 = vmatpush1.bf16.xpose.msra.mxu0 0
        %386 = vmatprep.subr.bf16.mxu0 0
        %387 = vmatpush1.bf16.xpose.msra.mxu0 0
        %388 = vmatprep.subr.bf16.mxu0 0
        %389 = vmatpush1.bf16.xpose.msra.mxu0 0
        %390 = vmatprep.subr.bf16.mxu0 0
        %391 = vmatpush1.bf16.xpose.msra.mxu0 0
        %392 = vmatprep.subr.bf16.mxu0 0
        %393 = vmatpush1.bf16.xpose.msra.mxu0 0
        %394 = vmatprep.subr.bf16.mxu0 0
        %395 = vmatpush1.bf16.xpose.msra.mxu0 0
        %396 = vmatprep.subr.bf16.mxu0 0
        %397 = vmatpush1.bf16.xpose.msra.mxu0 0
        %398 = vmatprep.subr.bf16.mxu0 0
        %399 = vmatpush1.bf16.xpose.msra.mxu0 0
        %400 = vmatprep.mubr.bf16.mxu0 0
        %401 = vmatmul.mubr.bf16.gmra.mrb[0].mxu0 %v363
        %v402 = vpop.f32.mrb[0].mxu0
        %v403 = vadd.f32 0.0, %v402
        %v404 = vpop.f32.mrb[0].mxu0
        %v405 = vpop.f32.mrb[0].mxu0
        %v406 = vpop.f32.mrb[0].mxu0
        %407 = vdwg.mxu0
        %v408 = vmul.f32 %v403, 0.35355338
        %v409 = vadd.f32 %v408, %v357
        %v410 = vld [vmem:[#allocation2] sm:$0xff]
        %v411 = vsel %vm361, %v409, -inf
        %412 = vmax.xlane.f32.xlu0 %v411
        %v413 = vpop.xlane.xlu0 %412
        %v414 = vmax.f32 %v410, %v413
        %v415 = vsub.f32 %v410, %v414
        %v416 = vmul.f32 %v415, 1.442695
        %v417 = vpow.pop %v416
        %419 = vset.pattern.permute.xlu0 0
        %420 = vperm.xlu0 %419, %v414
        %v421 = vpop.permute.xlu0 %420
        %v423 = vsub.f32 %v409, %v421
        %v424 = vmul.f32 %v423, 1.442695
        %v425 = vpow.pop %v424
        %v426 = vld [vmem:[#allocation3] sm:$0xff]
        %v427 = vmul.f32 %v417, %v426
        %v428 = vsel %vm361, %v425, 0.0
        %429 = vadd.xlane.f32.xlu0 %v428
        %v430 = vpop.xlane.xlu0 %429
        %v431 = vadd.f32 %v427, %v430
        %vm432 = vcmask 7168
        %433 = vst.msk [vmem:[#allocation3] sm:$0xff] %vm432, %v431
        %v434 = vld [vmem:[#allocation4] sm:$0xff]
        %436 = vset.pattern.permute.xlu0 0
        %437 = vperm.xlu0 %436, %v417
        %v438 = vpop.permute.xlu0 %437
        %v440 = vmul.f32 %v438, %v434
        %v441 = vpack.c.bf16 %v425, %v425
        %v443 = vsel %vm361, %v441, 0
        %vm445 = vcmask 1043456
        %v447 = vsel %vm445, %v360, 0
        %449 = vmatprep.subr.bf16.mxu0 0
        %450 = vmatpush1.bf16.msra.mxu0 %v447
        %451 = vmatprep.subr.bf16.mxu0 0
        %452 = vmatpush1.bf16.msra.mxu0 0
        %453 = vmatprep.subr.bf16.mxu0 0
        %454 = vmatpush1.bf16.msra.mxu0 0
        %455 = vmatprep.subr.bf16.mxu0 0
        %456 = vmatpush1.bf16.msra.mxu0 0
        %457 = vmatprep.subr.bf16.mxu0 0
        %458 = vmatpush1.bf16.msra.mxu0 0
        %459 = vmatprep.subr.bf16.mxu0 0
        %460 = vmatpush1.bf16.msra.mxu0 0
        %461 = vmatprep.subr.bf16.mxu0 0
        %462 = vmatpush1.bf16.msra.mxu0 0
        %463 = vmatprep.subr.bf16.mxu0 0
        %464 = vmatpush1.bf16.msra.mxu0 0
        %465 = vmatprep.subr.bf16.mxu0 0
        %466 = vmatpush1.bf16.msra.mxu0 0
        %467 = vmatprep.subr.bf16.mxu0 0
        %468 = vmatpush1.bf16.msra.mxu0 0
        %469 = vmatprep.subr.bf16.mxu0 0
        %470 = vmatpush1.bf16.msra.mxu0 0
        %471 = vmatprep.subr.bf16.mxu0 0
        %472 = vmatpush1.bf16.msra.mxu0 0
        %473 = vmatprep.subr.bf16.mxu0 0
        %474 = vmatpush1.bf16.msra.mxu0 0
        %475 = vmatprep.subr.bf16.mxu0 0
        %476 = vmatpush1.bf16.msra.mxu0 0
        %477 = vmatprep.subr.bf16.mxu0 0
        %478 = vmatpush1.bf16.msra.mxu0 0
        %479 = vmatprep.subr.bf16.mxu0 0
        %480 = vmatpush1.bf16.msra.mxu0 0
        %481 = vmatprep.mubr.bf16.mxu0 0
        %482 = vmatmul.mubr.bf16.gmra.mrb[0].mxu0 %v443
        %v483 = vpop.f32.mrb[0].mxu0
        %v484 = vadd.f32 0.0, %v483
        %v485 = vpop.f32.mrb[0].mxu0
        %v486 = vpop.f32.mrb[0].mxu0
        %v487 = vpop.f32.mrb[0].mxu0
        %488 = vdwg.mxu0
        %v489 = vadd.f32 %v440, %v484
        %490 = vst.msk [vmem:[#allocation4] sm:$0xff] %vm361, %v489
        %491 = vst.msk [vmem:[#allocation2] sm:$0xff] %vm432, %v414
        %v492 = vld [vmem:[%s284] sm:$0xf]
        %v493 = vld [vmem:[%s291] sm:$0xf]
        %v494 = vld [vmem:[%s298] sm:$0xf]
        %v496 = vunpack.c.l.b16 %v492
        %v497 = vpack.c.b16 %v496, %v496
        %498 = vrot.lane.b32.xlu0 %v497, 120
        %v499 = vpop.permute.xlu0 %498
        %v501 = vunpack.c.l.b16 %v493
        %v502 = vpack.c.b16 %v501, %v501
        %503 = vrot.lane.b32.xlu0 %v502, 120
        %v504 = vpop.permute.xlu0 %503
        %v506 = vsel %vm361, %v499, 0
        %v509 = vsel %vm361, %v504, 0
        %511 = vmatprep.subr.bf16.mxu0 0
        %512 = vmatpush1.bf16.xpose.msra.mxu0 %v509
        %513 = vmatprep.subr.bf16.mxu0 0
        %514 = vmatpush1.bf16.xpose.msra.mxu0 0
        %515 = vmatprep.subr.bf16.mxu0 0
        %516 = vmatpush1.bf16.xpose.msra.mxu0 0
        %517 = vmatprep.subr.bf16.mxu0 0
        %518 = vmatpush1.bf16.xpose.msra.mxu0 0
        %519 = vmatprep.subr.bf16.mxu0 0
        %520 = vmatpush1.bf16.xpose.msra.mxu0 0
        %521 = vmatprep.subr.bf16.mxu0 0
        %522 = vmatpush1.bf16.xpose.msra.mxu0 0
        %523 = vmatprep.subr.bf16.mxu0 0
        %524 = vmatpush1.bf16.xpose.msra.mxu0 0
        %525 = vmatprep.subr.bf16.mxu0 0
        %526 = vmatpush1.bf16.xpose.msra.mxu0 0
        %527 = vmatprep.subr.bf16.mxu0 0
        %528 = vmatpush1.bf16.xpose.msra.mxu0 0
        %529 = vmatprep.subr.bf16.mxu0 0
        %530 = vmatpush1.bf16.xpose.msra.mxu0 0
        %531 = vmatprep.subr.bf16.mxu0 0
        %532 = vmatpush1.bf16.xpose.msra.mxu0 0
        %533 = vmatprep.subr.bf16.mxu0 0
        %534 = vmatpush1.bf16.xpose.msra.mxu0 0
        %535 = vmatprep.subr.bf16.mxu0 0
        %536 = vmatpush1.bf16.xpose.msra.mxu0 0
        %537 = vmatprep.subr.bf16.mxu0 0
        %538 = vmatpush1.bf16.xpose.msra.mxu0 0
        %539 = vmatprep.subr.bf16.mxu0 0
        %540 = vmatpush1.bf16.xpose.msra.mxu0 0
        %541 = vmatprep.subr.bf16.mxu0 0
        %542 = vmatpush1.bf16.xpose.msra.mxu0 0
        %543 = vmatprep.mubr.bf16.mxu0 0
        %544 = vmatmul.mubr.bf16.gmra.mrb[0].mxu0 %v506
        %v545 = vpop.f32.mrb[0].mxu0
        %v546 = vadd.f32 0.0, %v545
        %v547 = vpop.f32.mrb[0].mxu0
        %v548 = vpop.f32.mrb[0].mxu0
        %v549 = vpop.f32.mrb[0].mxu0
        %550 = vdwg.mxu0
        %v551 = vmul.f32 %v546, 0.35355338
        %v552 = vadd.f32 %v551, %v357
        %s553 = scalar_lea.vmem [#allocation2], 8
        %v554 = vld [vmem:[%s553] sm:$0xff]
        %v555 = vsel %vm361, %v552, -inf
        %556 = vmax.xlane.f32.xlu0 %v555
        %v557 = vpop.xlane.xlu0 %556
        %v558 = vmax.f32 %v554, %v557
        %v559 = vsub.f32 %v554, %v558
        %v560 = vmul.f32 %v559, 1.442695
        %v561 = vpow.pop %v560
        %563 = vset.pattern.permute.xlu0 0
        %564 = vperm.xlu0 %563, %v558
        %v565 = vpop.permute.xlu0 %564
        %v567 = vsub.f32 %v552, %v565
        %v568 = vmul.f32 %v567, 1.442695
        %v569 = vpow.pop %v568
        %s570 = scalar_lea.vmem [#allocation3], 8
        %v571 = vld [vmem:[%s570] sm:$0xff]
        %v572 = vmul.f32 %v561, %v571
        %v573 = vsel %vm361, %v569, 0.0
        %574 = vadd.xlane.f32.xlu0 %v573
        %v575 = vpop.xlane.xlu0 %574
        %v576 = vadd.f32 %v572, %v575
        %577 = vst.msk [vmem:[%s570] sm:$0xff] %vm432, %v576
        %s578 = scalar_lea.vmem [#allocation4], 8
        %v579 = vld [vmem:[%s578] sm:$0xff]
        %581 = vset.pattern.permute.xlu0 0
        %582 = vperm.xlu0 %581, %v561
        %v583 = vpop.permute.xlu0 %582
        %v585 = vmul.f32 %v583, %v579
        %v586 = vpack.c.bf16 %v569, %v569
        %v588 = vunpack.c.l.b16 %v494
        %v589 = vpack.c.b16 %v588, %v588
        %590 = vrot.lane.b32.xlu0 %v589, 120
        %v591 = vpop.permute.xlu0 %590
        %v593 = vsel %vm361, %v586, 0
        %v596 = vsel %vm445, %v591, 0
        %598 = vmatprep.subr.bf16.mxu0 0
        %599 = vmatpush1.bf16.msra.mxu0 %v596
        %600 = vmatprep.subr.bf16.mxu0 0
        %601 = vmatpush1.bf16.msra.mxu0 0
        %602 = vmatprep.subr.bf16.mxu0 0
        %603 = vmatpush1.bf16.msra.mxu0 0
        %604 = vmatprep.subr.bf16.mxu0 0
        %605 = vmatpush1.bf16.msra.mxu0 0
        %606 = vmatprep.subr.bf16.mxu0 0
        %607 = vmatpush1.bf16.msra.mxu0 0
        %608 = vmatprep.subr.bf16.mxu0 0
        %609 = vmatpush1.bf16.msra.mxu0 0
        %610 = vmatprep.subr.bf16.mxu0 0
        %611 = vmatpush1.bf16.msra.mxu0 0
        %612 = vmatprep.subr.bf16.mxu0 0
        %613 = vmatpush1.bf16.msra.mxu0 0
        %614 = vmatprep.subr.bf16.mxu0 0
        %615 = vmatpush1.bf16.msra.mxu0 0
        %616 = vmatprep.subr.bf16.mxu0 0
        %617 = vmatpush1.bf16.msra.mxu0 0
        %618 = vmatprep.subr.bf16.mxu0 0
        %619 = vmatpush1.bf16.msra.mxu0 0
        %620 = vmatprep.subr.bf16.mxu0 0
        %621 = vmatpush1.bf16.msra.mxu0 0
        %622 = vmatprep.subr.bf16.mxu0 0
        %623 = vmatpush1.bf16.msra.mxu0 0
        %624 = vmatprep.subr.bf16.mxu0 0
        %625 = vmatpush1.bf16.msra.mxu0 0
        %626 = vmatprep.subr.bf16.mxu0 0
        %627 = vmatpush1.bf16.msra.mxu0 0
        %628 = vmatprep.subr.bf16.mxu0 0
        %629 = vmatpush1.bf16.msra.mxu0 0
        %630 = vmatprep.mubr.bf16.mxu0 0
        %631 = vmatmul.mubr.bf16.gmra.mrb[0].mxu0 %v593
        %v632 = vpop.f32.mrb[0].mxu0
        %v633 = vadd.f32 0.0, %v632
        %v634 = vpop.f32.mrb[0].mxu0
        %v635 = vpop.f32.mrb[0].mxu0
        %v636 = vpop.f32.mrb[0].mxu0
        %637 = vdwg.mxu0
        %v638 = vadd.f32 %v585, %v633
        %639 = vst.msk [vmem:[%s578] sm:$0xff] %vm361, %v638
        %640 = vst.msk [vmem:[%s553] sm:$0xff] %vm432, %v558
        %v641 = vld [vmem:[%s284] sm:$0xf]
        %v642 = vld [vmem:[%s291] sm:$0xf]
        %v643 = vld [vmem:[%s298] sm:$0xf]
        %v645 = vunpack.c.l.b16 %v641
        %v646 = vpack.c.b16 %v645, %v645
        %647 = vrot.lane.b32.xlu0 %v646, 112
        %v648 = vpop.permute.xlu0 %647
        %v650 = vunpack.c.l.b16 %v642
        %v651 = vpack.c.b16 %v650, %v650
        %652 = vrot.lane.b32.xlu0 %v651, 112
        %v653 = vpop.permute.xlu0 %652
        %v655 = vsel %vm361, %v648, 0
        %v658 = vsel %vm361, %v653, 0
        %660 = vmatprep.subr.bf16.mxu0 0
        %661 = vmatpush1.bf16.xpose.msra.mxu0 %v658
        %662 = vmatprep.subr.bf16.mxu0 0
        %663 = vmatpush1.bf16.xpose.msra.mxu0 0
        %664 = vmatprep.subr.bf16.mxu0 0
        %665 = vmatpush1.bf16.xpose.msra.mxu0 0
        %666 = vmatprep.subr.bf16.mxu0 0
        %667 = vmatpush1.bf16.xpose.msra.mxu0 0
        %668 = vmatprep.subr.bf16.mxu0 0
        %669 = vmatpush1.bf16.xpose.msra.mxu0 0
        %670 = vmatprep.subr.bf16.mxu0 0
        %671 = vmatpush1.bf16.xpose.msra.mxu0 0
        %672 = vmatprep.subr.bf16.mxu0 0
        %673 = vmatpush1.bf16.xpose.msra.mxu0 0
        %674 = vmatprep.subr.bf16.mxu0 0
        %675 = vmatpush1.bf16.xpose.msra.mxu0 0
        %676 = vmatprep.subr.bf16.mxu0 0
        %677 = vmatpush1.bf16.xpose.msra.mxu0 0
        %678 = vmatprep.subr.bf16.mxu0 0
        %679 = vmatpush1.bf16.xpose.msra.mxu0 0
        %680 = vmatprep.subr.bf16.mxu0 0
        %681 = vmatpush1.bf16.xpose.msra.mxu0 0
        %682 = vmatprep.subr.bf16.mxu0 0
        %683 = vmatpush1.bf16.xpose.msra.mxu0 0
        %684 = vmatprep.subr.bf16.mxu0 0
        %685 = vmatpush1.bf16.xpose.msra.mxu0 0
        %686 = vmatprep.subr.bf16.mxu0 0
        %687 = vmatpush1.bf16.xpose.msra.mxu0 0
        %688 = vmatprep.subr.bf16.mxu0 0
        %689 = vmatpush1.bf16.xpose.msra.mxu0 0
        %690 = vmatprep.subr.bf16.mxu0 0
        %691 = vmatpush1.bf16.xpose.msra.mxu0 0
        %692 = vmatprep.mubr.bf16.mxu0 0
        %693 = vmatmul.mubr.bf16.gmra.mrb[0].mxu0 %v655
        %v694 = vpop.f32.mrb[0].mxu0
        %v695 = vadd.f32 0.0, %v694
        %v696 = vpop.f32.mrb[0].mxu0
        %v697 = vpop.f32.mrb[0].mxu0
        %v698 = vpop.f32.mrb[0].mxu0
        %699 = vdwg.mxu0
        %v700 = vmul.f32 %v695, 0.35355338
        %v701 = vadd.f32 %v700, %v357
        %s702 = scalar_lea.vmem [#allocation2], 16
        %v703 = vld [vmem:[%s702] sm:$0xff]
        %v704 = vsel %vm361, %v701, -inf
        %705 = vmax.xlane.f32.xlu0 %v704
        %v706 = vpop.xlane.xlu0 %705
        %v707 = vmax.f32 %v703, %v706
        %v708 = vsub.f32 %v703, %v707
        %v709 = vmul.f32 %v708, 1.442695
        %v710 = vpow.pop %v709
        %712 = vset.pattern.permute.xlu0 0
        %713 = vperm.xlu0 %712, %v707
        %v714 = vpop.permute.xlu0 %713
        %v716 = vsub.f32 %v701, %v714
        %v717 = vmul.f32 %v716, 1.442695
        %v718 = vpow.pop %v717
        %s719 = scalar_lea.vmem [#allocation3], 16
        %v720 = vld [vmem:[%s719] sm:$0xff]
        %v721 = vmul.f32 %v710, %v720
        %v722 = vsel %vm361, %v718, 0.0
        %723 = vadd.xlane.f32.xlu0 %v722
        %v724 = vpop.xlane.xlu0 %723
        %v725 = vadd.f32 %v721, %v724
        %726 = vst.msk [vmem:[%s719] sm:$0xff] %vm432, %v725
        %s727 = scalar_lea.vmem [#allocation4], 16
        %v728 = vld [vmem:[%s727] sm:$0xff]
        %730 = vset.pattern.permute.xlu0 0
        %731 = vperm.xlu0 %730, %v710
        %v732 = vpop.permute.xlu0 %731
        %v734 = vmul.f32 %v732, %v728
        %v735 = vpack.c.bf16 %v718, %v718
        %v737 = vunpack.c.l.b16 %v643
        %v738 = vpack.c.b16 %v737, %v737
        %739 = vrot.lane.b32.xlu0 %v738, 112
        %v740 = vpop.permute.xlu0 %739
        %v742 = vsel %vm361, %v735, 0
        %v745 = vsel %vm445, %v740, 0
        %747 = vmatprep.subr.bf16.mxu0 0
        %748 = vmatpush1.bf16.msra.mxu0 %v745
        %749 = vmatprep.subr.bf16.mxu0 0
        %750 = vmatpush1.bf16.msra.mxu0 0
        %751 = vmatprep.subr.bf16.mxu0 0
        %752 = vmatpush1.bf16.msra.mxu0 0
        %753 = vmatprep.subr.bf16.mxu0 0
        %754 = vmatpush1.bf16.msra.mxu0 0
        %755 = vmatprep.subr.bf16.mxu0 0
        %756 = vmatpush1.bf16.msra.mxu0 0
        %757 = vmatprep.subr.bf16.mxu0 0
        %758 = vmatpush1.bf16.msra.mxu0 0
        %759 = vmatprep.subr.bf16.mxu0 0
        %760 = vmatpush1.bf16.msra.mxu0 0
        %761 = vmatprep.subr.bf16.mxu0 0
        %762 = vmatpush1.bf16.msra.mxu0 0
        %763 = vmatprep.subr.bf16.mxu0 0
        %764 = vmatpush1.bf16.msra.mxu0 0
        %765 = vmatprep.subr.bf16.mxu0 0
        %766 = vmatpush1.bf16.msra.mxu0 0
        %767 = vmatprep.subr.bf16.mxu0 0
        %768 = vmatpush1.bf16.msra.mxu0 0
        %769 = vmatprep.subr.bf16.mxu0 0
        %770 = vmatpush1.bf16.msra.mxu0 0
        %771 = vmatprep.subr.bf16.mxu0 0
        %772 = vmatpush1.bf16.msra.mxu0 0
        %773 = vmatprep.subr.bf16.mxu0 0
        %774 = vmatpush1.bf16.msra.mxu0 0
        %775 = vmatprep.subr.bf16.mxu0 0
        %776 = vmatpush1.bf16.msra.mxu0 0
        %777 = vmatprep.subr.bf16.mxu0 0
        %778 = vmatpush1.bf16.msra.mxu0 0
        %779 = vmatprep.mubr.bf16.mxu0 0
        %780 = vmatmul.mubr.bf16.gmra.mrb[0].mxu0 %v742
        %v781 = vpop.f32.mrb[0].mxu0
        %v782 = vadd.f32 0.0, %v781
        %v783 = vpop.f32.mrb[0].mxu0
        %v784 = vpop.f32.mrb[0].mxu0
        %v785 = vpop.f32.mrb[0].mxu0
        %786 = vdwg.mxu0
        %v787 = vadd.f32 %v734, %v782
        %788 = vst.msk [vmem:[%s727] sm:$0xff] %vm361, %v787
        %789 = vst.msk [vmem:[%s702] sm:$0xff] %vm432, %v707
        %v790 = vld [vmem:[%s284] sm:$0xf]
        %v791 = vld [vmem:[%s291] sm:$0xf]
        %v792 = vld [vmem:[%s298] sm:$0xf]
        %v794 = vunpack.c.l.b16 %v790
        %v795 = vpack.c.b16 %v794, %v794
        %796 = vrot.lane.b32.xlu0 %v795, 104
        %v797 = vpop.permute.xlu0 %796
        %v799 = vunpack.c.l.b16 %v791
        %v800 = vpack.c.b16 %v799, %v799
        %801 = vrot.lane.b32.xlu0 %v800, 104
        %v802 = vpop.permute.xlu0 %801
        %v804 = vsel %vm361, %v797, 0
        %v807 = vsel %vm361, %v802, 0
        %809 = vmatprep.subr.bf16.mxu0 0
        %810 = vmatpush1.bf16.xpose.msra.mxu0 %v807
        %811 = vmatprep.subr.bf16.mxu0 0
        %812 = vmatpush1.bf16.xpose.msra.mxu0 0
        %813 = vmatprep.subr.bf16.mxu0 0
        %814 = vmatpush1.bf16.xpose.msra.mxu0 0
        %815 = vmatprep.subr.bf16.mxu0 0
        %816 = vmatpush1.bf16.xpose.msra.mxu0 0
        %817 = vmatprep.subr.bf16.mxu0 0
        %818 = vmatpush1.bf16.xpose.msra.mxu0 0
        %819 = vmatprep.subr.bf16.mxu0 0
        %820 = vmatpush1.bf16.xpose.msra.mxu0 0
        %821 = vmatprep.subr.bf16.mxu0 0
        %822 = vmatpush1.bf16.xpose.msra.mxu0 0
        %823 = vmatprep.subr.bf16.mxu0 0
        %824 = vmatpush1.bf16.xpose.msra.mxu0 0
        %825 = vmatprep.subr.bf16.mxu0 0
        %826 = vmatpush1.bf16.xpose.msra.mxu0 0
        %827 = vmatprep.subr.bf16.mxu0 0
        %828 = vmatpush1.bf16.xpose.msra.mxu0 0
        %829 = vmatprep.subr.bf16.mxu0 0
        %830 = vmatpush1.bf16.xpose.msra.mxu0 0
        %831 = vmatprep.subr.bf16.mxu0 0
        %832 = vmatpush1.bf16.xpose.msra.mxu0 0
        %833 = vmatprep.subr.bf16.mxu0 0
        %834 = vmatpush1.bf16.xpose.msra.mxu0 0
        %835 = vmatprep.subr.bf16.mxu0 0
        %836 = vmatpush1.bf16.xpose.msra.mxu0 0
        %837 = vmatprep.subr.bf16.mxu0 0
        %838 = vmatpush1.bf16.xpose.msra.mxu0 0
        %839 = vmatprep.subr.bf16.mxu0 0
        %840 = vmatpush1.bf16.xpose.msra.mxu0 0
        %841 = vmatprep.mubr.bf16.mxu0 0
        %842 = vmatmul.mubr.bf16.gmra.mrb[0].mxu0 %v804
        %v843 = vpop.f32.mrb[0].mxu0
        %v844 = vadd.f32 0.0, %v843
        %v845 = vpop.f32.mrb[0].mxu0
        %v846 = vpop.f32.mrb[0].mxu0
        %v847 = vpop.f32.mrb[0].mxu0
        %848 = vdwg.mxu0
        %v849 = vmul.f32 %v844, 0.35355338
        %v850 = vadd.f32 %v849, %v357
        %s851 = scalar_lea.vmem [#allocation2], 24
        %v852 = vld [vmem:[%s851] sm:$0xff]
        %v853 = vsel %vm361, %v850, -inf
        %854 = vmax.xlane.f32.xlu0 %v853
        %v855 = vpop.xlane.xlu0 %854
        %v856 = vmax.f32 %v852, %v855
        %v857 = vsub.f32 %v852, %v856
        %v858 = vmul.f32 %v857, 1.442695
        %v859 = vpow.pop %v858
        %861 = vset.pattern.permute.xlu0 0
        %862 = vperm.xlu0 %861, %v856
        %v863 = vpop.permute.xlu0 %862
        %v865 = vsub.f32 %v850, %v863
        %v866 = vmul.f32 %v865, 1.442695
        %v867 = vpow.pop %v866
        %s868 = scalar_lea.vmem [#allocation3], 24
        %v869 = vld [vmem:[%s868] sm:$0xff]
        %v870 = vmul.f32 %v859, %v869
        %v871 = vsel %vm361, %v867, 0.0
        %872 = vadd.xlane.f32.xlu0 %v871
        %v873 = vpop.xlane.xlu0 %872
        %v874 = vadd.f32 %v870, %v873
        %875 = vst.msk [vmem:[%s868] sm:$0xff] %vm432, %v874
        %s876 = scalar_lea.vmem [#allocation4], 24
        %v877 = vld [vmem:[%s876] sm:$0xff]
        %879 = vset.pattern.permute.xlu0 0
        %880 = vperm.xlu0 %879, %v859
        %v881 = vpop.permute.xlu0 %880
        %v883 = vmul.f32 %v881, %v877
        %v884 = vpack.c.bf16 %v867, %v867
        %v886 = vunpack.c.l.b16 %v792
        %v887 = vpack.c.b16 %v886, %v886
        %888 = vrot.lane.b32.xlu0 %v887, 104
        %v889 = vpop.permute.xlu0 %888
        %v891 = vsel %vm361, %v884, 0
        %v894 = vsel %vm445, %v889, 0
        %896 = vmatprep.subr.bf16.mxu0 0
        %897 = vmatpush1.bf16.msra.mxu0 %v894
        %898 = vmatprep.subr.bf16.mxu0 0
        %899 = vmatpush1.bf16.msra.mxu0 0
        %900 = vmatprep.subr.bf16.mxu0 0
        %901 = vmatpush1.bf16.msra.mxu0 0
        %902 = vmatprep.subr.bf16.mxu0 0
        %903 = vmatpush1.bf16.msra.mxu0 0
        %904 = vmatprep.subr.bf16.mxu0 0
        %905 = vmatpush1.bf16.msra.mxu0 0
        %906 = vmatprep.subr.bf16.mxu0 0
        %907 = vmatpush1.bf16.msra.mxu0 0
        %908 = vmatprep.subr.bf16.mxu0 0
        %909 = vmatpush1.bf16.msra.mxu0 0
        %910 = vmatprep.subr.bf16.mxu0 0
        %911 = vmatpush1.bf16.msra.mxu0 0
        %912 = vmatprep.subr.bf16.mxu0 0
        %913 = vmatpush1.bf16.msra.mxu0 0
        %914 = vmatprep.subr.bf16.mxu0 0
        %915 = vmatpush1.bf16.msra.mxu0 0
        %916 = vmatprep.subr.bf16.mxu0 0
        %917 = vmatpush1.bf16.msra.mxu0 0
        %918 = vmatprep.subr.bf16.mxu0 0
        %919 = vmatpush1.bf16.msra.mxu0 0
        %920 = vmatprep.subr.bf16.mxu0 0
        %921 = vmatpush1.bf16.msra.mxu0 0
        %922 = vmatprep.subr.bf16.mxu0 0
        %923 = vmatpush1.bf16.msra.mxu0 0
        %924 = vmatprep.subr.bf16.mxu0 0
        %925 = vmatpush1.bf16.msra.mxu0 0
        %926 = vmatprep.subr.bf16.mxu0 0
        %927 = vmatpush1.bf16.msra.mxu0 0
        %928 = vmatprep.mubr.bf16.mxu0 0
        %929 = vmatmul.mubr.bf16.gmra.mrb[0].mxu0 %v891
        %v930 = vpop.f32.mrb[0].mxu0
        %v931 = vadd.f32 0.0, %v930
        %v932 = vpop.f32.mrb[0].mxu0
        %v933 = vpop.f32.mrb[0].mxu0
        %v934 = vpop.f32.mrb[0].mxu0
        %935 = vdwg.mxu0
        %v936 = vadd.f32 %v883, %v931
        %937 = vst.msk [vmem:[%s876] sm:$0xff] %vm361, %v936
        %938 = vst.msk [vmem:[%s851] sm:$0xff] %vm432, %v856
      $region44: #{decoder_stack_forward.17} parent=35 // pred_fallthru
        _
      // Predicated region
      $region45: #{decoder_stack_forward.17} parent=35 // pred_check
        %p939 = pneg %p313
      $region46: #{decoder_stack_forward.17} parent=35 // pred_check_branch
        %941 = sbr.rel (%p939) target = $region48
      $region47: #{decoder_stack_forward.17} parent=35 // pred_region
        %v942 = vld [vmem:[#allocation4] sm:$0xff]
        %v943 = vld [vmem:[#allocation3] sm:$0xff]
        %v944 = vrcp.pop %v943
        %946 = vset.pattern.permute.xlu0 0
        %947 = vperm.xlu0 %946, %v944
        %v948 = vpop.permute.xlu0 %947
        %v950 = vmul.f32 %v942, %v948
        %s951 = scalar_lea.vmem [#allocation4], 8
        %v952 = vld [vmem:[%s951] sm:$0xff]
        %s953 = scalar_lea.vmem [#allocation3], 8
        %v954 = vld [vmem:[%s953] sm:$0xff]
        %v955 = vrcp.pop %v954
        %957 = vset.pattern.permute.xlu0 0
        %958 = vperm.xlu0 %957, %v955
        %v959 = vpop.permute.xlu0 %958
        %v961 = vmul.f32 %v952, %v959
        %s962 = scalar_lea.vmem [#allocation4], 16
        %v963 = vld [vmem:[%s962] sm:$0xff]
        %s964 = scalar_lea.vmem [#allocation3], 16
        %v965 = vld [vmem:[%s964] sm:$0xff]
        %v966 = vrcp.pop %v965
        %968 = vset.pattern.permute.xlu0 0
        %969 = vperm.xlu0 %968, %v966
        %v970 = vpop.permute.xlu0 %969
        %v972 = vmul.f32 %v963, %v970
        %s973 = scalar_lea.vmem [#allocation4], 24
        %v974 = vld [vmem:[%s973] sm:$0xff]
        %s975 = scalar_lea.vmem [#allocation3], 24
        %v976 = vld [vmem:[%s975] sm:$0xff]
        %v977 = vrcp.pop %v976
        %979 = vset.pattern.permute.xlu0 0
        %980 = vperm.xlu0 %979, %v977
        %v981 = vpop.permute.xlu0 %980
        %v983 = vmul.f32 %v974, %v981
        %985 = vrot.lane.b32.xlu0 %v961, 8
        %v986 = vpop.permute.xlu0 %985
        %989 = vrot.lane.b32.xlu0 %v972, 16
        %v990 = vpop.permute.xlu0 %989
        %993 = vrot.lane.b32.xlu0 %v983, 24
        %v994 = vpop.permute.xlu0 %993
        %vm996 = vcmask 64512
        %v997 = vsel %vm996, %v950, %v986
        %vm998 = vcmask 130048
        %v999 = vsel %vm998, %v997, %v990
        %vm1000 = vcmask 195584
        %v1001 = vsel %vm1000, %v999, %v994
        %v1002 = vpack.c.bf16 %v1001, %v1001
        %vm1003 = vcmask 257024
        %1004 = vst.msk [vmem:[%s311] sm:$0xf] %vm1003, %v1002
      $region48: #{decoder_stack_forward.17} parent=35 // pred_fallthru
        _
      %p1005 = scmp.lt.s32.totalorder %s20, 1
      %s1006 = scalar_select %p1005, %s20, 1
      %p1007 = scmp.lt.s32.totalorder %s21, 0
      %s1008 = scalar_select %p1007, %s21, 0
      %s1009 = sadd.s32 %s1008, %s1006
      %s1010 = smul.addr %s1009, 4
      %s1011 = scalar_lea.vmem %s4, %s1010
      // Predicated region
      $region49: #{decoder_stack_forward.17} parent=35 // pred_check
        %p1012 = pneg %p166
      $region50: #{decoder_stack_forward.17} parent=35 // pred_check_branch
        %1014 = sbr.rel (%p1012) target = $region52
      $region51: #{decoder_stack_forward.17} parent=35 // pred_region
        _
      $region52: #{decoder_stack_forward.17} parent=35 // pred_fallthru
        _
    $region36: #{decoder_stack_forward.17} parent=5 // pred_fallthru
      _
    %p1015 = scmp.le.s32.totalorder 2, %s10
    // Predicated region
    $region53: #{decoder_stack_forward.17} parent=5 // pred_check
      %p1016 = pneg %p1015
    $region54: #{decoder_stack_forward.17} parent=5 // pred_check_branch
      %1018 = sbr.rel (%p1016) target = $region56
    $region55: #{decoder_stack_forward.17} parent=5 // pred_region
      %s1019 = ssub.s32 %s10, 2
      // Predicated region
      $region57: #{decoder_stack_forward.17} parent=55 // pred_check
        %p1020 = pneg %p172
      $region58: #{decoder_stack_forward.17} parent=55 // pred_check_branch
        %1022 = sbr.rel (%p1020) target = $region60
      $region59: #{decoder_stack_forward.17} parent=55 // pred_region
        %p1023 = scmp.lt.s32.totalorder %s23, 1
        %s1024 = scalar_select %p1023, %s23, 1
        %p1025 = scmp.lt.s32.totalorder %s24, 0
        %s1026 = scalar_select %p1025, %s24, 0
        %s1027 = sadd.s32 %s1026, %s1024
        %s1028 = smul.addr %s1027, 4
        %s1029 = scalar_lea.vmem %s4, %s1028
      $region60: #{decoder_stack_forward.17} parent=55 // pred_fallthru
        _
    $region56: #{decoder_stack_forward.17} parent=5 // pred_fallthru
      _
  $region6: #{decoder_stack_forward.17} parent=0 // loop_footer
    %s14 = sadd.s32 1, %s10
  $region7: #{decoder_stack_forward.17} parent=0 // loop_footer_branch
    %9 = sbr.rel target = $region3
  $region8: #{decoder_stack_forward.17} parent=0 // loop_exit
    _

// kernel: decoder_stack_forward.20
$region0: #{decoder_stack_forward.20}
  #allocation0 [shape = 'u32[]', space=smem, size = 0x4, offset = 0x4, fixed_abs, tag = 'smem constant byte address 0x4 - core index']
  #allocation1 [shape = 'u32[144,128]{1,0:T(1,128)}', space=vmem, size = 0x12000, scoped, tag = 'internal scratch']
  %s0 = inlined_call_operand.vmem [shape: bf16[16,32], index: 0, kind: input, shape index: {}]
  %s1 = inlined_call_operand.vmem [shape: bf16[32,32], index: 1, kind: input, shape index: {}]
  %s2 = inlined_call_operand.vmem [shape: f32[1,32], index: 2, kind: input, shape index: {}]
  %s3 = inlined_call_operand.vmem [shape: f32[16,32], index: 3, kind: input, shape index: {}]
  %s4 = inlined_call_operand.vmem [shape: f32[1,32], index: 4, kind: input, shape index: {}]
  %s5 = inlined_call_operand.vmem [shape: f32[1,32], index: 5, kind: input, shape index: {}]
  %s6 = inlined_call_operand.vmem [shape: f32[16,32], index: 6, kind: output, shape index: {}]
  %s7 = sld [smem:[#allocation0]]
  $region34: #{decoder_stack_forward.20} parent=0
    _
  %s9 = ssub.s32 1, %s7
  %s10 = scalar_select 0, %s9, %s7
  // Predicated region
  $region2: #{decoder_stack_forward.20} parent=0 // pred_check
    _
  $region3: #{decoder_stack_forward.20} parent=0 // pred_check_branch
    %12 = sbr.rel (0) target = $region5
  $region4: #{decoder_stack_forward.20} parent=0 // pred_region
    _
  $region5: #{decoder_stack_forward.20} parent=0 // pred_fallthru
    _
  // Predicated region
  $region6: #{decoder_stack_forward.20} parent=0 // pred_check
    _
  $region7: #{decoder_stack_forward.20} parent=0 // pred_check_branch
    %14 = sbr.rel (0) target = $region9
  $region8: #{decoder_stack_forward.20} parent=0 // pred_region
    _
  $region9: #{decoder_stack_forward.20} parent=0 // pred_fallthru
    _
  // Predicated region
  $region10: #{decoder_stack_forward.20} parent=0 // pred_check
    _
  $region11: #{decoder_stack_forward.20} parent=0 // pred_check_branch
    %16 = sbr.rel (0) target = $region13
  $region12: #{decoder_stack_forward.20} parent=0 // pred_region
    _
  $region13: #{decoder_stack_forward.20} parent=0 // pred_fallthru
    _
  // Predicated region
  $region14: #{decoder_stack_forward.20} parent=0 // pred_check
    _
  $region15: #{decoder_stack_forward.20} parent=0 // pred_check_branch
    %18 = sbr.rel (0) target = $region17
  $region16: #{decoder_stack_forward.20} parent=0 // pred_region
    _
  $region17: #{decoder_stack_forward.20} parent=0 // pred_fallthru
    _
  // Predicated region
  $region18: #{decoder_stack_forward.20} parent=0 // pred_check
    _
  $region19: #{decoder_stack_forward.20} parent=0 // pred_check_branch
    %20 = sbr.rel (0) target = $region21
  $region20: #{decoder_stack_forward.20} parent=0 // pred_region
    _
  $region21: #{decoder_stack_forward.20} parent=0 // pred_fallthru
    _
  // Predicated region
  $region22: #{decoder_stack_forward.20} parent=0 // pred_check
    _
  $region23: #{decoder_stack_forward.20} parent=0 // pred_check_branch
    %22 = sbr.rel (0) target = $region25
  $region24: #{decoder_stack_forward.20} parent=0 // pred_region
    _
  $region25: #{decoder_stack_forward.20} parent=0 // pred_fallthru
    _
  %v24 = vld [vmem:[%s0] sm:$0xf]
  %v25 = vld [vmem:[%s0 + $0x4] sm:$0xf]
  %v26 = vld [vmem:[%s1] sm:$0xf]
  %v27 = vld [vmem:[%s1 + $0x4] sm:$0xf]
  %v28 = vld [vmem:[%s1 + $0x8] sm:$0xf]
  %v29 = vld [vmem:[%s1 + $0xc] sm:$0xf]
  %v30 = vld [vmem:[%s2] sm:$0x1]
  %v32 = vlaneseq
  %v33 = vshrl.u32 %v32, 7
  %v34 = vsub.s32 0, %v33
  %v35 = vrot.slane %v30, %v34
  %v39 = vunpack.c.l.b16 %v24
  %v40 = vunpack.c.l.b16 %v25
  %v41 = vpack.c.b16 %v40, %v39
  %v46 = vunpack.c.l.b16 %v26
  %v47 = vunpack.c.l.b16 %v27
  %v48 = vunpack.c.l.b16 %v28
  %v49 = vunpack.c.l.b16 %v29
  %v50 = vpack.c.b16 %v47, %v46
  %v51 = vpack.c.b16 %v49, %v48
  %vm54 = vcmask 261120
  %v56 = vsel %vm54, %v41, 0
  %58 = vmatprep.subr.bf16.mxu0 0
  %59 = vmatpush1.bf16.msra.mxu0 %v50
  %60 = vmatprep.subr.bf16.mxu0 0
  %61 = vmatpush1.bf16.msra.mxu0 %v51
  %62 = vmatprep.subr.bf16.mxu0 0
  %63 = vmatpush1.bf16.msra.mxu0 0
  %64 = vmatprep.subr.bf16.mxu0 0
  %65 = vmatpush1.bf16.msra.mxu0 0
  %66 = vmatprep.subr.bf16.mxu0 0
  %67 = vmatpush1.bf16.msra.mxu0 0
  %68 = vmatprep.subr.bf16.mxu0 0
  %69 = vmatpush1.bf16.msra.mxu0 0
  %70 = vmatprep.subr.bf16.mxu0 0
  %71 = vmatpush1.bf16.msra.mxu0 0
  %72 = vmatprep.subr.bf16.mxu0 0
  %73 = vmatpush1.bf16.msra.mxu0 0
  %74 = vmatprep.subr.bf16.mxu0 0
  %75 = vmatpush1.bf16.msra.mxu0 0
  %76 = vmatprep.subr.bf16.mxu0 0
  %77 = vmatpush1.bf16.msra.mxu0 0
  %78 = vmatprep.subr.bf16.mxu0 0
  %79 = vmatpush1.bf16.msra.mxu0 0
  %80 = vmatprep.subr.bf16.mxu0 0
  %81 = vmatpush1.bf16.msra.mxu0 0
  %82 = vmatprep.subr.bf16.mxu0 0
  %83 = vmatpush1.bf16.msra.mxu0 0
  %84 = vmatprep.subr.bf16.mxu0 0
  %85 = vmatpush1.bf16.msra.mxu0 0
  %86 = vmatprep.subr.bf16.mxu0 0
  %87 = vmatpush1.bf16.msra.mxu0 0
  %88 = vmatprep.subr.bf16.mxu0 0
  %89 = vmatpush1.bf16.msra.mxu0 0
  %90 = vmatprep.mubr.bf16.mxu0 0
  %91 = vmatmul.mubr.bf16.gmra.mrb[0].mxu0 %v56
  %v92 = vpop.f32.mrb[0].mxu0
  %v93 = vadd.f32 %v35, %v92
  %v94 = vpop.f32.mrb[0].mxu0
  %v95 = vpop.f32.mrb[0].mxu0
  %v96 = vadd.f32 %v35, %v95
  %v97 = vpop.f32.mrb[0].mxu0
  %98 = vdwg.mxu0
  %v99 = vld [vmem:[%s3] sm:$0xff]
  %v100 = vld [vmem:[%s3 + $0x8] sm:$0xff]
  %v101 = vadd.f32 %v93, %v99
  %v102 = vadd.f32 %v96, %v100
  %v103 = vld [vmem:[%s4] sm:$0x1]
  %v104 = vld [vmem:[%s5] sm:$0x1]
  %v105 = vsel %vm54, %v101, 0.0
  %106 = vadd.xlane.f32.xlu0 %v105
  %v107 = vpop.xlane.xlu0 %106
  %v108 = vsel %vm54, %v102, 0.0
  %109 = vadd.xlane.f32.xlu0 %v108
  %v110 = vpop.xlane.xlu0 %109
  %v111 = vrcp.pop 32.0
  %v112 = vmul.f32 %v107, %v111
  %v113 = vmul.f32 %v110, %v111
  %v114 = vsub.f32 %v101, %v112
  %v115 = vsub.f32 %v102, %v113
  %v116 = vmul.f32 %v114, %v114
  %v117 = vmul.f32 %v115, %v115
  %v118 = vsel %vm54, %v116, 0.0
  %119 = vadd.xlane.f32.xlu0 %v118
  %v120 = vpop.xlane.xlu0 %119
  %v121 = vsel %vm54, %v117, 0.0
  %122 = vadd.xlane.f32.xlu0 %v121
  %v123 = vpop.xlane.xlu0 %122
  %v124 = vmul.f32 %v120, %v111
  %v125 = vmul.f32 %v123, %v111
  %v126 = vadd.f32 %v124, 1e-05
  %v127 = vadd.f32 %v125, 1e-05
  %v128 = vrsqrt.pop %v126
  %v129 = vrsqrt.pop %v127
  %v130 = vmul.f32 %v114, %v128
  %v131 = vmul.f32 %v115, %v129
  %v133 = vlaneseq
  %v134 = vshrl.u32 %v133, 7
  %v135 = vsub.s32 0, %v134
  %v136 = vrot.slane %v103, %v135
  %v138 = vmul.f32 %v130, %v136
  %v139 = vmul.f32 %v131, %v136
  %v141 = vlaneseq
  %v142 = vshrl.u32 %v141, 7
  %v143 = vsub.s32 0, %v142
  %v144 = vrot.slane %v104, %v143
  %v146 = vadd.f32 %v138, %v144
  %v147 = vadd.f32 %v139, %v144
  %148 = vst.msk [vmem:[%s6] sm:$0xff] %vm54, %v146
  %149 = vst.msk [vmem:[%s6 + $0x8] sm:$0xff] %vm54, %v147
  // Predicated region
  $region26: #{decoder_stack_forward.20} parent=0 // pred_check
    _
  $region27: #{decoder_stack_forward.20} parent=0 // pred_check_branch
    %151 = sbr.rel (0) target = $region29
  $region28: #{decoder_stack_forward.20} parent=0 // pred_region
    _
  $region29: #{decoder_stack_forward.20} parent=0 // pred_fallthru
    _
  // Predicated region
  $region30: #{decoder_stack_forward.20} parent=0 // pred_check
    _
  $region31: #{decoder_stack_forward.20} parent=0 // pred_check_branch
    %153 = sbr.rel (0) target = $region33
  $region32: #{decoder_stack_forward.20} parent=0 // pred_region
    _
  $region33: #{decoder_stack_forward.20} parent=0 // pred_fallthru
    _

// kernel: decoder_stack_forward.21
$region0: #{decoder_stack_forward.21}
  #allocation0 [shape = 'u32[]', space=smem, size = 0x4, offset = 0x4, fixed_abs, tag = 'smem constant byte address 0x4 - core index']
  #allocation1 [shape = 'u32[144,128]{1,0:T(1,128)}', space=vmem, size = 0x12000, scoped, tag = 'internal scratch']
  #allocation2 [shape = 'f32[16,32]{1,0:T(8,128)}', space=vmem, size = 0x2000, scoped, tag = 'scratch operand']
  %s0 = inlined_call_operand.vmem [shape: f32[16,32], index: 0, kind: input, shape index: {}]
  %s1 = inlined_call_operand.vmem [shape: bf16[32,64], index: 1, kind: input, shape index: {}]
  %s2 = inlined_call_operand.vmem [shape: f32[1,64], index: 2, kind: input, shape index: {}]
  %s3 = inlined_call_operand.vmem [shape: bf16[64,32], index: 3, kind: input, shape index: {}]
  %s4 = inlined_call_operand.vmem [shape: f32[1,32], index: 4, kind: input, shape index: {}]
  %s5 = inlined_call_operand.vmem [shape: f32[1,32], index: 5, kind: input, shape index: {}]
  %s6 = inlined_call_operand.vmem [shape: f32[1,32], index: 6, kind: input, shape index: {}]
  %s7 = inlined_call_operand.vmem [shape: f32[16,32], index: 7, kind: output, shape index: {}]
  %s8 = sld [smem:[#allocation0]]
  $region46: #{decoder_stack_forward.21} parent=0
    _
  %s10 = ssub.s32 1, %s8
  %s11 = scalar_select 0, %s10, %s8
  // Predicated region
  $region2: #{decoder_stack_forward.21} parent=0 // pred_check
    _
  $region3: #{decoder_stack_forward.21} parent=0 // pred_check_branch
    %13 = sbr.rel (0) target = $region5
  $region4: #{decoder_stack_forward.21} parent=0 // pred_region
    _
  $region5: #{decoder_stack_forward.21} parent=0 // pred_fallthru
    _
  // Predicated region
  $region6: #{decoder_stack_forward.21} parent=0 // pred_check
    _
  $region7: #{decoder_stack_forward.21} parent=0 // pred_check_branch
    %15 = sbr.rel (0) target = $region9
  $region8: #{decoder_stack_forward.21} parent=0 // pred_region
    _
  $region9: #{decoder_stack_forward.21} parent=0 // pred_fallthru
    _
  // Predicated region
  $region10: #{decoder_stack_forward.21} parent=0 // pred_check
    _
  $region11: #{decoder_stack_forward.21} parent=0 // pred_check_branch
    %17 = sbr.rel (0) target = $region13
  $region12: #{decoder_stack_forward.21} parent=0 // pred_region
    _
  $region13: #{decoder_stack_forward.21} parent=0 // pred_fallthru
    _
  // Predicated region
  $region14: #{decoder_stack_forward.21} parent=0 // pred_check
    _
  $region15: #{decoder_stack_forward.21} parent=0 // pred_check_branch
    %19 = sbr.rel (0) target = $region17
  $region16: #{decoder_stack_forward.21} parent=0 // pred_region
    _
  $region17: #{decoder_stack_forward.21} parent=0 // pred_fallthru
    _
  // Predicated region
  $region18: #{decoder_stack_forward.21} parent=0 // pred_check
    _
  $region19: #{decoder_stack_forward.21} parent=0 // pred_check_branch
    %21 = sbr.rel (0) target = $region21
  $region20: #{decoder_stack_forward.21} parent=0 // pred_region
    _
  $region21: #{decoder_stack_forward.21} parent=0 // pred_fallthru
    _
  // Predicated region
  $region22: #{decoder_stack_forward.21} parent=0 // pred_check
    _
  $region23: #{decoder_stack_forward.21} parent=0 // pred_check_branch
    %23 = sbr.rel (0) target = $region25
  $region24: #{decoder_stack_forward.21} parent=0 // pred_region
    _
  $region25: #{decoder_stack_forward.21} parent=0 // pred_fallthru
    _
  // Predicated region
  $region26: #{decoder_stack_forward.21} parent=0 // pred_check
    _
  $region27: #{decoder_stack_forward.21} parent=0 // pred_check_branch
    %25 = sbr.rel (0) target = $region29
  $region28: #{decoder_stack_forward.21} parent=0 // pred_region
    _
  $region29: #{decoder_stack_forward.21} parent=0 // pred_fallthru
    _
  %p27 = scmp.eq.s32.totalorder 0, 0
  // Predicated region
  $region30: #{decoder_stack_forward.21} parent=0 // pred_check
    %p28 = pneg %p27
  $region31: #{decoder_stack_forward.21} parent=0 // pred_check_branch
    %30 = sbr.rel (%p28) target = $region33
  $region32: #{decoder_stack_forward.21} parent=0 // pred_region
    %vm31 = vcmask 261120
    %32 = vst.msk [vmem:[#allocation2] sm:$0xff] %vm31, 0.0
    %33 = vst.msk [vmem:[#allocation2 + $0x8] sm:$0xff] %vm31, 0.0
  $region33: #{decoder_stack_forward.21} parent=0 // pred_fallthru
    _
  %v34 = vld [vmem:[%s0] sm:$0xff]
  %v35 = vld [vmem:[%s0 + $0x8] sm:$0xff]
  %v36 = vpack.c.bf16 %v35, %v34
  %v37 = vld [vmem:[%s1] sm:$0xf]
  %v38 = vld [vmem:[%s1 + $0x4] sm:$0xf]
  %v39 = vld [vmem:[%s1 + $0x8] sm:$0xf]
  %v40 = vld [vmem:[%s1 + $0xc] sm:$0xf]
  %v41 = vld [vmem:[%s2] sm:$0x1]
  %v43 = vlaneseq
  %v44 = vshrl.u32 %v43, 7
  %v45 = vsub.s32 0, %v44
  %v46 = vrot.slane %v41, %v45
  %v52 = vunpack.c.l.b16 %v37
  %v53 = vunpack.c.l.b16 %v38
  %v54 = vunpack.c.l.b16 %v39
  %v55 = vunpack.c.l.b16 %v40
  %v56 = vpack.c.b16 %v53, %v52
  %v57 = vpack.c.b16 %v55, %v54
  %vm60 = vcmask 261120
  %v62 = vsel %vm60, %v36, 0
  %64 = vmatprep.subr.bf16.mxu0 0
  %65 = vmatpush1.bf16.msra.mxu0 %v56
  %66 = vmatprep.subr.bf16.mxu0 0
  %67 = vmatpush1.bf16.msra.mxu0 %v57
  %68 = vmatprep.subr.bf16.mxu0 0
  %69 = vmatpush1.bf16.msra.mxu0 0
  %70 = vmatprep.subr.bf16.mxu0 0
  %71 = vmatpush1.bf16.msra.mxu0 0
  %72 = vmatprep.subr.bf16.mxu0 0
  %73 = vmatpush1.bf16.msra.mxu0 0
  %74 = vmatprep.subr.bf16.mxu0 0
  %75 = vmatpush1.bf16.msra.mxu0 0
  %76 = vmatprep.subr.bf16.mxu0 0
  %77 = vmatpush1.bf16.msra.mxu0 0
  %78 = vmatprep.subr.bf16.mxu0 0
  %79 = vmatpush1.bf16.msra.mxu0 0
  %80 = vmatprep.subr.bf16.mxu0 0
  %81 = vmatpush1.bf16.msra.mxu0 0
  %82 = vmatprep.subr.bf16.mxu0 0
  %83 = vmatpush1.bf16.msra.mxu0 0
  %84 = vmatprep.subr.bf16.mxu0 0
  %85 = vmatpush1.bf16.msra.mxu0 0
  %86 = vmatprep.subr.bf16.mxu0 0
  %87 = vmatpush1.bf16.msra.mxu0 0
  %88 = vmatprep.subr.bf16.mxu0 0
  %89 = vmatpush1.bf16.msra.mxu0 0
  %90 = vmatprep.subr.bf16.mxu0 0
  %91 = vmatpush1.bf16.msra.mxu0 0
  %92 = vmatprep.subr.bf16.mxu0 0
  %93 = vmatpush1.bf16.msra.mxu0 0
  %94 = vmatprep.subr.bf16.mxu0 0
  %95 = vmatpush1.bf16.msra.mxu0 0
  %96 = vmatprep.mubr.bf16.mxu0 0
  %97 = vmatmul.mubr.bf16.gmra.mrb[0].mxu0 %v62
  %v98 = vpop.f32.mrb[0].mxu0
  %v99 = vadd.f32 %v46, %v98
  %v100 = vpop.f32.mrb[0].mxu0
  %v101 = vpop.f32.mrb[0].mxu0
  %v102 = vadd.f32 %v46, %v101
  %v103 = vpop.f32.mrb[0].mxu0
  %104 = vdwg.mxu0
  %v105 = vmax.f32 %v99, 0.0
  %v106 = vmax.f32 %v102, 0.0
  %v107 = vpack.c.bf16 %v106, %v105
  %v108 = vld [vmem:[#allocation2] sm:$0xff]
  %v109 = vld [vmem:[#allocation2 + $0x8] sm:$0xff]
  %v110 = vld [vmem:[%s3] sm:$0xf]
  %v111 = vld [vmem:[%s3 + $0x4] sm:$0xf]
  %v112 = vld [vmem:[%s3 + $0x8] sm:$0xf]
  %v113 = vld [vmem:[%s3 + $0xc] sm:$0xf]
  %v114 = vld [vmem:[%s3 + $0x10] sm:$0xf]
  %v115 = vld [vmem:[%s3 + $0x14] sm:$0xf]
  %v116 = vld [vmem:[%s3 + $0x18] sm:$0xf]
  %v117 = vld [vmem:[%s3 + $0x1c] sm:$0xf]
  %v126 = vunpack.c.l.b16 %v110
  %v127 = vunpack.c.l.b16 %v111
  %v128 = vunpack.c.l.b16 %v112
  %v129 = vunpack.c.l.b16 %v113
  %v130 = vunpack.c.l.b16 %v114
  %v131 = vunpack.c.l.b16 %v115
  %v132 = vunpack.c.l.b16 %v116
  %v133 = vunpack.c.l.b16 %v117
  %v134 = vpack.c.b16 %v127, %v126
  %v135 = vpack.c.b16 %v129, %v128
  %v136 = vpack.c.b16 %v131, %v130
  %v137 = vpack.c.b16 %v133, %v132
  %vm142 = vcmask 523264
  %v144 = vsel %vm142, %v107, 0
  %146 = vmatprep.subr.bf16.mxu0 0
  %147 = vmatpush1.bf16.msra.mxu0 %v134
  %148 = vmatprep.subr.bf16.mxu0 0
  %149 = vmatpush1.bf16.msra.mxu0 %v135
  %150 = vmatprep.subr.bf16.mxu0 0
  %151 = vmatpush1.bf16.msra.mxu0 %v136
  %152 = vmatprep.subr.bf16.mxu0 0
  %153 = vmatpush1.bf16.msra.mxu0 %v137
  %154 = vmatprep.subr.bf16.mxu0 0
  %155 = vmatpush1.bf16.msra.mxu0 0
  %156 = vmatprep.subr.bf16.mxu0 0
  %157 = vmatpush1.bf16.msra.mxu0 0
  %158 = vmatprep.subr.bf16.mxu0 0
  %159 = vmatpush1.bf16.msra.mxu0 0
  %160 = vmatprep.subr.bf16.mxu0 0
  %161 = vmatpush1.bf16.msra.mxu0 0
  %162 = vmatprep.subr.bf16.mxu0 0
  %163 = vmatpush1.bf16.msra.mxu0 0
  %164 = vmatprep.subr.bf16.mxu0 0
  %165 = vmatpush1.bf16.msra.mxu0 0
  %166 = vmatprep.subr.bf16.mxu0 0
  %167 = vmatpush1.bf16.msra.mxu0 0
  %168 = vmatprep.subr.bf16.mxu0 0
  %169 = vmatpush1.bf16.msra.mxu0 0
  %170 = vmatprep.subr.bf16.mxu0 0
  %171 = vmatpush1.bf16.msra.mxu0 0
  %172 = vmatprep.subr.bf16.mxu0 0
  %173 = vmatpush1.bf16.msra.mxu0 0
  %174 = vmatprep.subr.bf16.mxu0 0
  %175 = vmatpush1.bf16.msra.mxu0 0
  %176 = vmatprep.subr.bf16.mxu0 0
  %177 = vmatpush1.bf16.msra.mxu0 0
  %178 = vmatprep.mubr.bf16.mxu0 0
  %179 = vmatmul.mubr.bf16.gmra.mrb[0].mxu0 %v144
  %v180 = vpop.f32.mrb[0].mxu0
  %v181 = vadd.f32 0.0, %v180
  %v182 = vpop.f32.mrb[0].mxu0
  %v183 = vpop.f32.mrb[0].mxu0
  %v184 = vadd.f32 0.0, %v183
  %v185 = vpop.f32.mrb[0].mxu0
  %186 = vdwg.mxu0
  %v187 = vadd.f32 %v108, %v181
  %v188 = vadd.f32 %v109, %v184
  %189 = vst.msk [vmem:[#allocation2] sm:$0xff] %vm60, %v187
  %190 = vst.msk [vmem:[#allocation2 + $0x8] sm:$0xff] %vm60, %v188
  // Predicated region
  $region34: #{decoder_stack_forward.21} parent=0 // pred_check
    %p191 = pneg %p27
  $region35: #{decoder_stack_forward.21} parent=0 // pred_check_branch
    %193 = sbr.rel (%p191) target = $region37
  $region36: #{decoder_stack_forward.21} parent=0 // pred_region
    %v194 = vld [vmem:[#allocation2] sm:$0xff]
    %v195 = vld [vmem:[#allocation2 + $0x8] sm:$0xff]
    %v196 = vld [vmem:[%s4] sm:$0x1]
    %v198 = vlaneseq
    %v199 = vshrl.u32 %v198, 7
    %v200 = vsub.s32 0, %v199
    %v201 = vrot.slane %v196, %v200
    %v203 = vadd.f32 %v194, %v201
    %v204 = vadd.f32 %v195, %v201
    %v205 = vld [vmem:[%s0] sm:$0xff]
    %v206 = vld [vmem:[%s0 + $0x8] sm:$0xff]
    %v207 = vadd.f32 %v203, %v205
    %v208 = vadd.f32 %v204, %v206
    %v209 = vld [vmem:[%s5] sm:$0x1]
    %v210 = vld [vmem:[%s6] sm:$0x1]
    %v211 = vsel %vm60, %v207, 0.0
    %212 = vadd.xlane.f32.xlu0 %v211
    %v213 = vpop.xlane.xlu0 %212
    %v214 = vsel %vm60, %v208, 0.0
    %215 = vadd.xlane.f32.xlu0 %v214
    %v216 = vpop.xlane.xlu0 %215
    %v217 = vrcp.pop 32.0
    %v218 = vmul.f32 %v213, %v217
    %v219 = vmul.f32 %v216, %v217
    %v220 = vsub.f32 %v207, %v218
    %v221 = vsub.f32 %v208, %v219
    %v222 = vmul.f32 %v220, %v220
    %v223 = vmul.f32 %v221, %v221
    %v224 = vsel %vm60, %v222, 0.0
    %225 = vadd.xlane.f32.xlu0 %v224
    %v226 = vpop.xlane.xlu0 %225
    %v227 = vsel %vm60, %v223, 0.0
    %228 = vadd.xlane.f32.xlu0 %v227
    %v229 = vpop.xlane.xlu0 %228
    %v230 = vmul.f32 %v226, %v217
    %v231 = vmul.f32 %v229, %v217
    %v232 = vadd.f32 %v230, 1e-05
    %v233 = vadd.f32 %v231, 1e-05
    %v234 = vrsqrt.pop %v232
    %v235 = vrsqrt.pop %v233
    %v236 = vmul.f32 %v220, %v234
    %v237 = vmul.f32 %v221, %v235
    %v239 = vlaneseq
    %v240 = vshrl.u32 %v239, 7
    %v241 = vsub.s32 0, %v240
    %v242 = vrot.slane %v209, %v241
    %v244 = vmul.f32 %v236, %v242
    %v245 = vmul.f32 %v237, %v242
    %v247 = vlaneseq
    %v248 = vshrl.u32 %v247, 7
    %v249 = vsub.s32 0, %v248
    %v250 = vrot.slane %v210, %v249
    %v252 = vadd.f32 %v244, %v250
    %v253 = vadd.f32 %v245, %v250
    %254 = vst.msk [vmem:[%s7] sm:$0xff] %vm60, %v252
    %255 = vst.msk [vmem:[%s7 + $0x8] sm:$0xff] %vm60, %v253
  $region37: #{decoder_stack_forward.21} parent=0 // pred_fallthru
    _
  // Predicated region
  $region38: #{decoder_stack_forward.21} parent=0 // pred_check
    _
  $region39: #{decoder_stack_forward.21} parent=0 // pred_check_branch
    %257 = sbr.rel (0) target = $region41
  $region40: #{decoder_stack_forward.21} parent=0 // pred_region
    _
  $region41: #{decoder_stack_forward.21} parent=0 // pred_fallthru
    _
  // Predicated region
  $region42: #{decoder_stack_forward.21} parent=0 // pred_check
    _
  $region43: #{decoder_stack_forward.21} parent=0 // pred_check_branch
    %259 = sbr.rel (0) target = $region45
  $region44: #{decoder_stack_forward.21} parent=0 // pred_region
    _
  $region45: #{decoder_stack_forward.21} parent=0 // pred_fallthru
    _

// kernel: decoder_stack_forward.19
$region0: #{decoder_stack_forward.19}
  #allocation0 [shape = 'u32[]', space=smem, size = 0x4, offset = 0x4, fixed_abs, tag = 'smem constant byte address 0x4 - core index']
  #allocation1 [shape = 'u32[144,128]{1,0:T(1,128)}', space=vmem, size = 0x12000, scoped, tag = 'internal scratch']
  #allocation2 [shape = 'f32[4,8,1]{2,1,0:T(8,128)}', space=vmem, size = 0x4000, scoped, tag = 'scratch operand']
  #allocation3 [shape = 'f32[4,8,1]{2,1,0:T(8,128)}', space=vmem, size = 0x4000, scoped, tag = 'scratch operand']
  #allocation4 [shape = 'f32[4,8,8]{2,1,0:T(8,128)}', space=vmem, size = 0x4000, scoped, tag = 'scratch operand']
  %s0 = inlined_call_operand.vmem [shape: bf16[2,8,32], index: 0, kind: input, shape index: {}]
  %s1 = inlined_call_operand.vmem [shape: bf16[2,8,32], index: 1, kind: input, shape index: {}]
  %s2 = inlined_call_operand.vmem [shape: bf16[2,8,32], index: 2, kind: input, shape index: {}]
  %s3 = inlined_call_operand.vmem [shape: f32[2,1,8], index: 3, kind: input, shape index: {}]
  %s4 = inlined_call_operand.vmem [shape: bf16[2,8,32], index: 4, kind: output, shape index: {}]
  %s5 = sld [smem:[#allocation0]]
  $region57: #{decoder_stack_forward.19} parent=0
    _
  %s7 = ssub.s32 1, %s5
  %s8 = scalar_select 0, %s7, %s5
  loop: start=0, step=1, limit=4
  $region2: #{decoder_stack_forward.19} parent=0 // loop_pre_header
    _
  $region3: #{decoder_stack_forward.19} parent=0 // loop_header
    %s10 = sphi 0, %s14
    %p11 = scmp.ge.s32.totalorder %s10, 4
    %s17 = sphi 0, %s36
    %s18 = sphi 0, %s32
    %s19 = sphi 0, %s28
    %s20 = sphi 0, %s17
    %s21 = sphi 0, %s18
    %s22 = sphi 0, %s19
    %s23 = sphi 0, %s20
    %s24 = sphi 0, %s21
    %s25 = sphi 0, %s22
    %s41 = sphi 0, %s43
    %s44 = sphi 0, %s41
    %s45 = sphi 0, %s44
    %s61 = sphi 0, %s45
    %s69 = sphi 0, %s71
    %s72 = sphi 0, %s69
    %s73 = sphi 0, %s72
    %s89 = sphi 0, %s73
    %s97 = sphi 0, %s99
    %s100 = sphi 0, %s97
    %s101 = sphi 0, %s100
    %s117 = sphi 0, %s101
    %s125 = sphi 0, %s127
    %s128 = sphi 0, %s125
    %s129 = sphi 0, %s128
    %s145 = sphi 0, %s129
    %s153 = sphi 0, %s155
    %s156 = sphi 0, %s153
    %s157 = sphi 0, %s156
    %s173 = sphi 0, %s157
  $region4: #{decoder_stack_forward.19} parent=0 // loop_header_branch
    %13 = sbr.rel (%p11) target = $region8
  $region5: #{decoder_stack_forward.19} parent=0 // loop_body
    %s15 = ssub.s32 %s10, 1
    %s16 = ssub.s32 %s10, 2
    %s26 = sadd.s32 1, %s19
    %p27 = scmp.ge.s32.totalorder %s26, 1
    %s28 = scalar_select %p27, 0, %s26
    %s29 = sadd.s32 1, %s18
    %s30 = scalar_select %p27, %s29, %s18
    %p31 = scmp.ge.s32.totalorder %s30, 1
    %s32 = scalar_select %p31, 0, %s30
    %s33 = sadd.s32 1, %s17
    %s34 = scalar_select %p31, %s33, %s17
    %p35 = scmp.ge.s32.totalorder %s34, 2
    %s36 = scalar_select %p35, 0, %s34
    %s37 = ssub.s32 %s17, %s36
    %s38 = ssub.s32 %s18, %s32
    %s39 = sor.u32 %s37, %s38
    %p40 = scmp.eq.s32.totalorder %s39, 0
    %s42 = sadd.s32 %s41, 1
    %s43 = scalar_select %p40, %s41, %s42
    %p46 = pneg %p40
    %p47 = scmp.eq.s32.totalorder %s10, 1
    %p48 = por %p46, %p47
    %p49 = scmp.ne.s32.totalorder %s41, %s44
    %p50 = scmp.eq.s32.totalorder %s10, 0
    %p51 = por %p49, %p50
    %p52 = scmp.ne.s32.totalorder %s41, %s44
    %p53 = scmp.eq.s32.totalorder %s15, 1
    %p54 = por %p52, %p53
    %p55 = scmp.ne.s32.totalorder %s44, %s45
    %p56 = scmp.eq.s32.totalorder %s15, 0
    %p57 = por %p55, %p56
    %p58 = scmp.ne.s32.totalorder %s44, %s45
    %p59 = scmp.eq.s32.totalorder %s16, 1
    %p60 = por %p58, %p59
    %p62 = scmp.ne.s32.totalorder %s45, %s61
    %p63 = scmp.eq.s32.totalorder %s16, 0
    %p64 = por %p62, %p63
    %s65 = ssub.s32 %s17, %s36
    %s66 = ssub.s32 %s19, %s28
    %s67 = sor.u32 %s65, %s66
    %p68 = scmp.eq.s32.totalorder %s67, 0
    %s70 = sadd.s32 %s69, 1
    %s71 = scalar_select %p68, %s69, %s70
    %p74 = pneg %p68
    %p75 = scmp.eq.s32.totalorder %s10, 1
    %p76 = por %p74, %p75
    %p77 = scmp.ne.s32.totalorder %s69, %s72
    %p78 = scmp.eq.s32.totalorder %s10, 0
    %p79 = por %p77, %p78
    %p80 = scmp.ne.s32.totalorder %s69, %s72
    %p81 = scmp.eq.s32.totalorder %s15, 1
    %p82 = por %p80, %p81
    %p83 = scmp.ne.s32.totalorder %s72, %s73
    %p84 = scmp.eq.s32.totalorder %s15, 0
    %p85 = por %p83, %p84
    %p86 = scmp.ne.s32.totalorder %s72, %s73
    %p87 = scmp.eq.s32.totalorder %s16, 1
    %p88 = por %p86, %p87
    %p90 = scmp.ne.s32.totalorder %s73, %s89
    %p91 = scmp.eq.s32.totalorder %s16, 0
    %p92 = por %p90, %p91
    %s93 = ssub.s32 %s17, %s36
    %s94 = ssub.s32 %s19, %s28
    %s95 = sor.u32 %s93, %s94
    %p96 = scmp.eq.s32.totalorder %s95, 0
    %s98 = sadd.s32 %s97, 1
    %s99 = scalar_select %p96, %s97, %s98
    %p102 = pneg %p96
    %p103 = scmp.eq.s32.totalorder %s10, 1
    %p104 = por %p102, %p103
    %p105 = scmp.ne.s32.totalorder %s97, %s100
    %p106 = scmp.eq.s32.totalorder %s10, 0
    %p107 = por %p105, %p106
    %p108 = scmp.ne.s32.totalorder %s97, %s100
    %p109 = scmp.eq.s32.totalorder %s15, 1
    %p110 = por %p108, %p109
    %p111 = scmp.ne.s32.totalorder %s100, %s101
    %p112 = scmp.eq.s32.totalorder %s15, 0
    %p113 = por %p111, %p112
    %p114 = scmp.ne.s32.totalorder %s100, %s101
    %p115 = scmp.eq.s32.totalorder %s16, 1
    %p116 = por %p114, %p115
    %p118 = scmp.ne.s32.totalorder %s101, %s117
    %p119 = scmp.eq.s32.totalorder %s16, 0
    %p120 = por %p118, %p119
    %s121 = ssub.s32 %s17, %s36
    %s122 = ssub.s32 %s19, %s28
    %s123 = sor.u32 %s121, %s122
    %p124 = scmp.eq.s32.totalorder %s123, 0
    %s126 = sadd.s32 %s125, 1
    %s127 = scalar_select %p124, %s125, %s126
    %p130 = pneg %p124
    %p131 = scmp.eq.s32.totalorder %s10, 1
    %p132 = por %p130, %p131
    %p133 = scmp.ne.s32.totalorder %s125, %s128
    %p134 = scmp.eq.s32.totalorder %s10, 0
    %p135 = por %p133, %p134
    %p136 = scmp.ne.s32.totalorder %s125, %s128
    %p137 = scmp.eq.s32.totalorder %s15, 1
    %p138 = por %p136, %p137
    %p139 = scmp.ne.s32.totalorder %s128, %s129
    %p140 = scmp.eq.s32.totalorder %s15, 0
    %p141 = por %p139, %p140
    %p142 = scmp.ne.s32.totalorder %s128, %s129
    %p143 = scmp.eq.s32.totalorder %s16, 1
    %p144 = por %p142, %p143
    %p146 = scmp.ne.s32.totalorder %s129, %s145
    %p147 = scmp.eq.s32.totalorder %s16, 0
    %p148 = por %p146, %p147
    %s149 = ssub.s32 %s17, %s36
    %s150 = ssub.s32 %s18, %s32
    %s151 = sor.u32 %s149, %s150
    %p152 = scmp.eq.s32.totalorder %s151, 0
    %s154 = sadd.s32 %s153, 1
    %s155 = scalar_select %p152, %s153, %s154
    %p158 = pneg %p152
    %p159 = scmp.eq.s32.totalorder %s10, 1
    %p160 = por %p158, %p159
    %p161 = scmp.ne.s32.totalorder %s153, %s156
    %p162 = scmp.eq.s32.totalorder %s10, 0
    %p163 = por %p161, %p162
    %p164 = scmp.ne.s32.totalorder %s153, %s156
    %p165 = scmp.eq.s32.totalorder %s15, 1
    %p166 = por %p164, %p165
    %p167 = scmp.ne.s32.totalorder %s156, %s157
    %p168 = scmp.eq.s32.totalorder %s15, 0
    %p169 = por %p167, %p168
    %p170 = scmp.ne.s32.totalorder %s156, %s157
    %p171 = scmp.eq.s32.totalorder %s16, 1
    %p172 = por %p170, %p171
    %p174 = scmp.ne.s32.totalorder %s157, %s173
    %p175 = scmp.eq.s32.totalorder %s16, 0
    %p176 = por %p174, %p175
    %p177 = scmp.le.s32.totalorder 1, %s10
    %p178 = scmp.lt.s32.totalorder %s10, 3
    %p179 = pnand %p177, %p178
    %p180 = pneg %p179
    // Predicated region
    $region9: #{decoder_stack_forward.19} parent=5 // pred_check
      _
    $region10: #{decoder_stack_forward.19} parent=5 // pred_check_branch
      %182 = sbr.rel (%p179) target = $region12
    $region11: #{decoder_stack_forward.19} parent=5 // pred_region
      %s183 = ssub.s32 %s10, 1
    $region12: #{decoder_stack_forward.19} parent=5 // pred_fallthru
      _
    %p184 = scmp.lt.s32.totalorder %s10, 2
    // Predicated region
    $region13: #{decoder_stack_forward.19} parent=5 // pred_check
      %p185 = pneg %p184
    $region14: #{decoder_stack_forward.19} parent=5 // pred_check_branch
      %187 = sbr.rel (%p185) target = $region16
    $region15: #{decoder_stack_forward.19} parent=5 // pred_region
      // Predicated region
      $region17: #{decoder_stack_forward.19} parent=15 // pred_check
        %p188 = pneg %p51
      $region18: #{decoder_stack_forward.19} parent=15 // pred_check_branch
        %190 = sbr.rel (%p188) target = $region20
      $region19: #{decoder_stack_forward.19} parent=15 // pred_region
        %p191 = scmp.lt.s32.totalorder %s17, 1
        %s192 = scalar_select %p191, %s17, 1
        %p193 = scmp.lt.s32.totalorder %s18, 0
        %s194 = scalar_select %p193, %s18, 0
        %s195 = sadd.s32 %s194, %s192
        %s196 = smul.addr %s195, 4
        %s197 = scalar_lea.vmem %s0, %s196
      $region20: #{decoder_stack_forward.19} parent=15 // pred_fallthru
        _
      // Predicated region
      $region21: #{decoder_stack_forward.19} parent=15 // pred_check
        %p198 = pneg %p79
      $region22: #{decoder_stack_forward.19} parent=15 // pred_check_branch
        %200 = sbr.rel (%p198) target = $region24
      $region23: #{decoder_stack_forward.19} parent=15 // pred_region
        %p201 = scmp.lt.s32.totalorder %s17, 1
        %s202 = scalar_select %p201, %s17, 1
        %p203 = scmp.lt.s32.totalorder %s19, 0
        %s204 = scalar_select %p203, %s19, 0
        %s205 = sadd.s32 %s204, %s202
        %s206 = smul.addr %s205, 4
        %s207 = scalar_lea.vmem %s1, %s206
      $region24: #{decoder_stack_forward.19} parent=15 // pred_fallthru
        _
      // Predicated region
      $region25: #{decoder_stack_forward.19} parent=15 // pred_check
        %p208 = pneg %p107
      $region26: #{decoder_stack_forward.19} parent=15 // pred_check_branch
        %210 = sbr.rel (%p208) target = $region28
      $region27: #{decoder_stack_forward.19} parent=15 // pred_region
        %p211 = scmp.lt.s32.totalorder %s17, 1
        %s212 = scalar_select %p211, %s17, 1
        %p213 = scmp.lt.s32.totalorder %s19, 0
        %s214 = scalar_select %p213, %s19, 0
        %s215 = sadd.s32 %s214, %s212
        %s216 = smul.addr %s215, 4
        %s217 = scalar_lea.vmem %s2, %s216
      $region28: #{decoder_stack_forward.19} parent=15 // pred_fallthru
        _
      // Predicated region
      $region29: #{decoder_stack_forward.19} parent=15 // pred_check
        %p218 = pneg %p135
      $region30: #{decoder_stack_forward.19} parent=15 // pred_check_branch
        %220 = sbr.rel (%p218) target = $region32
      $region31: #{decoder_stack_forward.19} parent=15 // pred_region
        %p221 = scmp.lt.s32.totalorder %s17, 1
        %s222 = scalar_select %p221, %s17, 1
        %p223 = scmp.lt.s32.totalorder %s19, 0
        %s224 = scalar_select %p223, %s19, 0
        %s225 = sadd.s32 %s224, %s222
        %s226 = scalar_lea.vmem %s3, %s225
      $region32: #{decoder_stack_forward.19} parent=15 // pred_fallthru
        _
    $region16: #{decoder_stack_forward.19} parent=5 // pred_fallthru
      _
    %p227 = scmp.le.s32.totalorder 1, %s10
    %p228 = scmp.lt.s32.totalorder %s10, 3
    %p229 = pnand %p227, %p228
    %p230 = pneg %p229
    // Predicated region
    $region33: #{decoder_stack_forward.19} parent=5 // pred_check
      _
    $region34: #{decoder_stack_forward.19} parent=5 // pred_check_branch
      %232 = sbr.rel (%p229) target = $region36
    $region35: #{decoder_stack_forward.19} parent=5 // pred_region
      %s233 = ssub.s32 %s10, 1
      %p234 = scmp.lt.s32.totalorder %s20, 1
      %s235 = scalar_select %p234, %s20, 1
      %p236 = scmp.lt.s32.totalorder %s21, 0
      %s237 = scalar_select %p236, %s21, 0
      %s238 = sadd.s32 %s237, %s235
      %s239 = smul.addr %s238, 4
      %s240 = scalar_lea.vmem %s0, %s239
      %p241 = pneg %p57
      %p242 = pneg %p54
      %p243 = scmp.lt.s32.totalorder %s20, 1
      %s244 = scalar_select %p243, %s20, 1
      %p245 = scmp.lt.s32.totalorder %s22, 0
      %s246 = scalar_select %p245, %s22, 0
      %s247 = sadd.s32 %s246, %s244
      %s248 = smul.addr %s247, 4
      %s249 = scalar_lea.vmem %s1, %s248
      %p250 = pneg %p85
      %p251 = pneg %p82
      %p252 = scmp.lt.s32.totalorder %s20, 1
      %s253 = scalar_select %p252, %s20, 1
      %p254 = scmp.lt.s32.totalorder %s22, 0
      %s255 = scalar_select %p254, %s22, 0
      %s256 = sadd.s32 %s255, %s253
      %s257 = smul.addr %s256, 4
      %s258 = scalar_lea.vmem %s2, %s257
      %p259 = pneg %p113
      %p260 = pneg %p110
      %p261 = scmp.lt.s32.totalorder %s20, 1
      %s262 = scalar_select %p261, %s20, 1
      %p263 = scmp.lt.s32.totalorder %s22, 0
      %s264 = scalar_select %p263, %s22, 0
      %s265 = sadd.s32 %s264, %s262
      %s266 = scalar_lea.vmem %s3, %s265
      %p267 = pneg %p141
      %p268 = pneg %p138
      %p269 = pneg %p169
      %p270 = pneg %p166
      %p271 = scmp.lt.s32.totalorder %s20, 1
      %s272 = scalar_select %p271, %s20, 1
      %p273 = scmp.lt.s32.totalorder %s21, 0
      %s274 = scalar_select %p273, %s21, 0
      %s275 = sadd.s32 %s274, %s272
      %s276 = smul.addr %s275, 4
      %s277 = scalar_lea.vmem %s4, %s276
      %p278 = scmp.lt.s32.totalorder %s20, 1
      %s279 = scalar_select %p278, %s20, 1
      %p280 = scmp.lt.s32.totalorder %s21, 0
      %s281 = scalar_select %p280, %s21, 0
      %s282 = sadd.s32 %s281, %s279
      %s283 = smul.addr %s282, 4
      %s284 = scalar_lea.vmem %s0, %s283
      %p285 = scmp.lt.s32.totalorder %s20, 1
      %s286 = scalar_select %p285, %s20, 1
      %p287 = scmp.lt.s32.totalorder %s22, 0
      %s288 = scalar_select %p287, %s22, 0
      %s289 = sadd.s32 %s288, %s286
      %s290 = smul.addr %s289, 4
      %s291 = scalar_lea.vmem %s1, %s290
      %p292 = scmp.lt.s32.totalorder %s20, 1
      %s293 = scalar_select %p292, %s20, 1
      %p294 = scmp.lt.s32.totalorder %s22, 0
      %s295 = scalar_select %p294, %s22, 0
      %s296 = sadd.s32 %s295, %s293
      %s297 = smul.addr %s296, 4
      %s298 = scalar_lea.vmem %s2, %s297
      %p299 = scmp.lt.s32.totalorder %s20, 1
      %s300 = scalar_select %p299, %s20, 1
      %p301 = scmp.lt.s32.totalorder %s22, 0
      %s302 = scalar_select %p301, %s22, 0
      %s303 = sadd.s32 %s302, %s300
      %s304 = scalar_lea.vmem %s3, %s303
      %p305 = scmp.lt.s32.totalorder %s20, 1
      %s306 = scalar_select %p305, %s20, 1
      %p307 = scmp.lt.s32.totalorder %s21, 0
      %s308 = scalar_select %p307, %s21, 0
      %s309 = sadd.s32 %s308, %s306
      %s310 = smul.addr %s309, 4
      %s311 = scalar_lea.vmem %s4, %s310
      %p313 = scmp.eq.s32.totalorder %s22, 0
      // Predicated region
      $region37: #{decoder_stack_forward.19} parent=35 // pred_check
        %p314 = pneg %p313
      $region38: #{decoder_stack_forward.19} parent=35 // pred_check_branch
        %316 = sbr.rel (%p314) target = $region40
      $region39: #{decoder_stack_forward.19} parent=35 // pred_region
        %vm317 = vcmask 7168
        %318 = vst.msk [vmem:[#allocation2] sm:$0xff] %vm317, -inf
        %319 = vst.msk [vmem:[#allocation2 + $0x8] sm:$0xff] %vm317, -inf
        %320 = vst.msk [vmem:[#allocation2 + $0x10] sm:$0xff] %vm317, -inf
        %321 = vst.msk [vmem:[#allocation2 + $0x18] sm:$0xff] %vm317, -inf
        %322 = vst.msk [vmem:[#allocation3] sm:$0xff] %vm317, 0.0
        %323 = vst.msk [vmem:[#allocation3 + $0x8] sm:$0xff] %vm317, 0.0
        %324 = vst.msk [vmem:[#allocation3 + $0x10] sm:$0xff] %vm317, 0.0
        %325 = vst.msk [vmem:[#allocation3 + $0x18] sm:$0xff] %vm317, 0.0
        %vm326 = vcmask 64512
        %327 = vst.msk [vmem:[#allocation4] sm:$0xff] %vm326, 0.0
        %328 = vst.msk [vmem:[#allocation4 + $0x8] sm:$0xff] %vm326, 0.0
        %329 = vst.msk [vmem:[#allocation4 + $0x10] sm:$0xff] %vm326, 0.0
        %330 = vst.msk [vmem:[#allocation4 + $0x18] sm:$0xff] %vm326, 0.0
      $region40: #{decoder_stack_forward.19} parent=35 // pred_fallthru
        _
      %v331 = vld [vmem:[%s304] sm:$0x1]
      %v332 = vmul.f32 %v331, -1e+09
      %v333 = vld [vmem:[%s284] sm:$0xf]
      %v334 = vld [vmem:[%s291] sm:$0xf]
      %v335 = vld [vmem:[%s298] sm:$0xf]
      %vm336 = vcmask 64512
      %v338 = vsel %vm336, %v333, 0
      %v341 = vsel %vm336, %v334, 0
      %343 = vmatprep.subr.bf16.mxu0 0
      %344 = vmatpush1.bf16.xpose.msra.mxu0 %v341
      %345 = vmatprep.subr.bf16.mxu0 0
      %346 = vmatpush1.bf16.xpose.msra.mxu0 0
      %347 = vmatprep.subr.bf16.mxu0 0
      %348 = vmatpush1.bf16.xpose.msra.mxu0 0
      %349 = vmatprep.subr.bf16.mxu0 0
      %350 = vmatpush1.bf16.xpose.msra.mxu0 0
      %351 = vmatprep.subr.bf16.mxu0 0
      %352 = vmatpush1.bf16.xpose.msra.mxu0 0
      %353 = vmatprep.subr.bf16.mxu0 0
      %354 = vmatpush1.bf16.xpose.msra.mxu0 0
      %355 = vmatprep.subr.bf16.mxu0 0
      %356 = vmatpush1.bf16.xpose.msra.mxu0 0
      %357 = vmatprep.subr.bf16.mxu0 0
      %358 = vmatpush1.bf16.xpose.msra.mxu0 0
      %359 = vmatprep.subr.bf16.mxu0 0
      %360 = vmatpush1.bf16.xpose.msra.mxu0 0
      %361 = vmatprep.subr.bf16.mxu0 0
      %362 = vmatpush1.bf16.xpose.msra.mxu0 0
      %363 = vmatprep.subr.bf16.mxu0 0
      %364 = vmatpush1.bf16.xpose.msra.mxu0 0
      %365 = vmatprep.subr.bf16.mxu0 0
      %366 = vmatpush1.bf16.xpose.msra.mxu0 0
      %367 = vmatprep.subr.bf16.mxu0 0
      %368 = vmatpush1.bf16.xpose.msra.mxu0 0
      %369 = vmatprep.subr.bf16.mxu0 0
      %370 = vmatpush1.bf16.xpose.msra.mxu0 0
      %371 = vmatprep.subr.bf16.mxu0 0
      %372 = vmatpush1.bf16.xpose.msra.mxu0 0
      %373 = vmatprep.subr.bf16.mxu0 0
      %374 = vmatpush1.bf16.xpose.msra.mxu0 0
      %375 = vmatprep.mubr.bf16.mxu0 0
      %376 = vmatmul.mubr.bf16.gmra.mrb[0].mxu0 %v338
      %v377 = vpop.f32.mrb[0].mxu0
      %v378 = vadd.f32 0.0, %v377
      %v379 = vpop.f32.mrb[0].mxu0
      %v380 = vpop.f32.mrb[0].mxu0
      %v381 = vpop.f32.mrb[0].mxu0
      %382 = vdwg.mxu0
      %v383 = vmul.f32 %v378, 0.35355338
      %v385 = vlaneseq
      %v386 = vshrl.u32 %v385, 7
      %v387 = vsub.s32 0, %v386
      %v388 = vrot.slane %v332, %v387
      %v390 = vadd.f32 %v383, %v388
      %v391 = vld [vmem:[#allocation2] sm:$0xff]
      %v392 = vsel %vm336, %v390, -inf
      %393 = vmax.xlane.f32.xlu0 %v392
      %v394 = vpop.xlane.xlu0 %393
      %v395 = vmax.f32 %v391, %v394
      %v396 = vsub.f32 %v391, %v395
      %v397 = vmul.f32 %v396, 1.442695
      %v398 = vpow.pop %v397
      %400 = vset.pattern.permute.xlu0 0
      %401 = vperm.xlu0 %400, %v395
      %v402 = vpop.permute.xlu0 %401
      %v404 = vsub.f32 %v390, %v402
      %v405 = vmul.f32 %v404, 1.442695
      %v406 = vpow.pop %v405
      %v407 = vld [vmem:[#allocation3] sm:$0xff]
      %v408 = vmul.f32 %v398, %v407
      %v409 = vsel %vm336, %v406, 0.0
      %410 = vadd.xlane.f32.xlu0 %v409
      %v411 = vpop.xlane.xlu0 %410
      %v412 = vadd.f32 %v408, %v411
      %vm413 = vcmask 7168
      %414 = vst.msk [vmem:[#allocation3] sm:$0xff] %vm413, %v412
      %v415 = vld [vmem:[#allocation4] sm:$0xff]
      %417 = vset.pattern.permute.xlu0 0
      %418 = vperm.xlu0 %417, %v398
      %v419 = vpop.permute.xlu0 %418
      %v421 = vmul.f32 %v419, %v415
      %v422 = vpack.c.bf16 %v406, %v406
      %v424 = vsel %vm336, %v422, 0
      %vm426 = vcmask 1043456
      %v428 = vsel %vm426, %v335, 0
      %430 = vmatprep.subr.bf16.mxu0 0
      %431 = vmatpush1.bf16.msra.mxu0 %v428
      %432 = vmatprep.subr.bf16.mxu0 0
      %433 = vmatpush1.bf16.msra.mxu0 0
      %434 = vmatprep.subr.bf16.mxu0 0
      %435 = vmatpush1.bf16.msra.mxu0 0
      %436 = vmatprep.subr.bf16.mxu0 0
      %437 = vmatpush1.bf16.msra.mxu0 0
      %438 = vmatprep.subr.bf16.mxu0 0
      %439 = vmatpush1.bf16.msra.mxu0 0
      %440 = vmatprep.subr.bf16.mxu0 0
      %441 = vmatpush1.bf16.msra.mxu0 0
      %442 = vmatprep.subr.bf16.mxu0 0
      %443 = vmatpush1.bf16.msra.mxu0 0
      %444 = vmatprep.subr.bf16.mxu0 0
      %445 = vmatpush1.bf16.msra.mxu0 0
      %446 = vmatprep.subr.bf16.mxu0 0
      %447 = vmatpush1.bf16.msra.mxu0 0
      %448 = vmatprep.subr.bf16.mxu0 0
      %449 = vmatpush1.bf16.msra.mxu0 0
      %450 = vmatprep.subr.bf16.mxu0 0
      %451 = vmatpush1.bf16.msra.mxu0 0
      %452 = vmatprep.subr.bf16.mxu0 0
      %453 = vmatpush1.bf16.msra.mxu0 0
      %454 = vmatprep.subr.bf16.mxu0 0
      %455 = vmatpush1.bf16.msra.mxu0 0
      %456 = vmatprep.subr.bf16.mxu0 0
      %457 = vmatpush1.bf16.msra.mxu0 0
      %458 = vmatprep.subr.bf16.mxu0 0
      %459 = vmatpush1.bf16.msra.mxu0 0
      %460 = vmatprep.subr.bf16.mxu0 0
      %461 = vmatpush1.bf16.msra.mxu0 0
      %462 = vmatprep.mubr.bf16.mxu0 0
      %463 = vmatmul.mubr.bf16.gmra.mrb[0].mxu0 %v424
      %v464 = vpop.f32.mrb[0].mxu0
      %v465 = vadd.f32 0.0, %v464
      %v466 = vpop.f32.mrb[0].mxu0
      %v467 = vpop.f32.mrb[0].mxu0
      %v468 = vpop.f32.mrb[0].mxu0
      %469 = vdwg.mxu0
      %v470 = vadd.f32 %v421, %v465
      %471 = vst.msk [vmem:[#allocation4] sm:$0xff] %vm336, %v470
      %472 = vst.msk [vmem:[#allocation2] sm:$0xff] %vm413, %v395
      %v473 = vld [vmem:[%s284] sm:$0xf]
      %v474 = vld [vmem:[%s291] sm:$0xf]
      %v475 = vld [vmem:[%s298] sm:$0xf]
      %v477 = vunpack.c.l.b16 %v473
      %v478 = vpack.c.b16 %v477, %v477
      %479 = vrot.lane.b32.xlu0 %v478, 120
      %v480 = vpop.permute.xlu0 %479
      %v482 = vunpack.c.l.b16 %v474
      %v483 = vpack.c.b16 %v482, %v482
      %484 = vrot.lane.b32.xlu0 %v483, 120
      %v485 = vpop.permute.xlu0 %484
      %v487 = vsel %vm336, %v480, 0
      %v490 = vsel %vm336, %v485, 0
      %492 = vmatprep.subr.bf16.mxu0 0
      %493 = vmatpush1.bf16.xpose.msra.mxu0 %v490
      %494 = vmatprep.subr.bf16.mxu0 0
      %495 = vmatpush1.bf16.xpose.msra.mxu0 0
      %496 = vmatprep.subr.bf16.mxu0 0
      %497 = vmatpush1.bf16.xpose.msra.mxu0 0
      %498 = vmatprep.subr.bf16.mxu0 0
      %499 = vmatpush1.bf16.xpose.msra.mxu0 0
      %500 = vmatprep.subr.bf16.mxu0 0
      %501 = vmatpush1.bf16.xpose.msra.mxu0 0
      %502 = vmatprep.subr.bf16.mxu0 0
      %503 = vmatpush1.bf16.xpose.msra.mxu0 0
      %504 = vmatprep.subr.bf16.mxu0 0
      %505 = vmatpush1.bf16.xpose.msra.mxu0 0
      %506 = vmatprep.subr.bf16.mxu0 0
      %507 = vmatpush1.bf16.xpose.msra.mxu0 0
      %508 = vmatprep.subr.bf16.mxu0 0
      %509 = vmatpush1.bf16.xpose.msra.mxu0 0
      %510 = vmatprep.subr.bf16.mxu0 0
      %511 = vmatpush1.bf16.xpose.msra.mxu0 0
      %512 = vmatprep.subr.bf16.mxu0 0
      %513 = vmatpush1.bf16.xpose.msra.mxu0 0
      %514 = vmatprep.subr.bf16.mxu0 0
      %515 = vmatpush1.bf16.xpose.msra.mxu0 0
      %516 = vmatprep.subr.bf16.mxu0 0
      %517 = vmatpush1.bf16.xpose.msra.mxu0 0
      %518 = vmatprep.subr.bf16.mxu0 0
      %519 = vmatpush1.bf16.xpose.msra.mxu0 0
      %520 = vmatprep.subr.bf16.mxu0 0
      %521 = vmatpush1.bf16.xpose.msra.mxu0 0
      %522 = vmatprep.subr.bf16.mxu0 0
      %523 = vmatpush1.bf16.xpose.msra.mxu0 0
      %524 = vmatprep.mubr.bf16.mxu0 0
      %525 = vmatmul.mubr.bf16.gmra.mrb[0].mxu0 %v487
      %v526 = vpop.f32.mrb[0].mxu0
      %v527 = vadd.f32 0.0, %v526
      %v528 = vpop.f32.mrb[0].mxu0
      %v529 = vpop.f32.mrb[0].mxu0
      %v530 = vpop.f32.mrb[0].mxu0
      %531 = vdwg.mxu0
      %v532 = vmul.f32 %v527, 0.35355338
      %v533 = vadd.f32 %v532, %v388
      %s534 = scalar_lea.vmem [#allocation2], 8
      %v535 = vld [vmem:[%s534] sm:$0xff]
      %v536 = vsel %vm336, %v533, -inf
      %537 = vmax.xlane.f32.xlu0 %v536
      %v538 = vpop.xlane.xlu0 %537
      %v539 = vmax.f32 %v535, %v538
      %v540 = vsub.f32 %v535, %v539
      %v541 = vmul.f32 %v540, 1.442695
      %v542 = vpow.pop %v541
      %544 = vset.pattern.permute.xlu0 0
      %545 = vperm.xlu0 %544, %v539
      %v546 = vpop.permute.xlu0 %545
      %v548 = vsub.f32 %v533, %v546
      %v549 = vmul.f32 %v548, 1.442695
      %v550 = vpow.pop %v549
      %s551 = scalar_lea.vmem [#allocation3], 8
      %v552 = vld [vmem:[%s551] sm:$0xff]
      %v553 = vmul.f32 %v542, %v552
      %v554 = vsel %vm336, %v550, 0.0
      %555 = vadd.xlane.f32.xlu0 %v554
      %v556 = vpop.xlane.xlu0 %555
      %v557 = vadd.f32 %v553, %v556
      %558 = vst.msk [vmem:[%s551] sm:$0xff] %vm413, %v557
      %s559 = scalar_lea.vmem [#allocation4], 8
      %v560 = vld [vmem:[%s559] sm:$0xff]
      %562 = vset.pattern.permute.xlu0 0
      %563 = vperm.xlu0 %562, %v542
      %v564 = vpop.permute.xlu0 %563
      %v566 = vmul.f32 %v564, %v560
      %v567 = vpack.c.bf16 %v550, %v550
      %v569 = vunpack.c.l.b16 %v475
      %v570 = vpack.c.b16 %v569, %v569
      %571 = vrot.lane.b32.xlu0 %v570, 120
      %v572 = vpop.permute.xlu0 %571
      %v574 = vsel %vm336, %v567, 0
      %v577 = vsel %vm426, %v572, 0
      %579 = vmatprep.subr.bf16.mxu0 0
      %580 = vmatpush1.bf16.msra.mxu0 %v577
      %581 = vmatprep.subr.bf16.mxu0 0
      %582 = vmatpush1.bf16.msra.mxu0 0
      %583 = vmatprep.subr.bf16.mxu0 0
      %584 = vmatpush1.bf16.msra.mxu0 0
      %585 = vmatprep.subr.bf16.mxu0 0
      %586 = vmatpush1.bf16.msra.mxu0 0
      %587 = vmatprep.subr.bf16.mxu0 0
      %588 = vmatpush1.bf16.msra.mxu0 0
      %589 = vmatprep.subr.bf16.mxu0 0
      %590 = vmatpush1.bf16.msra.mxu0 0
      %591 = vmatprep.subr.bf16.mxu0 0
      %592 = vmatpush1.bf16.msra.mxu0 0
      %593 = vmatprep.subr.bf16.mxu0 0
      %594 = vmatpush1.bf16.msra.mxu0 0
      %595 = vmatprep.subr.bf16.mxu0 0
      %596 = vmatpush1.bf16.msra.mxu0 0
      %597 = vmatprep.subr.bf16.mxu0 0
      %598 = vmatpush1.bf16.msra.mxu0 0
      %599 = vmatprep.subr.bf16.mxu0 0
      %600 = vmatpush1.bf16.msra.mxu0 0
      %601 = vmatprep.subr.bf16.mxu0 0
      %602 = vmatpush1.bf16.msra.mxu0 0
      %603 = vmatprep.subr.bf16.mxu0 0
      %604 = vmatpush1.bf16.msra.mxu0 0
      %605 = vmatprep.subr.bf16.mxu0 0
      %606 = vmatpush1.bf16.msra.mxu0 0
      %607 = vmatprep.subr.bf16.mxu0 0
      %608 = vmatpush1.bf16.msra.mxu0 0
      %609 = vmatprep.subr.bf16.mxu0 0
      %610 = vmatpush1.bf16.msra.mxu0 0
      %611 = vmatprep.mubr.bf16.mxu0 0
      %612 = vmatmul.mubr.bf16.gmra.mrb[0].mxu0 %v574
      %v613 = vpop.f32.mrb[0].mxu0
      %v614 = vadd.f32 0.0, %v613
      %v615 = vpop.f32.mrb[0].mxu0
      %v616 = vpop.f32.mrb[0].mxu0
      %v617 = vpop.f32.mrb[0].mxu0
      %618 = vdwg.mxu0
      %v619 = vadd.f32 %v566, %v614
      %620 = vst.msk [vmem:[%s559] sm:$0xff] %vm336, %v619
      %621 = vst.msk [vmem:[%s534] sm:$0xff] %vm413, %v539
      %v622 = vld [vmem:[%s284] sm:$0xf]
      %v623 = vld [vmem:[%s291] sm:$0xf]
      %v624 = vld [vmem:[%s298] sm:$0xf]
      %v626 = vunpack.c.l.b16 %v622
      %v627 = vpack.c.b16 %v626, %v626
      %628 = vrot.lane.b32.xlu0 %v627, 112
      %v629 = vpop.permute.xlu0 %628
      %v631 = vunpack.c.l.b16 %v623
      %v632 = vpack.c.b16 %v631, %v631
      %633 = vrot.lane.b32.xlu0 %v632, 112
      %v634 = vpop.permute.xlu0 %633
      %v636 = vsel %vm336, %v629, 0
      %v639 = vsel %vm336, %v634, 0
      %641 = vmatprep.subr.bf16.mxu0 0
      %642 = vmatpush1.bf16.xpose.msra.mxu0 %v639
      %643 = vmatprep.subr.bf16.mxu0 0
      %644 = vmatpush1.bf16.xpose.msra.mxu0 0
      %645 = vmatprep.subr.bf16.mxu0 0
      %646 = vmatpush1.bf16.xpose.msra.mxu0 0
      %647 = vmatprep.subr.bf16.mxu0 0
      %648 = vmatpush1.bf16.xpose.msra.mxu0 0
      %649 = vmatprep.subr.bf16.mxu0 0
      %650 = vmatpush1.bf16.xpose.msra.mxu0 0
      %651 = vmatprep.subr.bf16.mxu0 0
      %652 = vmatpush1.bf16.xpose.msra.mxu0 0
      %653 = vmatprep.subr.bf16.mxu0 0
      %654 = vmatpush1.bf16.xpose.msra.mxu0 0
      %655 = vmatprep.subr.bf16.mxu0 0
      %656 = vmatpush1.bf16.xpose.msra.mxu0 0
      %657 = vmatprep.subr.bf16.mxu0 0
      %658 = vmatpush1.bf16.xpose.msra.mxu0 0
      %659 = vmatprep.subr.bf16.mxu0 0
      %660 = vmatpush1.bf16.xpose.msra.mxu0 0
      %661 = vmatprep.subr.bf16.mxu0 0
      %662 = vmatpush1.bf16.xpose.msra.mxu0 0
      %663 = vmatprep.subr.bf16.mxu0 0
      %664 = vmatpush1.bf16.xpose.msra.mxu0 0
      %665 = vmatprep.subr.bf16.mxu0 0
      %666 = vmatpush1.bf16.xpose.msra.mxu0 0
      %667 = vmatprep.subr.bf16.mxu0 0
      %668 = vmatpush1.bf16.xpose.msra.mxu0 0
      %669 = vmatprep.subr.bf16.mxu0 0
      %670 = vmatpush1.bf16.xpose.msra.mxu0 0
      %671 = vmatprep.subr.bf16.mxu0 0
      %672 = vmatpush1.bf16.xpose.msra.mxu0 0
      %673 = vmatprep.mubr.bf16.mxu0 0
      %674 = vmatmul.mubr.bf16.gmra.mrb[0].mxu0 %v636
      %v675 = vpop.f32.mrb[0].mxu0
      %v676 = vadd.f32 0.0, %v675
      %v677 = vpop.f32.mrb[0].mxu0
      %v678 = vpop.f32.mrb[0].mxu0
      %v679 = vpop.f32.mrb[0].mxu0
      %680 = vdwg.mxu0
      %v681 = vmul.f32 %v676, 0.35355338
      %v682 = vadd.f32 %v681, %v388
      %s683 = scalar_lea.vmem [#allocation2], 16
      %v684 = vld [vmem:[%s683] sm:$0xff]
      %v685 = vsel %vm336, %v682, -inf
      %686 = vmax.xlane.f32.xlu0 %v685
      %v687 = vpop.xlane.xlu0 %686
      %v688 = vmax.f32 %v684, %v687
      %v689 = vsub.f32 %v684, %v688
      %v690 = vmul.f32 %v689, 1.442695
      %v691 = vpow.pop %v690
      %693 = vset.pattern.permute.xlu0 0
      %694 = vperm.xlu0 %693, %v688
      %v695 = vpop.permute.xlu0 %694
      %v697 = vsub.f32 %v682, %v695
      %v698 = vmul.f32 %v697, 1.442695
      %v699 = vpow.pop %v698
      %s700 = scalar_lea.vmem [#allocation3], 16
      %v701 = vld [vmem:[%s700] sm:$0xff]
      %v702 = vmul.f32 %v691, %v701
      %v703 = vsel %vm336, %v699, 0.0
      %704 = vadd.xlane.f32.xlu0 %v703
      %v705 = vpop.xlane.xlu0 %704
      %v706 = vadd.f32 %v702, %v705
      %707 = vst.msk [vmem:[%s700] sm:$0xff] %vm413, %v706
      %s708 = scalar_lea.vmem [#allocation4], 16
      %v709 = vld [vmem:[%s708] sm:$0xff]
      %711 = vset.pattern.permute.xlu0 0
      %712 = vperm.xlu0 %711, %v691
      %v713 = vpop.permute.xlu0 %712
      %v715 = vmul.f32 %v713, %v709
      %v716 = vpack.c.bf16 %v699, %v699
      %v718 = vunpack.c.l.b16 %v624
      %v719 = vpack.c.b16 %v718, %v718
      %720 = vrot.lane.b32.xlu0 %v719, 112
      %v721 = vpop.permute.xlu0 %720
      %v723 = vsel %vm336, %v716, 0
      %v726 = vsel %vm426, %v721, 0
      %728 = vmatprep.subr.bf16.mxu0 0
      %729 = vmatpush1.bf16.msra.mxu0 %v726
      %730 = vmatprep.subr.bf16.mxu0 0
      %731 = vmatpush1.bf16.msra.mxu0 0
      %732 = vmatprep.subr.bf16.mxu0 0
      %733 = vmatpush1.bf16.msra.mxu0 0
      %734 = vmatprep.subr.bf16.mxu0 0
      %735 = vmatpush1.bf16.msra.mxu0 0
      %736 = vmatprep.subr.bf16.mxu0 0
      %737 = vmatpush1.bf16.msra.mxu0 0
      %738 = vmatprep.subr.bf16.mxu0 0
      %739 = vmatpush1.bf16.msra.mxu0 0
      %740 = vmatprep.subr.bf16.mxu0 0
      %741 = vmatpush1.bf16.msra.mxu0 0
      %742 = vmatprep.subr.bf16.mxu0 0
      %743 = vmatpush1.bf16.msra.mxu0 0
      %744 = vmatprep.subr.bf16.mxu0 0
      %745 = vmatpush1.bf16.msra.mxu0 0
      %746 = vmatprep.subr.bf16.mxu0 0
      %747 = vmatpush1.bf16.msra.mxu0 0
      %748 = vmatprep.subr.bf16.mxu0 0
      %749 = vmatpush1.bf16.msra.mxu0 0
      %750 = vmatprep.subr.bf16.mxu0 0
      %751 = vmatpush1.bf16.msra.mxu0 0
      %752 = vmatprep.subr.bf16.mxu0 0
      %753 = vmatpush1.bf16.msra.mxu0 0
      %754 = vmatprep.subr.bf16.mxu0 0
      %755 = vmatpush1.bf16.msra.mxu0 0
      %756 = vmatprep.subr.bf16.mxu0 0
      %757 = vmatpush1.bf16.msra.mxu0 0
      %758 = vmatprep.subr.bf16.mxu0 0
      %759 = vmatpush1.bf16.msra.mxu0 0
      %760 = vmatprep.mubr.bf16.mxu0 0
      %761 = vmatmul.mubr.bf16.gmra.mrb[0].mxu0 %v723
      %v762 = vpop.f32.mrb[0].mxu0
      %v763 = vadd.f32 0.0, %v762
      %v764 = vpop.f32.mrb[0].mxu0
      %v765 = vpop.f32.mrb[0].mxu0
      %v766 = vpop.f32.mrb[0].mxu0
      %767 = vdwg.mxu0
      %v768 = vadd.f32 %v715, %v763
      %769 = vst.msk [vmem:[%s708] sm:$0xff] %vm336, %v768
      %770 = vst.msk [vmem:[%s683] sm:$0xff] %vm413, %v688
      %v771 = vld [vmem:[%s284] sm:$0xf]
      %v772 = vld [vmem:[%s291] sm:$0xf]
      %v773 = vld [vmem:[%s298] sm:$0xf]
      %v775 = vunpack.c.l.b16 %v771
      %v776 = vpack.c.b16 %v775, %v775
      %777 = vrot.lane.b32.xlu0 %v776, 104
      %v778 = vpop.permute.xlu0 %777
      %v780 = vunpack.c.l.b16 %v772
      %v781 = vpack.c.b16 %v780, %v780
      %782 = vrot.lane.b32.xlu0 %v781, 104
      %v783 = vpop.permute.xlu0 %782
      %v785 = vsel %vm336, %v778, 0
      %v788 = vsel %vm336, %v783, 0
      %790 = vmatprep.subr.bf16.mxu0 0
      %791 = vmatpush1.bf16.xpose.msra.mxu0 %v788
      %792 = vmatprep.subr.bf16.mxu0 0
      %793 = vmatpush1.bf16.xpose.msra.mxu0 0
      %794 = vmatprep.subr.bf16.mxu0 0
      %795 = vmatpush1.bf16.xpose.msra.mxu0 0
      %796 = vmatprep.subr.bf16.mxu0 0
      %797 = vmatpush1.bf16.xpose.msra.mxu0 0
      %798 = vmatprep.subr.bf16.mxu0 0
      %799 = vmatpush1.bf16.xpose.msra.mxu0 0
      %800 = vmatprep.subr.bf16.mxu0 0
      %801 = vmatpush1.bf16.xpose.msra.mxu0 0
      %802 = vmatprep.subr.bf16.mxu0 0
      %803 = vmatpush1.bf16.xpose.msra.mxu0 0
      %804 = vmatprep.subr.bf16.mxu0 0
      %805 = vmatpush1.bf16.xpose.msra.mxu0 0
      %806 = vmatprep.subr.bf16.mxu0 0
      %807 = vmatpush1.bf16.xpose.msra.mxu0 0
      %808 = vmatprep.subr.bf16.mxu0 0
      %809 = vmatpush1.bf16.xpose.msra.mxu0 0
      %810 = vmatprep.subr.bf16.mxu0 0
      %811 = vmatpush1.bf16.xpose.msra.mxu0 0
      %812 = vmatprep.subr.bf16.mxu0 0
      %813 = vmatpush1.bf16.xpose.msra.mxu0 0
      %814 = vmatprep.subr.bf16.mxu0 0
      %815 = vmatpush1.bf16.xpose.msra.mxu0 0
      %816 = vmatprep.subr.bf16.mxu0 0
      %817 = vmatpush1.bf16.xpose.msra.mxu0 0
      %818 = vmatprep.subr.bf16.mxu0 0
      %819 = vmatpush1.bf16.xpose.msra.mxu0 0
      %820 = vmatprep.subr.bf16.mxu0 0
      %821 = vmatpush1.bf16.xpose.msra.mxu0 0
      %822 = vmatprep.mubr.bf16.mxu0 0
      %823 = vmatmul.mubr.bf16.gmra.mrb[0].mxu0 %v785
      %v824 = vpop.f32.mrb[0].mxu0
      %v825 = vadd.f32 0.0, %v824
      %v826 = vpop.f32.mrb[0].mxu0
      %v827 = vpop.f32.mrb[0].mxu0
      %v828 = vpop.f32.mrb[0].mxu0
      %829 = vdwg.mxu0
      %v830 = vmul.f32 %v825, 0.35355338
      %v831 = vadd.f32 %v830, %v388
      %s832 = scalar_lea.vmem [#allocation2], 24
      %v833 = vld [vmem:[%s832] sm:$0xff]
      %v834 = vsel %vm336, %v831, -inf
      %835 = vmax.xlane.f32.xlu0 %v834
      %v836 = vpop.xlane.xlu0 %835
      %v837 = vmax.f32 %v833, %v836
      %v838 = vsub.f32 %v833, %v837
      %v839 = vmul.f32 %v838, 1.442695
      %v840 = vpow.pop %v839
      %842 = vset.pattern.permute.xlu0 0
      %843 = vperm.xlu0 %842, %v837
      %v844 = vpop.permute.xlu0 %843
      %v846 = vsub.f32 %v831, %v844
      %v847 = vmul.f32 %v846, 1.442695
      %v848 = vpow.pop %v847
      %s849 = scalar_lea.vmem [#allocation3], 24
      %v850 = vld [vmem:[%s849] sm:$0xff]
      %v851 = vmul.f32 %v840, %v850
      %v852 = vsel %vm336, %v848, 0.0
      %853 = vadd.xlane.f32.xlu0 %v852
      %v854 = vpop.xlane.xlu0 %853
      %v855 = vadd.f32 %v851, %v854
      %856 = vst.msk [vmem:[%s849] sm:$0xff] %vm413, %v855
      %s857 = scalar_lea.vmem [#allocation4], 24
      %v858 = vld [vmem:[%s857] sm:$0xff]
      %860 = vset.pattern.permute.xlu0 0
      %861 = vperm.xlu0 %860, %v840
      %v862 = vpop.permute.xlu0 %861
      %v864 = vmul.f32 %v862, %v858
      %v865 = vpack.c.bf16 %v848, %v848
      %v867 = vunpack.c.l.b16 %v773
      %v868 = vpack.c.b16 %v867, %v867
      %869 = vrot.lane.b32.xlu0 %v868, 104
      %v870 = vpop.permute.xlu0 %869
      %v872 = vsel %vm336, %v865, 0
      %v875 = vsel %vm426, %v870, 0
      %877 = vmatprep.subr.bf16.mxu0 0
      %878 = vmatpush1.bf16.msra.mxu0 %v875
      %879 = vmatprep.subr.bf16.mxu0 0
      %880 = vmatpush1.bf16.msra.mxu0 0
      %881 = vmatprep.subr.bf16.mxu0 0
      %882 = vmatpush1.bf16.msra.mxu0 0
      %883 = vmatprep.subr.bf16.mxu0 0
      %884 = vmatpush1.bf16.msra.mxu0 0
      %885 = vmatprep.subr.bf16.mxu0 0
      %886 = vmatpush1.bf16.msra.mxu0 0
      %887 = vmatprep.subr.bf16.mxu0 0
      %888 = vmatpush1.bf16.msra.mxu0 0
      %889 = vmatprep.subr.bf16.mxu0 0
      %890 = vmatpush1.bf16.msra.mxu0 0
      %891 = vmatprep.subr.bf16.mxu0 0
      %892 = vmatpush1.bf16.msra.mxu0 0
      %893 = vmatprep.subr.bf16.mxu0 0
      %894 = vmatpush1.bf16.msra.mxu0 0
      %895 = vmatprep.subr.bf16.mxu0 0
      %896 = vmatpush1.bf16.msra.mxu0 0
      %897 = vmatprep.subr.bf16.mxu0 0
      %898 = vmatpush1.bf16.msra.mxu0 0
      %899 = vmatprep.subr.bf16.mxu0 0
      %900 = vmatpush1.bf16.msra.mxu0 0
      %901 = vmatprep.subr.bf16.mxu0 0
      %902 = vmatpush1.bf16.msra.mxu0 0
      %903 = vmatprep.subr.bf16.mxu0 0
      %904 = vmatpush1.bf16.msra.mxu0 0
      %905 = vmatprep.subr.bf16.mxu0 0
      %906 = vmatpush1.bf16.msra.mxu0 0
      %907 = vmatprep.subr.bf16.mxu0 0
      %908 = vmatpush1.bf16.msra.mxu0 0
      %909 = vmatprep.mubr.bf16.mxu0 0
      %910 = vmatmul.mubr.bf16.gmra.mrb[0].mxu0 %v872
      %v911 = vpop.f32.mrb[0].mxu0
      %v912 = vadd.f32 0.0, %v911
      %v913 = vpop.f32.mrb[0].mxu0
      %v914 = vpop.f32.mrb[0].mxu0
      %v915 = vpop.f32.mrb[0].mxu0
      %916 = vdwg.mxu0
      %v917 = vadd.f32 %v864, %v912
      %918 = vst.msk [vmem:[%s857] sm:$0xff] %vm336, %v917
      %919 = vst.msk [vmem:[%s832] sm:$0xff] %vm413, %v837
      // Predicated region
      $region41: #{decoder_stack_forward.19} parent=35 // pred_check
        %p920 = pneg %p313
      $region42: #{decoder_stack_forward.19} parent=35 // pred_check_branch
        %922 = sbr.rel (%p920) target = $region44
      $region43: #{decoder_stack_forward.19} parent=35 // pred_region
        %v923 = vld [vmem:[#allocation4] sm:$0xff]
        %v924 = vld [vmem:[#allocation3] sm:$0xff]
        %v925 = vrcp.pop %v924
        %927 = vset.pattern.permute.xlu0 0
        %928 = vperm.xlu0 %927, %v925
        %v929 = vpop.permute.xlu0 %928
        %v931 = vmul.f32 %v923, %v929
        %v932 = vld [vmem:[%s559] sm:$0xff]
        %v933 = vld [vmem:[%s551] sm:$0xff]
        %v934 = vrcp.pop %v933
        %936 = vset.pattern.permute.xlu0 0
        %937 = vperm.xlu0 %936, %v934
        %v938 = vpop.permute.xlu0 %937
        %v940 = vmul.f32 %v932, %v938
        %v941 = vld [vmem:[%s708] sm:$0xff]
        %v942 = vld [vmem:[%s700] sm:$0xff]
        %v943 = vrcp.pop %v942
        %945 = vset.pattern.permute.xlu0 0
        %946 = vperm.xlu0 %945, %v943
        %v947 = vpop.permute.xlu0 %946
        %v949 = vmul.f32 %v941, %v947
        %v950 = vld [vmem:[%s857] sm:$0xff]
        %v951 = vld [vmem:[%s849] sm:$0xff]
        %v952 = vrcp.pop %v951
        %954 = vset.pattern.permute.xlu0 0
        %955 = vperm.xlu0 %954, %v952
        %v956 = vpop.permute.xlu0 %955
        %v958 = vmul.f32 %v950, %v956
        %960 = vrot.lane.b32.xlu0 %v940, 8
        %v961 = vpop.permute.xlu0 %960
        %964 = vrot.lane.b32.xlu0 %v949, 16
        %v965 = vpop.permute.xlu0 %964
        %968 = vrot.lane.b32.xlu0 %v958, 24
        %v969 = vpop.permute.xlu0 %968
        %v971 = vsel %vm336, %v931, %v961
        %vm972 = vcmask 130048
        %v973 = vsel %vm972, %v971, %v965
        %vm974 = vcmask 195584
        %v975 = vsel %vm974, %v973, %v969
        %v976 = vpack.c.bf16 %v975, %v975
        %vm977 = vcmask 257024
        %978 = vst.msk [vmem:[%s311] sm:$0xf] %vm977, %v976
      $region44: #{decoder_stack_forward.19} parent=35 // pred_fallthru
        _
      %p979 = scmp.lt.s32.totalorder %s20, 1
      %s980 = scalar_select %p979, %s20, 1
      %p981 = scmp.lt.s32.totalorder %s21, 0
      %s982 = scalar_select %p981, %s21, 0
      %s983 = sadd.s32 %s982, %s980
      %s984 = smul.addr %s983, 4
      %s985 = scalar_lea.vmem %s4, %s984
      // Predicated region
      $region45: #{decoder_stack_forward.19} parent=35 // pred_check
        %p986 = pneg %p166
      $region46: #{decoder_stack_forward.19} parent=35 // pred_check_branch
        %988 = sbr.rel (%p986) target = $region48
      $region47: #{decoder_stack_forward.19} parent=35 // pred_region
        _
      $region48: #{decoder_stack_forward.19} parent=35 // pred_fallthru
        _
    $region36: #{decoder_stack_forward.19} parent=5 // pred_fallthru
      _
    %p989 = scmp.le.s32.totalorder 2, %s10
    // Predicated region
    $region49: #{decoder_stack_forward.19} parent=5 // pred_check
      %p990 = pneg %p989
    $region50: #{decoder_stack_forward.19} parent=5 // pred_check_branch
      %992 = sbr.rel (%p990) target = $region52
    $region51: #{decoder_stack_forward.19} parent=5 // pred_region
      %s993 = ssub.s32 %s10, 2
      // Predicated region
      $region53: #{decoder_stack_forward.19} parent=51 // pred_check
        %p994 = pneg %p172
      $region54: #{decoder_stack_forward.19} parent=51 // pred_check_branch
        %996 = sbr.rel (%p994) target = $region56
      $region55: #{decoder_stack_forward.19} parent=51 // pred_region
        %p997 = scmp.lt.s32.totalorder %s23, 1
        %s998 = scalar_select %p997, %s23, 1
        %p999 = scmp.lt.s32.totalorder %s24, 0
        %s1000 = scalar_select %p999, %s24, 0
        %s1001 = sadd.s32 %s1000, %s998
        %s1002 = smul.addr %s1001, 4
        %s1003 = scalar_lea.vmem %s4, %s1002
      $region56: #{decoder_stack_forward.19} parent=51 // pred_fallthru
        _
    $region52: #{decoder_stack_forward.19} parent=5 // pred_fallthru
      _
  $region6: #{decoder_stack_forward.19} parent=0 // loop_footer
    %s14 = sadd.s32 1, %s10
  $region7: #{decoder_stack_forward.19} parent=0 // loop_footer_branch
    %9 = sbr.rel target = $region3
  $region8: #{decoder_stack_forward.19} parent=0 // loop_exit
    _

// kernel: decoder_stack_forward.29
$region0: #{decoder_stack_forward.29}
  #allocation0 [shape = 'u32[]', space=smem, size = 0x4, offset = 0x4, fixed_abs, tag = 'smem constant byte address 0x4 - core index']
  #allocation1 [shape = 'u32[144,128]{1,0:T(1,128)}', space=vmem, size = 0x12000, scoped, tag = 'internal scratch']
  %s0 = inlined_call_operand.vmem [shape: f32[16,64], index: 0, kind: input, shape index: {}, may-alias: {0,2}]
  %s1 = inlined_call_operand.vmem [shape: f32[16,1], index: 1, kind: input, shape index: {}]
  %s2 = inlined_call_operand.vmem [shape: f32[16,64], index: 2, kind: output, shape index: {}, may-alias: {0,2}]
  %s3 = sld [smem:[#allocation0]]
  $region18: #{decoder_stack_forward.29} parent=0
    _
  %s5 = ssub.s32 1, %s3
  %s6 = scalar_select 0, %s5, %s3
  // Predicated region
  $region2: #{decoder_stack_forward.29} parent=0 // pred_check
    _
  $region3: #{decoder_stack_forward.29} parent=0 // pred_check_branch
    %8 = sbr.rel (0) target = $region5
  $region4: #{decoder_stack_forward.29} parent=0 // pred_region
    _
  $region5: #{decoder_stack_forward.29} parent=0 // pred_fallthru
    _
  // Predicated region
  $region6: #{decoder_stack_forward.29} parent=0 // pred_check
    _
  $region7: #{decoder_stack_forward.29} parent=0 // pred_check_branch
    %10 = sbr.rel (0) target = $region9
  $region8: #{decoder_stack_forward.29} parent=0 // pred_region
    _
  $region9: #{decoder_stack_forward.29} parent=0 // pred_fallthru
    _
  %v11 = vld [vmem:[%s0] sm:$0xff]
  %v12 = vld [vmem:[%s0 + $0x8] sm:$0xff]
  %v13 = vld [vmem:[%s1] sm:$0xff]
  %v14 = vld [vmem:[%s1 + $0x8] sm:$0xff]
  %16 = vset.pattern.permute.xlu0 0
  %17 = vperm.xlu0 %16, %v13
  %v18 = vpop.permute.xlu0 %17
  %21 = vset.pattern.permute.xlu0 0
  %22 = vperm.xlu0 %21, %v14
  %v23 = vpop.permute.xlu0 %22
  %v25 = vsub.f32 %v11, %v18
  %v26 = vsub.f32 %v12, %v23
  %vm27 = vcmask 523264
  %28 = vst.msk [vmem:[%s2] sm:$0xff] %vm27, %v25
  %29 = vst.msk [vmem:[%s2 + $0x8] sm:$0xff] %vm27, %v26
  // Predicated region
  $region10: #{decoder_stack_forward.29} parent=0 // pred_check
    _
  $region11: #{decoder_stack_forward.29} parent=0 // pred_check_branch
    %31 = sbr.rel (0) target = $region13
  $region12: #{decoder_stack_forward.29} parent=0 // pred_region
    _
  $region13: #{decoder_stack_forward.29} parent=0 // pred_fallthru
    _
  // Predicated region
  $region14: #{decoder_stack_forward.29} parent=0 // pred_check
    _
  $region15: #{decoder_stack_forward.29} parent=0 // pred_check_branch
    %33 = sbr.rel (0) target = $region17
  $region16: #{decoder_stack_forward.29} parent=0 // pred_region
    _
  $region17: #{decoder_stack_forward.29} parent=0 // pred_fallthru
    _

// kernel: decoder_stack_forward.28
$region0: #{decoder_stack_forward.28}
  #allocation0 [shape = 'u32[]', space=smem, size = 0x4, offset = 0x4, fixed_abs, tag = 'smem constant byte address 0x4 - core index']
  #allocation1 [shape = 'u32[144,128]{1,0:T(1,128)}', space=vmem, size = 0x12000, scoped, tag = 'internal scratch']
  #allocation2 [shape = 'f32[16,1]{1,0:T(8,128)}', space=vmem, size = 0x2000, scoped, tag = 'scratch operand']
  #allocation3 [shape = 'f32[16,1]{1,0:T(8,128)}', space=vmem, size = 0x2000, scoped, tag = 'scratch operand']
  %s0 = inlined_call_operand.vmem [shape: bf16[16,32], index: 0, kind: input, shape index: {}]
  %s1 = inlined_call_operand.vmem [shape: bf16[64,32], index: 1, kind: input, shape index: {}]
  %s2 = inlined_call_operand.vmem [shape: f32[16,64], index: 2, kind: output, shape index: {0}]
  %s3 = inlined_call_operand.vmem [shape: f32[16,1], index: 3, kind: output, shape index: {1}]
  %4 = xla_tuple %s2, %s3
  %s5 = sld [smem:[#allocation0]]
  $region34: #{decoder_stack_forward.28} parent=0
    _
  %s7 = ssub.s32 1, %s5
  %s8 = scalar_select 0, %s7, %s5
  // Predicated region
  $region2: #{decoder_stack_forward.28} parent=0 // pred_check
    _
  $region3: #{decoder_stack_forward.28} parent=0 // pred_check_branch
    %10 = sbr.rel (0) target = $region5
  $region4: #{decoder_stack_forward.28} parent=0 // pred_region
    _
  $region5: #{decoder_stack_forward.28} parent=0 // pred_fallthru
    _
  // Predicated region
  $region6: #{decoder_stack_forward.28} parent=0 // pred_check
    _
  $region7: #{decoder_stack_forward.28} parent=0 // pred_check_branch
    %12 = sbr.rel (0) target = $region9
  $region8: #{decoder_stack_forward.28} parent=0 // pred_region
    _
  $region9: #{decoder_stack_forward.28} parent=0 // pred_fallthru
    _
  %p14 = scmp.eq.s32.totalorder 0, 0
  // Predicated region
  $region10: #{decoder_stack_forward.28} parent=0 // pred_check
    %p15 = pneg %p14
  $region11: #{decoder_stack_forward.28} parent=0 // pred_check_branch
    %17 = sbr.rel (%p15) target = $region13
  $region12: #{decoder_stack_forward.28} parent=0 // pred_region
    %vm18 = vcmask 7168
    %19 = vst.msk [vmem:[#allocation2] sm:$0xff] %vm18, -inf
    %20 = vst.msk [vmem:[#allocation2 + $0x8] sm:$0xff] %vm18, -inf
    %21 = vst.msk [vmem:[#allocation3] sm:$0xff] %vm18, 0.0
    %22 = vst.msk [vmem:[#allocation3 + $0x8] sm:$0xff] %vm18, 0.0
  $region13: #{decoder_stack_forward.28} parent=0 // pred_fallthru
    _
  %v23 = vld [vmem:[%s0] sm:$0xf]
  %v24 = vld [vmem:[%s0 + $0x4] sm:$0xf]
  %v25 = vld [vmem:[%s1] sm:$0xf]
  %v26 = vld [vmem:[%s1 + $0x4] sm:$0xf]
  %v27 = vld [vmem:[%s1 + $0x8] sm:$0xf]
  %v28 = vld [vmem:[%s1 + $0xc] sm:$0xf]
  %v29 = vld [vmem:[%s1 + $0x10] sm:$0xf]
  %v30 = vld [vmem:[%s1 + $0x14] sm:$0xf]
  %v31 = vld [vmem:[%s1 + $0x18] sm:$0xf]
  %v32 = vld [vmem:[%s1 + $0x1c] sm:$0xf]
  %v35 = vunpack.c.l.b16 %v23
  %v36 = vunpack.c.l.b16 %v24
  %v37 = vpack.c.b16 %v36, %v35
  %v46 = vunpack.c.l.b16 %v25
  %v47 = vunpack.c.l.b16 %v26
  %v48 = vunpack.c.l.b16 %v27
  %v49 = vunpack.c.l.b16 %v28
  %v50 = vunpack.c.l.b16 %v29
  %v51 = vunpack.c.l.b16 %v30
  %v52 = vunpack.c.l.b16 %v31
  %v53 = vunpack.c.l.b16 %v32
  %v54 = vpack.c.b16 %v47, %v46
  %v55 = vpack.c.b16 %v49, %v48
  %v56 = vpack.c.b16 %v51, %v50
  %v57 = vpack.c.b16 %v53, %v52
  %vm58 = vcmask 261120
  %v60 = vsel %vm58, %v37, 0
  %v63 = vsel %vm58, %v54, 0
  %v66 = vsel %vm58, %v55, 0
  %v69 = vsel %vm58, %v56, 0
  %v72 = vsel %vm58, %v57, 0
  %74 = vmatprep.subr.bf16.mxu0 0
  %75 = vmatpush1.bf16.xpose.msra.mxu0 %v63
  %76 = vmatprep.subr.bf16.mxu0 0
  %77 = vmatpush1.bf16.xpose.msra.mxu0 %v66
  %78 = vmatprep.subr.bf16.mxu0 0
  %79 = vmatpush1.bf16.xpose.msra.mxu0 %v69
  %80 = vmatprep.subr.bf16.mxu0 0
  %81 = vmatpush1.bf16.xpose.msra.mxu0 %v72
  %82 = vmatprep.subr.bf16.mxu0 0
  %83 = vmatpush1.bf16.xpose.msra.mxu0 0
  %84 = vmatprep.subr.bf16.mxu0 0
  %85 = vmatpush1.bf16.xpose.msra.mxu0 0
  %86 = vmatprep.subr.bf16.mxu0 0
  %87 = vmatpush1.bf16.xpose.msra.mxu0 0
  %88 = vmatprep.subr.bf16.mxu0 0
  %89 = vmatpush1.bf16.xpose.msra.mxu0 0
  %90 = vmatprep.subr.bf16.mxu0 0
  %91 = vmatpush1.bf16.xpose.msra.mxu0 0
  %92 = vmatprep.subr.bf16.mxu0 0
  %93 = vmatpush1.bf16.xpose.msra.mxu0 0
  %94 = vmatprep.subr.bf16.mxu0 0
  %95 = vmatpush1.bf16.xpose.msra.mxu0 0
  %96 = vmatprep.subr.bf16.mxu0 0
  %97 = vmatpush1.bf16.xpose.msra.mxu0 0
  %98 = vmatprep.subr.bf16.mxu0 0
  %99 = vmatpush1.bf16.xpose.msra.mxu0 0
  %100 = vmatprep.subr.bf16.mxu0 0
  %101 = vmatpush1.bf16.xpose.msra.mxu0 0
  %102 = vmatprep.subr.bf16.mxu0 0
  %103 = vmatpush1.bf16.xpose.msra.mxu0 0
  %104 = vmatprep.subr.bf16.mxu0 0
  %105 = vmatpush1.bf16.xpose.msra.mxu0 0
  %106 = vmatprep.mubr.bf16.mxu0 0
  %107 = vmatmul.mubr.bf16.gmra.mrb[0].mxu0 %v60
  %v108 = vpop.f32.mrb[0].mxu0
  %v109 = vadd.f32 0.0, %v108
  %v110 = vpop.f32.mrb[0].mxu0
  %v111 = vpop.f32.mrb[0].mxu0
  %v112 = vadd.f32 0.0, %v111
  %v113 = vpop.f32.mrb[0].mxu0
  %114 = vdwg.mxu0
  %vm115 = vcmask 523264
  %116 = vst.msk [vmem:[%s2] sm:$0xff] %vm115, %v109
  %117 = vst.msk [vmem:[%s2 + $0x8] sm:$0xff] %vm115, %v112
  %v118 = vld [vmem:[#allocation2] sm:$0xff]
  %v119 = vld [vmem:[#allocation2 + $0x8] sm:$0xff]
  %v120 = vsel %vm115, %v109, -inf
  %121 = vmax.xlane.f32.xlu0 %v120
  %v122 = vpop.xlane.xlu0 %121
  %v123 = vsel %vm115, %v112, -inf
  %124 = vmax.xlane.f32.xlu0 %v123
  %v125 = vpop.xlane.xlu0 %124
  %v126 = vmax.f32 %v118, %v122
  %v127 = vmax.f32 %v119, %v125
  %v128 = vsub.f32 %v118, %v126
  %v129 = vsub.f32 %v119, %v127
  %v130 = vmul.f32 %v128, 1.442695
  %v131 = vpow.pop %v130
  %v132 = vmul.f32 %v129, 1.442695
  %v133 = vpow.pop %v132
  %v134 = vld [vmem:[#allocation3] sm:$0xff]
  %v135 = vld [vmem:[#allocation3 + $0x8] sm:$0xff]
  %v136 = vmul.f32 %v131, %v134
  %v137 = vmul.f32 %v133, %v135
  %139 = vset.pattern.permute.xlu0 0
  %140 = vperm.xlu0 %139, %v126
  %v141 = vpop.permute.xlu0 %140
  %144 = vset.pattern.permute.xlu0 0
  %145 = vperm.xlu0 %144, %v127
  %v146 = vpop.permute.xlu0 %145
  %v148 = vsub.f32 %v109, %v141
  %v149 = vsub.f32 %v112, %v146
  %v150 = vmul.f32 %v148, 1.442695
  %v151 = vpow.pop %v150
  %v152 = vmul.f32 %v149, 1.442695
  %v153 = vpow.pop %v152
  %v154 = vsel %vm115, %v151, 0.0
  %155 = vadd.xlane.f32.xlu0 %v154
  %v156 = vpop.xlane.xlu0 %155
  %v157 = vsel %vm115, %v153, 0.0
  %158 = vadd.xlane.f32.xlu0 %v157
  %v159 = vpop.xlane.xlu0 %158
  %v160 = vadd.f32 %v136, %v156
  %v161 = vadd.f32 %v137, %v159
  %vm162 = vcmask 7168
  %163 = vst.msk [vmem:[#allocation3] sm:$0xff] %vm162, %v160
  %164 = vst.msk [vmem:[#allocation3 + $0x8] sm:$0xff] %vm162, %v161
  %165 = vst.msk [vmem:[#allocation2] sm:$0xff] %vm162, %v126
  %166 = vst.msk [vmem:[#allocation2 + $0x8] sm:$0xff] %vm162, %v127
  // Predicated region
  $region14: #{decoder_stack_forward.28} parent=0 // pred_check
    %p167 = pneg %p14
  $region15: #{decoder_stack_forward.28} parent=0 // pred_check_branch
    %169 = sbr.rel (%p167) target = $region17
  $region16: #{decoder_stack_forward.28} parent=0 // pred_region
    %v170 = vld [vmem:[#allocation2] sm:$0xff]
    %v171 = vld [vmem:[#allocation2 + $0x8] sm:$0xff]
    %v172 = vld [vmem:[#allocation3] sm:$0xff]
    %v173 = vld [vmem:[#allocation3 + $0x8] sm:$0xff]
    %v174 = vlog2.pop %v172
    %v175 = vmul.f32 %v174, 0.6931472
    %v176 = vlog2.pop %v173
    %v177 = vmul.f32 %v176, 0.6931472
    %v178 = vadd.f32 %v170, %v175
    %v179 = vadd.f32 %v171, %v177
    %180 = vst.msk [vmem:[%s3] sm:$0xff] %vm162, %v178
    %181 = vst.msk [vmem:[%s3 + $0x8] sm:$0xff] %vm162, %v179
  $region17: #{decoder_stack_forward.28} parent=0 // pred_fallthru
    _
  // Predicated region
  $region18: #{decoder_stack_forward.28} parent=0 // pred_check
    _
  $region19: #{decoder_stack_forward.28} parent=0 // pred_check_branch
    %183 = sbr.rel (0) target = $region21
  $region20: #{decoder_stack_forward.28} parent=0 // pred_region
    _
  $region21: #{decoder_stack_forward.28} parent=0 // pred_fallthru
    _
  // Predicated region
  $region22: #{decoder_stack_forward.28} parent=0 // pred_check
    _
  $region23: #{decoder_stack_forward.28} parent=0 // pred_check_branch
    %185 = sbr.rel (0) target = $region25
  $region24: #{decoder_stack_forward.28} parent=0 // pred_region
    _
  $region25: #{decoder_stack_forward.28} parent=0 // pred_fallthru
    _
  // Predicated region
  $region26: #{decoder_stack_forward.28} parent=0 // pred_check
    _
  $region27: #{decoder_stack_forward.28} parent=0 // pred_check_branch
    %187 = sbr.rel (0) target = $region29
  $region28: #{decoder_stack_forward.28} parent=0 // pred_region
    _
  $region29: #{decoder_stack_forward.28} parent=0 // pred_fallthru
    _
  // Predicated region
  $region30: #{decoder_stack_forward.28} parent=0 // pred_check
    _
  $region31: #{decoder_stack_forward.28} parent=0 // pred_check_branch
    %189 = sbr.rel (0) target = $region33
  $region32: #{decoder_stack_forward.28} parent=0 // pred_region
    _
  $region33: #{decoder_stack_forward.28} parent=0 // pred_fallthru
    _

</llo_original>
